<compile_context>
chip_gen: v6e
topology: v6e:2x2x1
jax: 0.10.0
libtpu: 0.0.40
codegen_flags: <defaults>
</compile_context>

<pallas_src>
import functools

import jax
import jax.numpy as jnp
import numpy as np
from jax.experimental import pallas as pl
from jax.experimental.pallas import tpu as pltpu


def _dscnn_fused_kernel(planes_ref, w1_ref, b1_ref, w2_ref, b2_ref,
                        o_ref, hpad_ref, *, n, ho, wo):
    # planes_ref: (4, N, Hp, Wp, Cin)  parity-decomposed zero-padded input
    # w1_ref:     (9, Cin, C1)   tap-major conv1 weights
    # b1_ref:     (1, C1)
    # w2_ref:     (9, C1, 128)   tap-major conv2 weights, Cout padded to 128
    # b2_ref:     (1, 128)
    # o_ref:      (M, 128)       lane-dense output slab, M = N*Ho*Wo
    # hpad_ref:   (N, Ho+2, Wo+2, C1) VMEM scratch for the padded activation
    cin = planes_ref.shape[-1]
    c1 = w1_ref.shape[-1]
    m = n * ho * wo

    # ---- conv1 (3x3, stride 2, pad 1): 9 accumulated matmuls over parity taps
    acc1 = jnp.zeros((m, c1), jnp.float32)
    for kh in range(3):
        for kw in range(3):
            p = (kh % 2) * 2 + (kw % 2)          # which parity plane
            r0, c0 = kh // 2, kw // 2            # unstrided offset inside plane
            tap = planes_ref[p, :, r0:r0 + ho, c0:c0 + wo, :]   # (N, Ho, Wo, Cin)
            acc1 = acc1 + jnp.dot(tap.reshape(m, cin),
                                  w1_ref[kh * 3 + kw],
                                  preferred_element_type=jnp.float32)
    h = jnp.maximum(acc1 + b1_ref[...], 0.0)      # fused bias + ReLU

    # ---- intermediate activation stays in VMEM, zero halo = conv2 padding ----
    hpad_ref[...] = jnp.zeros_like(hpad_ref)
    hpad_ref[:, 1:1 + ho, 1:1 + wo, :] = h.reshape(n, ho, wo, c1)

    # ---- conv2 (3x3, stride 1, pad 1): 9 accumulated matmuls over shifted views
    acc2 = jnp.zeros((m, w2_ref.shape[-1]), jnp.float32)
    for kh in range(3):
        for kw in range(3):
            tap = hpad_ref[:, kh:kh + ho, kw:kw + wo, :]        # (N, Ho, Wo, C1)
            acc2 = acc2 + jnp.dot(tap.reshape(m, c1),
                                  w2_ref[kh * 3 + kw],
                                  preferred_element_type=jnp.float32)

    o_ref[...] = acc2 + b2_ref[...]               # single lane-dense (M, 128) store


def downsample_net_forward(x_nchw, params):
    """Forward pass equivalent to the PyTorch downsample_net module (NCHW in/out)."""
    w1, b1, w2, b2 = params
    N, Cin, H, W = x_nchw.shape
    assert H % 2 == 0 and W % 2 == 0, "even spatial dims expected for stride-2 conv"
    C1 = w1.shape[0]                 # 16
    C2 = w2.shape[0]                 # 3
    Ho, Wo = (H + 2 - 3) // 2 + 1, (W + 2 - 3) // 2 + 1
    M = N * Ho * Wo
    CP = 128                         # lane-dense padded output channels

    # --- glue: layout only (no data expansion, no im2col in HBM) ---
    x_nhwc = jnp.transpose(x_nchw, (0, 2, 3, 1)).astype(jnp.float32)
    xp = jnp.pad(x_nhwc, ((0, 0), (1, 1), (1, 1), (0, 0)))            # (N,H+2,W+2,Cin)
    # Parity decomposition: every stride-2 conv1 tap becomes an UNSTRIDED static
    # slice of one of these 4 planes inside the kernel.
    planes = jnp.stack(
        [xp[:, rp::2, cpar::2, :] for rp in (0, 1) for cpar in (0, 1)], axis=0)
    # planes: (4, N, H//2+1, W//2+1, Cin)

    # (Cout, Cin, kh, kw) -> (kh*kw, Cin, Cout), tap-major; matches tap channel order.
    w1_r = jnp.transpose(w1, (2, 3, 1, 0)).reshape(9, Cin, C1)
    b1_r = b1.reshape(1, C1).astype(jnp.float32)
    w2_r = jnp.transpose(w2, (2, 3, 1, 0)).reshape(9, C1, C2)
    w2_r = jnp.pad(w2_r, ((0, 0), (0, 0), (0, CP - C2)))              # pad Cout -> 128
    b2_r = jnp.pad(b2.reshape(1, C2), ((0, 0), (0, CP - C2))).astype(jnp.float32)

    kernel = functools.partial(_dscnn_fused_kernel, n=N, ho=Ho, wo=Wo)
    out = pl.pallas_call(
        kernel,
        out_shape=jax.ShapeDtypeStruct((M, CP), jnp.float32),
        # No grid: kernel runs once with everything fully resident in VMEM
        # (total footprint ~1 MiB, safe vs. v7x's 64 MiB / 32 MiB scoped default).
        in_specs=[pl.BlockSpec(memory_space=pltpu.MemorySpace.VMEM)] * 5,
        out_specs=pl.BlockSpec(memory_space=pltpu.MemorySpace.VMEM),
        scratch_shapes=[pltpu.VMEM((N, Ho + 2, Wo + 2, C1), jnp.float32)],
    )(planes, w1_r, b1_r, w2_r, b2_r)

    y = out[:, :C2].reshape(N, Ho, Wo, C2)      # drop lane padding
    return jnp.transpose(y, (0, 3, 1, 2))       # back to NCHW


def _reference_forward(x, w1, b1, w2, b2):
    dn = ("NCHW", "OIHW", "NCHW")
    h = jax.lax.conv_general_dilated(
        x, w1, window_strides=(2, 2), padding=((1, 1), (1, 1)), dimension_numbers=dn
    ) + b1[None, :, None, None]
    h = jnp.maximum(h, 0.0)
    y = jax.lax.conv_general_dilated(
        h, w2, window_strides=(1, 1), padding=((1, 1), (1, 1)), dimension_numbers=dn
    ) + b2[None, :, None, None]
    return y


def init_params(key):
    k1, k2, k3, k4 = jax.random.split(key, 4)
    # deterministic synthetic init (shapes follow nn.Conv2d(3,16,3) / nn.Conv2d(16,3,3))
    w1 = 0.1 * jax.random.normal(k1, (16, 3, 3, 3), dtype=jnp.float32)
    b1 = 0.1 * jax.random.normal(k2, (16,), dtype=jnp.float32)
    w2 = 0.1 * jax.random.normal(k3, (3, 16, 3, 3), dtype=jnp.float32)
    b2 = 0.1 * jax.random.normal(k4, (3,), dtype=jnp.float32)
    return w1, b1, w2, b2


if __name__ == "__main__":
    key = jax.random.PRNGKey(0)
    kx, kp = jax.random.split(key)
    x = jax.random.normal(kx, (2, 3, 16, 16), dtype=jnp.float32)  # NCHW, like PyTorch
    params = init_params(kp)

    fwd = jax.jit(downsample_net_forward)
    y = jax.block_until_ready(fwd(x, params))
    assert y.shape == (2, 3, 8, 8), y.shape

    y_ref = jax.block_until_ready(_reference_forward(x, *params))
    np.testing.assert_allclose(np.asarray(y), np.asarray(y_ref), rtol=1e-4, atol=1e-4)

    print("KERNEL_OK")
</pallas_src>

<mosaic_0001>
module attributes {stable_mosaic.version = 11 : i64} {
  func.func @_dscnn_fused_kernel(%arg0: memref<4x2x9x9x3xf32, #tpu.memory_space<vmem>>, %arg1: memref<9x3x16xf32, #tpu.memory_space<vmem>>, %arg2: memref<1x16xf32, #tpu.memory_space<vmem>>, %arg3: memref<9x16x128xf32, #tpu.memory_space<vmem>>, %arg4: memref<1x128xf32, #tpu.memory_space<vmem>>, %arg5: memref<128x128xf32, #tpu.memory_space<vmem>>, %arg6: memref<2x10x10x16xf32, #tpu.memory_space<vmem>>) attributes {dimension_semantics = [], scalar_prefetch = 0 : i64, scratch_operands = 1 : i64, tpu.core_type = #tpu.core_type<tc>} {
    %cst = arith.constant 0.000000e+00 : f32
    %0 = vector.broadcast %cst : f32 to vector<128x16xf32>
    %c0 = arith.constant 0 : index
    %c0_0 = arith.constant 0 : index
    %c0_1 = arith.constant 0 : index
    %c0_2 = arith.constant 0 : index
    %c0_3 = arith.constant 0 : index
    %1 = vector.load %arg0[%c0, %c0_0, %c0_1, %c0_2, %c0_3] : memref<4x2x9x9x3xf32, #tpu.memory_space<vmem>>, vector<1x2x8x8x3xf32>
    %2 = vector.shape_cast %1 : vector<1x2x8x8x3xf32> to vector<2x8x8x3xf32>
    %3 = vector.shape_cast %2 : vector<2x8x8x3xf32> to vector<128x3xf32>
    %c0_4 = arith.constant 0 : index
    %c0_5 = arith.constant 0 : index
    %c0_6 = arith.constant 0 : index
    %4 = vector.load %arg1[%c0_4, %c0_5, %c0_6] : memref<9x3x16xf32, #tpu.memory_space<vmem>>, vector<1x3x16xf32>
    %5 = vector.shape_cast %4 : vector<1x3x16xf32> to vector<3x16xf32>
    %cst_7 = arith.constant dense<0.000000e+00> : vector<128x16xf32>
    %6 = tpu.matmul %3, %5, %cst_7 {dimension_numbers = #tpu.dot_dimension_numbers<[1], [0], [0], [1], [0, 0, 1, 1], [], []>} : vector<128x3xf32>, vector<3x16xf32>, vector<128x16xf32> -> vector<128x16xf32>
    %7 = arith.addf %0, %6 : vector<128x16xf32>
    %c1 = arith.constant 1 : index
    %c0_8 = arith.constant 0 : index
    %c0_9 = arith.constant 0 : index
    %c0_10 = arith.constant 0 : index
    %c0_11 = arith.constant 0 : index
    %8 = vector.load %arg0[%c1, %c0_8, %c0_9, %c0_10, %c0_11] : memref<4x2x9x9x3xf32, #tpu.memory_space<vmem>>, vector<1x2x8x8x3xf32>
    %9 = vector.shape_cast %8 : vector<1x2x8x8x3xf32> to vector<2x8x8x3xf32>
    %10 = vector.shape_cast %9 : vector<2x8x8x3xf32> to vector<128x3xf32>
    %c1_12 = arith.constant 1 : index
    %c0_13 = arith.constant 0 : index
    %c0_14 = arith.constant 0 : index
    %11 = vector.load %arg1[%c1_12, %c0_13, %c0_14] : memref<9x3x16xf32, #tpu.memory_space<vmem>>, vector<1x3x16xf32>
    %12 = vector.shape_cast %11 : vector<1x3x16xf32> to vector<3x16xf32>
    %cst_15 = arith.constant dense<0.000000e+00> : vector<128x16xf32>
    %13 = tpu.matmul %10, %12, %cst_15 {dimension_numbers = #tpu.dot_dimension_numbers<[1], [0], [0], [1], [0, 0, 1, 1], [], []>} : vector<128x3xf32>, vector<3x16xf32>, vector<128x16xf32> -> vector<128x16xf32>
    %14 = arith.addf %7, %13 : vector<128x16xf32>
    %c0_16 = arith.constant 0 : index
    %c0_17 = arith.constant 0 : index
    %c0_18 = arith.constant 0 : index
    %c1_19 = arith.constant 1 : index
    %c0_20 = arith.constant 0 : index
    %15 = vector.load %arg0[%c0_16, %c0_17, %c0_18, %c1_19, %c0_20] : memref<4x2x9x9x3xf32, #tpu.memory_space<vmem>>, vector<1x2x8x8x3xf32>
    %16 = vector.shape_cast %15 : vector<1x2x8x8x3xf32> to vector<2x8x8x3xf32>
    %17 = vector.shape_cast %16 : vector<2x8x8x3xf32> to vector<128x3xf32>
    %c2 = arith.constant 2 : index
    %c0_21 = arith.constant 0 : index
    %c0_22 = arith.constant 0 : index
    %18 = vector.load %arg1[%c2, %c0_21, %c0_22] : memref<9x3x16xf32, #tpu.memory_space<vmem>>, vector<1x3x16xf32>
    %19 = vector.shape_cast %18 : vector<1x3x16xf32> to vector<3x16xf32>
    %cst_23 = arith.constant dense<0.000000e+00> : vector<128x16xf32>
    %20 = tpu.matmul %17, %19, %cst_23 {dimension_numbers = #tpu.dot_dimension_numbers<[1], [0], [0], [1], [0, 0, 1, 1], [], []>} : vector<128x3xf32>, vector<3x16xf32>, vector<128x16xf32> -> vector<128x16xf32>
    %21 = arith.addf %14, %20 : vector<128x16xf32>
    %c2_24 = arith.constant 2 : index
    %c0_25 = arith.constant 0 : index
    %c0_26 = arith.constant 0 : index
    %c0_27 = arith.constant 0 : index
    %c0_28 = arith.constant 0 : index
    %22 = vector.load %arg0[%c2_24, %c0_25, %c0_26, %c0_27, %c0_28] : memref<4x2x9x9x3xf32, #tpu.memory_space<vmem>>, vector<1x2x8x8x3xf32>
    %23 = vector.shape_cast %22 : vector<1x2x8x8x3xf32> to vector<2x8x8x3xf32>
    %24 = vector.shape_cast %23 : vector<2x8x8x3xf32> to vector<128x3xf32>
    %c3 = arith.constant 3 : index
    %c0_29 = arith.constant 0 : index
    %c0_30 = arith.constant 0 : index
    %25 = vector.load %arg1[%c3, %c0_29, %c0_30] : memref<9x3x16xf32, #tpu.memory_space<vmem>>, vector<1x3x16xf32>
    %26 = vector.shape_cast %25 : vector<1x3x16xf32> to vector<3x16xf32>
    %cst_31 = arith.constant dense<0.000000e+00> : vector<128x16xf32>
    %27 = tpu.matmul %24, %26, %cst_31 {dimension_numbers = #tpu.dot_dimension_numbers<[1], [0], [0], [1], [0, 0, 1, 1], [], []>} : vector<128x3xf32>, vector<3x16xf32>, vector<128x16xf32> -> vector<128x16xf32>
    %28 = arith.addf %21, %27 : vector<128x16xf32>
    %c3_32 = arith.constant 3 : index
    %c0_33 = arith.constant 0 : index
    %c0_34 = arith.constant 0 : index
    %c0_35 = arith.constant 0 : index
    %c0_36 = arith.constant 0 : index
    %29 = vector.load %arg0[%c3_32, %c0_33, %c0_34, %c0_35, %c0_36] : memref<4x2x9x9x3xf32, #tpu.memory_space<vmem>>, vector<1x2x8x8x3xf32>
    %30 = vector.shape_cast %29 : vector<1x2x8x8x3xf32> to vector<2x8x8x3xf32>
    %31 = vector.shape_cast %30 : vector<2x8x8x3xf32> to vector<128x3xf32>
    %c4 = arith.constant 4 : index
    %c0_37 = arith.constant 0 : index
    %c0_38 = arith.constant 0 : index
    %32 = vector.load %arg1[%c4, %c0_37, %c0_38] : memref<9x3x16xf32, #tpu.memory_space<vmem>>, vector<1x3x16xf32>
    %33 = vector.shape_cast %32 : vector<1x3x16xf32> to vector<3x16xf32>
    %cst_39 = arith.constant dense<0.000000e+00> : vector<128x16xf32>
    %34 = tpu.matmul %31, %33, %cst_39 {dimension_numbers = #tpu.dot_dimension_numbers<[1], [0], [0], [1], [0, 0, 1, 1], [], []>} : vector<128x3xf32>, vector<3x16xf32>, vector<128x16xf32> -> vector<128x16xf32>
    %35 = arith.addf %28, %34 : vector<128x16xf32>
    %c2_40 = arith.constant 2 : index
    %c0_41 = arith.constant 0 : index
    %c0_42 = arith.constant 0 : index
    %c1_43 = arith.constant 1 : index
    %c0_44 = arith.constant 0 : index
    %36 = vector.load %arg0[%c2_40, %c0_41, %c0_42, %c1_43, %c0_44] : memref<4x2x9x9x3xf32, #tpu.memory_space<vmem>>, vector<1x2x8x8x3xf32>
    %37 = vector.shape_cast %36 : vector<1x2x8x8x3xf32> to vector<2x8x8x3xf32>
    %38 = vector.shape_cast %37 : vector<2x8x8x3xf32> to vector<128x3xf32>
    %c5 = arith.constant 5 : index
    %c0_45 = arith.constant 0 : index
    %c0_46 = arith.constant 0 : index
    %39 = vector.load %arg1[%c5, %c0_45, %c0_46] : memref<9x3x16xf32, #tpu.memory_space<vmem>>, vector<1x3x16xf32>
    %40 = vector.shape_cast %39 : vector<1x3x16xf32> to vector<3x16xf32>
    %cst_47 = arith.constant dense<0.000000e+00> : vector<128x16xf32>
    %41 = tpu.matmul %38, %40, %cst_47 {dimension_numbers = #tpu.dot_dimension_numbers<[1], [0], [0], [1], [0, 0, 1, 1], [], []>} : vector<128x3xf32>, vector<3x16xf32>, vector<128x16xf32> -> vector<128x16xf32>
    %42 = arith.addf %35, %41 : vector<128x16xf32>
    %c0_48 = arith.constant 0 : index
    %c0_49 = arith.constant 0 : index
    %c1_50 = arith.constant 1 : index
    %c0_51 = arith.constant 0 : index
    %c0_52 = arith.constant 0 : index
    %43 = vector.load %arg0[%c0_48, %c0_49, %c1_50, %c0_51, %c0_52] : memref<4x2x9x9x3xf32, #tpu.memory_space<vmem>>, vector<1x2x8x8x3xf32>
    %44 = vector.shape_cast %43 : vector<1x2x8x8x3xf32> to vector<2x8x8x3xf32>
    %45 = vector.shape_cast %44 : vector<2x8x8x3xf32> to vector<128x3xf32>
    %c6 = arith.constant 6 : index
    %c0_53 = arith.constant 0 : index
    %c0_54 = arith.constant 0 : index
    %46 = vector.load %arg1[%c6, %c0_53, %c0_54] : memref<9x3x16xf32, #tpu.memory_space<vmem>>, vector<1x3x16xf32>
    %47 = vector.shape_cast %46 : vector<1x3x16xf32> to vector<3x16xf32>
    %cst_55 = arith.constant dense<0.000000e+00> : vector<128x16xf32>
    %48 = tpu.matmul %45, %47, %cst_55 {dimension_numbers = #tpu.dot_dimension_numbers<[1], [0], [0], [1], [0, 0, 1, 1], [], []>} : vector<128x3xf32>, vector<3x16xf32>, vector<128x16xf32> -> vector<128x16xf32>
    %49 = arith.addf %42, %48 : vector<128x16xf32>
    %c1_56 = arith.constant 1 : index
    %c0_57 = arith.constant 0 : index
    %c1_58 = arith.constant 1 : index
    %c0_59 = arith.constant 0 : index
    %c0_60 = arith.constant 0 : index
    %50 = vector.load %arg0[%c1_56, %c0_57, %c1_58, %c0_59, %c0_60] : memref<4x2x9x9x3xf32, #tpu.memory_space<vmem>>, vector<1x2x8x8x3xf32>
    %51 = vector.shape_cast %50 : vector<1x2x8x8x3xf32> to vector<2x8x8x3xf32>
    %52 = vector.shape_cast %51 : vector<2x8x8x3xf32> to vector<128x3xf32>
    %c7 = arith.constant 7 : index
    %c0_61 = arith.constant 0 : index
    %c0_62 = arith.constant 0 : index
    %53 = vector.load %arg1[%c7, %c0_61, %c0_62] : memref<9x3x16xf32, #tpu.memory_space<vmem>>, vector<1x3x16xf32>
    %54 = vector.shape_cast %53 : vector<1x3x16xf32> to vector<3x16xf32>
    %cst_63 = arith.constant dense<0.000000e+00> : vector<128x16xf32>
    %55 = tpu.matmul %52, %54, %cst_63 {dimension_numbers = #tpu.dot_dimension_numbers<[1], [0], [0], [1], [0, 0, 1, 1], [], []>} : vector<128x3xf32>, vector<3x16xf32>, vector<128x16xf32> -> vector<128x16xf32>
    %56 = arith.addf %49, %55 : vector<128x16xf32>
    %c0_64 = arith.constant 0 : index
    %c0_65 = arith.constant 0 : index
    %c1_66 = arith.constant 1 : index
    %c1_67 = arith.constant 1 : index
    %c0_68 = arith.constant 0 : index
    %57 = vector.load %arg0[%c0_64, %c0_65, %c1_66, %c1_67, %c0_68] : memref<4x2x9x9x3xf32, #tpu.memory_space<vmem>>, vector<1x2x8x8x3xf32>
    %58 = vector.shape_cast %57 : vector<1x2x8x8x3xf32> to vector<2x8x8x3xf32>
    %59 = vector.shape_cast %58 : vector<2x8x8x3xf32> to vector<128x3xf32>
    %c8 = arith.constant 8 : index
    %c0_69 = arith.constant 0 : index
    %c0_70 = arith.constant 0 : index
    %60 = vector.load %arg1[%c8, %c0_69, %c0_70] : memref<9x3x16xf32, #tpu.memory_space<vmem>>, vector<1x3x16xf32>
    %61 = vector.shape_cast %60 : vector<1x3x16xf32> to vector<3x16xf32>
    %cst_71 = arith.constant dense<0.000000e+00> : vector<128x16xf32>
    %62 = tpu.matmul %59, %61, %cst_71 {dimension_numbers = #tpu.dot_dimension_numbers<[1], [0], [0], [1], [0, 0, 1, 1], [], []>} : vector<128x3xf32>, vector<3x16xf32>, vector<128x16xf32> -> vector<128x16xf32>
    %63 = arith.addf %56, %62 : vector<128x16xf32>
    %c0_72 = arith.constant 0 : index
    %c0_73 = arith.constant 0 : index
    %64 = vector.load %arg2[%c0_72, %c0_73] : memref<1x16xf32, #tpu.memory_space<vmem>>, vector<1x16xf32>
    %65 = vector.broadcast %64 : vector<1x16xf32> to vector<128x16xf32>
    %66 = arith.addf %63, %65 : vector<128x16xf32>
    %cst_74 = arith.constant 0.000000e+00 : f32
    %67 = vector.broadcast %cst_74 : f32 to vector<128x16xf32>
    %68 = arith.maximumf %66, %67 : vector<128x16xf32>
    %cst_75 = arith.constant 0.000000e+00 : f32
    %69 = vector.broadcast %cst_75 : f32 to vector<2x10x10x16xf32>
    %c0_76 = arith.constant 0 : index
    %c0_77 = arith.constant 0 : index
    %c0_78 = arith.constant 0 : index
    %c0_79 = arith.constant 0 : index
    %70 = vector.load %arg6[%c0_76, %c0_77, %c0_78, %c0_79] : memref<2x10x10x16xf32, #tpu.memory_space<vmem>>, vector<2x10x10x16xf32>
    tpu.vector_store %arg6[%c0_76, %c0_77, %c0_78, %c0_79], %69 {strides = array<i32>} : memref<2x10x10x16xf32, #tpu.memory_space<vmem>>, vector<2x10x10x16xf32>,
    %71 = vector.shape_cast %68 : vector<128x16xf32> to vector<2x8x8x16xf32>
    %c0_80 = arith.constant 0 : index
    %c1_81 = arith.constant 1 : index
    %c1_82 = arith.constant 1 : index
    %c0_83 = arith.constant 0 : index
    %72 = vector.load %arg6[%c0_80, %c1_81, %c1_82, %c0_83] : memref<2x10x10x16xf32, #tpu.memory_space<vmem>>, vector<2x8x8x16xf32>
    tpu.vector_store %arg6[%c0_80, %c1_81, %c1_82, %c0_83], %71 {strides = array<i32>} : memref<2x10x10x16xf32, #tpu.memory_space<vmem>>, vector<2x8x8x16xf32>,
    %cst_84 = arith.constant 0.000000e+00 : f32
    %73 = vector.broadcast %cst_84 : f32 to vector<128x128xf32>
    %c0_85 = arith.constant 0 : index
    %c0_86 = arith.constant 0 : index
    %c0_87 = arith.constant 0 : index
    %c0_88 = arith.constant 0 : index
    %74 = vector.load %arg6[%c0_85, %c0_86, %c0_87, %c0_88] : memref<2x10x10x16xf32, #tpu.memory_space<vmem>>, vector<2x8x8x16xf32>
    %75 = vector.shape_cast %74 : vector<2x8x8x16xf32> to vector<128x16xf32>
    %c0_89 = arith.constant 0 : index
    %c0_90 = arith.constant 0 : index
    %c0_91 = arith.constant 0 : index
    %76 = vector.load %arg3[%c0_89, %c0_90, %c0_91] : memref<9x16x128xf32, #tpu.memory_space<vmem>>, vector<1x16x128xf32>
    %77 = vector.shape_cast %76 : vector<1x16x128xf32> to vector<16x128xf32>
    %cst_92 = arith.constant dense<0.000000e+00> : vector<128x128xf32>
    %78 = tpu.matmul %75, %77, %cst_92 {dimension_numbers = #tpu.dot_dimension_numbers<[1], [0], [0], [1], [0, 0, 1, 1], [], []>} : vector<128x16xf32>, vector<16x128xf32>, vector<128x128xf32> -> vector<128x128xf32>
    %79 = arith.addf %73, %78 : vector<128x128xf32>
    %c0_93 = arith.constant 0 : index
    %c0_94 = arith.constant 0 : index
    %c1_95 = arith.constant 1 : index
    %c0_96 = arith.constant 0 : index
    %80 = vector.load %arg6[%c0_93, %c0_94, %c1_95, %c0_96] : memref<2x10x10x16xf32, #tpu.memory_space<vmem>>, vector<2x8x8x16xf32>
    %81 = vector.shape_cast %80 : vector<2x8x8x16xf32> to vector<128x16xf32>
    %c1_97 = arith.constant 1 : index
    %c0_98 = arith.constant 0 : index
    %c0_99 = arith.constant 0 : index
    %82 = vector.load %arg3[%c1_97, %c0_98, %c0_99] : memref<9x16x128xf32, #tpu.memory_space<vmem>>, vector<1x16x128xf32>
    %83 = vector.shape_cast %82 : vector<1x16x128xf32> to vector<16x128xf32>
    %cst_100 = arith.constant dense<0.000000e+00> : vector<128x128xf32>
    %84 = tpu.matmul %81, %83, %cst_100 {dimension_numbers = #tpu.dot_dimension_numbers<[1], [0], [0], [1], [0, 0, 1, 1], [], []>} : vector<128x16xf32>, vector<16x128xf32>, vector<128x128xf32> -> vector<128x128xf32>
    %85 = arith.addf %79, %84 : vector<128x128xf32>
    %c0_101 = arith.constant 0 : index
    %c0_102 = arith.constant 0 : index
    %c2_103 = arith.constant 2 : index
    %c0_104 = arith.constant 0 : index
    %86 = vector.load %arg6[%c0_101, %c0_102, %c2_103, %c0_104] : memref<2x10x10x16xf32, #tpu.memory_space<vmem>>, vector<2x8x8x16xf32>
    %87 = vector.shape_cast %86 : vector<2x8x8x16xf32> to vector<128x16xf32>
    %c2_105 = arith.constant 2 : index
    %c0_106 = arith.constant 0 : index
    %c0_107 = arith.constant 0 : index
    %88 = vector.load %arg3[%c2_105, %c0_106, %c0_107] : memref<9x16x128xf32, #tpu.memory_space<vmem>>, vector<1x16x128xf32>
    %89 = vector.shape_cast %88 : vector<1x16x128xf32> to vector<16x128xf32>
    %cst_108 = arith.constant dense<0.000000e+00> : vector<128x128xf32>
    %90 = tpu.matmul %87, %89, %cst_108 {dimension_numbers = #tpu.dot_dimension_numbers<[1], [0], [0], [1], [0, 0, 1, 1], [], []>} : vector<128x16xf32>, vector<16x128xf32>, vector<128x128xf32> -> vector<128x128xf32>
    %91 = arith.addf %85, %90 : vector<128x128xf32>
    %c0_109 = arith.constant 0 : index
    %c1_110 = arith.constant 1 : index
    %c0_111 = arith.constant 0 : index
    %c0_112 = arith.constant 0 : index
    %92 = vector.load %arg6[%c0_109, %c1_110, %c0_111, %c0_112] : memref<2x10x10x16xf32, #tpu.memory_space<vmem>>, vector<2x8x8x16xf32>
    %93 = vector.shape_cast %92 : vector<2x8x8x16xf32> to vector<128x16xf32>
    %c3_113 = arith.constant 3 : index
    %c0_114 = arith.constant 0 : index
    %c0_115 = arith.constant 0 : index
    %94 = vector.load %arg3[%c3_113, %c0_114, %c0_115] : memref<9x16x128xf32, #tpu.memory_space<vmem>>, vector<1x16x128xf32>
    %95 = vector.shape_cast %94 : vector<1x16x128xf32> to vector<16x128xf32>
    %cst_116 = arith.constant dense<0.000000e+00> : vector<128x128xf32>
    %96 = tpu.matmul %93, %95, %cst_116 {dimension_numbers = #tpu.dot_dimension_numbers<[1], [0], [0], [1], [0, 0, 1, 1], [], []>} : vector<128x16xf32>, vector<16x128xf32>, vector<128x128xf32> -> vector<128x128xf32>
    %97 = arith.addf %91, %96 : vector<128x128xf32>
    %c0_117 = arith.constant 0 : index
    %c1_118 = arith.constant 1 : index
    %c1_119 = arith.constant 1 : index
    %c0_120 = arith.constant 0 : index
    %98 = vector.load %arg6[%c0_117, %c1_118, %c1_119, %c0_120] : memref<2x10x10x16xf32, #tpu.memory_space<vmem>>, vector<2x8x8x16xf32>
    %99 = vector.shape_cast %98 : vector<2x8x8x16xf32> to vector<128x16xf32>
    %c4_121 = arith.constant 4 : index
    %c0_122 = arith.constant 0 : index
    %c0_123 = arith.constant 0 : index
    %100 = vector.load %arg3[%c4_121, %c0_122, %c0_123] : memref<9x16x128xf32, #tpu.memory_space<vmem>>, vector<1x16x128xf32>
    %101 = vector.shape_cast %100 : vector<1x16x128xf32> to vector<16x128xf32>
    %cst_124 = arith.constant dense<0.000000e+00> : vector<128x128xf32>
    %102 = tpu.matmul %99, %101, %cst_124 {dimension_numbers = #tpu.dot_dimension_numbers<[1], [0], [0], [1], [0, 0, 1, 1], [], []>} : vector<128x16xf32>, vector<16x128xf32>, vector<128x128xf32> -> vector<128x128xf32>
    %103 = arith.addf %97, %102 : vector<128x128xf32>
    %c0_125 = arith.constant 0 : index
    %c1_126 = arith.constant 1 : index
    %c2_127 = arith.constant 2 : index
    %c0_128 = arith.constant 0 : index
    %104 = vector.load %arg6[%c0_125, %c1_126, %c2_127, %c0_128] : memref<2x10x10x16xf32, #tpu.memory_space<vmem>>, vector<2x8x8x16xf32>
    %105 = vector.shape_cast %104 : vector<2x8x8x16xf32> to vector<128x16xf32>
    %c5_129 = arith.constant 5 : index
    %c0_130 = arith.constant 0 : index
    %c0_131 = arith.constant 0 : index
    %106 = vector.load %arg3[%c5_129, %c0_130, %c0_131] : memref<9x16x128xf32, #tpu.memory_space<vmem>>, vector<1x16x128xf32>
    %107 = vector.shape_cast %106 : vector<1x16x128xf32> to vector<16x128xf32>
    %cst_132 = arith.constant dense<0.000000e+00> : vector<128x128xf32>
    %108 = tpu.matmul %105, %107, %cst_132 {dimension_numbers = #tpu.dot_dimension_numbers<[1], [0], [0], [1], [0, 0, 1, 1], [], []>} : vector<128x16xf32>, vector<16x128xf32>, vector<128x128xf32> -> vector<128x128xf32>
    %109 = arith.addf %103, %108 : vector<128x128xf32>
    %c0_133 = arith.constant 0 : index
    %c2_134 = arith.constant 2 : index
    %c0_135 = arith.constant 0 : index
    %c0_136 = arith.constant 0 : index
    %110 = vector.load %arg6[%c0_133, %c2_134, %c0_135, %c0_136] : memref<2x10x10x16xf32, #tpu.memory_space<vmem>>, vector<2x8x8x16xf32>
    %111 = vector.shape_cast %110 : vector<2x8x8x16xf32> to vector<128x16xf32>
    %c6_137 = arith.constant 6 : index
    %c0_138 = arith.constant 0 : index
    %c0_139 = arith.constant 0 : index
    %112 = vector.load %arg3[%c6_137, %c0_138, %c0_139] : memref<9x16x128xf32, #tpu.memory_space<vmem>>, vector<1x16x128xf32>
    %113 = vector.shape_cast %112 : vector<1x16x128xf32> to vector<16x128xf32>
    %cst_140 = arith.constant dense<0.000000e+00> : vector<128x128xf32>
    %114 = tpu.matmul %111, %113, %cst_140 {dimension_numbers = #tpu.dot_dimension_numbers<[1], [0], [0], [1], [0, 0, 1, 1], [], []>} : vector<128x16xf32>, vector<16x128xf32>, vector<128x128xf32> -> vector<128x128xf32>
    %115 = arith.addf %109, %114 : vector<128x128xf32>
    %c0_141 = arith.constant 0 : index
    %c2_142 = arith.constant 2 : index
    %c1_143 = arith.constant 1 : index
    %c0_144 = arith.constant 0 : index
    %116 = vector.load %arg6[%c0_141, %c2_142, %c1_143, %c0_144] : memref<2x10x10x16xf32, #tpu.memory_space<vmem>>, vector<2x8x8x16xf32>
    %117 = vector.shape_cast %116 : vector<2x8x8x16xf32> to vector<128x16xf32>
    %c7_145 = arith.constant 7 : index
    %c0_146 = arith.constant 0 : index
    %c0_147 = arith.constant 0 : index
    %118 = vector.load %arg3[%c7_145, %c0_146, %c0_147] : memref<9x16x128xf32, #tpu.memory_space<vmem>>, vector<1x16x128xf32>
    %119 = vector.shape_cast %118 : vector<1x16x128xf32> to vector<16x128xf32>
    %cst_148 = arith.constant dense<0.000000e+00> : vector<128x128xf32>
    %120 = tpu.matmul %117, %119, %cst_148 {dimension_numbers = #tpu.dot_dimension_numbers<[1], [0], [0], [1], [0, 0, 1, 1], [], []>} : vector<128x16xf32>, vector<16x128xf32>, vector<128x128xf32> -> vector<128x128xf32>
    %121 = arith.addf %115, %120 : vector<128x128xf32>
    %c0_149 = arith.constant 0 : index
    %c2_150 = arith.constant 2 : index
    %c2_151 = arith.constant 2 : index
    %c0_152 = arith.constant 0 : index
    %122 = vector.load %arg6[%c0_149, %c2_150, %c2_151, %c0_152] : memref<2x10x10x16xf32, #tpu.memory_space<vmem>>, vector<2x8x8x16xf32>
    %123 = vector.shape_cast %122 : vector<2x8x8x16xf32> to vector<128x16xf32>
    %c8_153 = arith.constant 8 : index
    %c0_154 = arith.constant 0 : index
    %c0_155 = arith.constant 0 : index
    %124 = vector.load %arg3[%c8_153, %c0_154, %c0_155] : memref<9x16x128xf32, #tpu.memory_space<vmem>>, vector<1x16x128xf32>
    %125 = vector.shape_cast %124 : vector<1x16x128xf32> to vector<16x128xf32>
    %cst_156 = arith.constant dense<0.000000e+00> : vector<128x128xf32>
    %126 = tpu.matmul %123, %125, %cst_156 {dimension_numbers = #tpu.dot_dimension_numbers<[1], [0], [0], [1], [0, 0, 1, 1], [], []>} : vector<128x16xf32>, vector<16x128xf32>, vector<128x128xf32> -> vector<128x128xf32>
    %127 = arith.addf %121, %126 : vector<128x128xf32>
    %c0_157 = arith.constant 0 : index
    %c0_158 = arith.constant 0 : index
    %128 = vector.load %arg4[%c0_157, %c0_158] : memref<1x128xf32, #tpu.memory_space<vmem>>, vector<1x128xf32>
    %129 = vector.broadcast %128 : vector<1x128xf32> to vector<128x128xf32>
    %130 = arith.addf %127, %129 : vector<128x128xf32>
    %c0_159 = arith.constant 0 : index
    %c0_160 = arith.constant 0 : index
    %131 = vector.load %arg5[%c0_159, %c0_160] : memref<128x128xf32, #tpu.memory_space<vmem>>, vector<128x128xf32>
    tpu.vector_store %arg5[%c0_159, %c0_160], %130 {strides = array<i32>} : memref<128x128xf32, #tpu.memory_space<vmem>>, vector<128x128xf32>,
    return
  }
}

</mosaic_0001>

<llo_original>
// kernel: downsample_net_forward.1
$region0: #{downsample_net_forward.1}
  #allocation0 [shape = 'u32[]', space=smem, size = 0x4, offset = 0x4, fixed_abs, tag = 'smem constant byte address 0x4 - core index']
  #allocation1 [shape = 'u32[144,128]{1,0:T(1,128)}', space=vmem, size = 0x12000, scoped, tag = 'internal scratch']
  #allocation2 [shape = 'f32[2,10,10,16]{3,2,1,0:T(8,128)}', space=vmem, size = 0x28000, scoped, tag = 'scratch operand']
  %s0 = inlined_call_operand.vmem [shape: f32[4,2,9,9,3], index: 0, kind: input, shape index: {}]
  %s1 = inlined_call_operand.vmem [shape: f32[9,3,16], index: 1, kind: input, shape index: {}]
  %s2 = inlined_call_operand.vmem [shape: f32[1,16], index: 2, kind: input, shape index: {}]
  %s3 = inlined_call_operand.vmem [shape: f32[9,16,128], index: 3, kind: input, shape index: {}]
  %s4 = inlined_call_operand.vmem [shape: f32[1,128], index: 4, kind: input, shape index: {}]
  %s5 = inlined_call_operand.vmem [shape: f32[128,128], index: 5, kind: output, shape index: {}]
  %s6 = sld [smem:[#allocation0]]
  $region30: #{downsample_net_forward.1} parent=0
    _
  %s8 = ssub.s32 1, %s6
  %s9 = scalar_select 0, %s8, %s6
  // Predicated region
  $region2: #{downsample_net_forward.1} parent=0 // pred_check
    _
  $region3: #{downsample_net_forward.1} parent=0 // pred_check_branch
    %11 = sbr.rel (0) target = $region5
  $region4: #{downsample_net_forward.1} parent=0 // pred_region
    _
  $region5: #{downsample_net_forward.1} parent=0 // pred_fallthru
    _
  // Predicated region
  $region6: #{downsample_net_forward.1} parent=0 // pred_check
    _
  $region7: #{downsample_net_forward.1} parent=0 // pred_check_branch
    %13 = sbr.rel (0) target = $region9
  $region8: #{downsample_net_forward.1} parent=0 // pred_region
    _
  $region9: #{downsample_net_forward.1} parent=0 // pred_fallthru
    _
  // Predicated region
  $region10: #{downsample_net_forward.1} parent=0 // pred_check
    _
  $region11: #{downsample_net_forward.1} parent=0 // pred_check_branch
    %15 = sbr.rel (0) target = $region13
  $region12: #{downsample_net_forward.1} parent=0 // pred_region
    _
  $region13: #{downsample_net_forward.1} parent=0 // pred_fallthru
    _
  // Predicated region
  $region14: #{downsample_net_forward.1} parent=0 // pred_check
    _
  $region15: #{downsample_net_forward.1} parent=0 // pred_check_branch
    %17 = sbr.rel (0) target = $region17
  $region16: #{downsample_net_forward.1} parent=0 // pred_region
    _
  $region17: #{downsample_net_forward.1} parent=0 // pred_fallthru
    _
  // Predicated region
  $region18: #{downsample_net_forward.1} parent=0 // pred_check
    _
  $region19: #{downsample_net_forward.1} parent=0 // pred_check_branch
    %19 = sbr.rel (0) target = $region21
  $region20: #{downsample_net_forward.1} parent=0 // pred_region
    _
  $region21: #{downsample_net_forward.1} parent=0 // pred_fallthru
    _
  %v20 = vld [vmem:[%s0] sm:$0xff]
  %v21 = vld [vmem:[%s0 + $0x10] sm:$0xff]
  %v22 = vld [vmem:[%s0 + $0x20] sm:$0xff]
  %v23 = vld [vmem:[%s0 + $0x30] sm:$0xff]
  %v24 = vld [vmem:[%s0 + $0x40] sm:$0xff]
  %v25 = vld [vmem:[%s0 + $0x50] sm:$0xff]
  %v26 = vld [vmem:[%s0 + $0x60] sm:$0xff]
  %v27 = vld [vmem:[%s0 + $0x70] sm:$0xff]
  %v28 = vld [vmem:[%s0 + $0x90] sm:$0xff]
  %v29 = vld [vmem:[%s0 + $0xa0] sm:$0xff]
  %v30 = vld [vmem:[%s0 + $0xb0] sm:$0xff]
  %v31 = vld [vmem:[%s0 + $0xc0] sm:$0xff]
  %v32 = vld [vmem:[%s0 + $0xd0] sm:$0xff]
  %v33 = vld [vmem:[%s0 + $0xe0] sm:$0xff]
  %v34 = vld [vmem:[%s0 + $0xf0] sm:$0xff]
  %v35 = vld [vmem:[%s0 + $0x100] sm:$0xff]
  %v36 = vld [vmem:[%s1] sm:$0x7]
  %s37 = scalar_lea.vmem %s0, 288
  %v38 = vld [vmem:[%s37] sm:$0xff]
  %v39 = vld [vmem:[%s37 + $0x10] sm:$0xff]
  %v40 = vld [vmem:[%s37 + $0x20] sm:$0xff]
  %v41 = vld [vmem:[%s37 + $0x30] sm:$0xff]
  %v42 = vld [vmem:[%s37 + $0x40] sm:$0xff]
  %v43 = vld [vmem:[%s37 + $0x50] sm:$0xff]
  %v44 = vld [vmem:[%s37 + $0x60] sm:$0xff]
  %v45 = vld [vmem:[%s37 + $0x70] sm:$0xff]
  %v46 = vld [vmem:[%s37 + $0x90] sm:$0xff]
  %v47 = vld [vmem:[%s37 + $0xa0] sm:$0xff]
  %v48 = vld [vmem:[%s37 + $0xb0] sm:$0xff]
  %v49 = vld [vmem:[%s37 + $0xc0] sm:$0xff]
  %v50 = vld [vmem:[%s37 + $0xd0] sm:$0xff]
  %v51 = vld [vmem:[%s37 + $0xe0] sm:$0xff]
  %v52 = vld [vmem:[%s37 + $0xf0] sm:$0xff]
  %v53 = vld [vmem:[%s37 + $0x100] sm:$0xff]
  %s54 = scalar_lea.vmem %s1, 4
  %v55 = vld [vmem:[%s54] sm:$0x7]
  %vm56 = vcmask 23552
  %v58 = vsel %vm56, %v38, 0
  %v61 = vsel %vm56, %v39, 0
  %v64 = vsel %vm56, %v40, 0
  %v67 = vsel %vm56, %v41, 0
  %v70 = vsel %vm56, %v42, 0
  %v73 = vsel %vm56, %v43, 0
  %v76 = vsel %vm56, %v44, 0
  %v79 = vsel %vm56, %v45, 0
  %v82 = vsel %vm56, %v46, 0
  %v85 = vsel %vm56, %v47, 0
  %v88 = vsel %vm56, %v48, 0
  %v91 = vsel %vm56, %v49, 0
  %v94 = vsel %vm56, %v50, 0
  %v97 = vsel %vm56, %v51, 0
  %v100 = vsel %vm56, %v52, 0
  %v103 = vsel %vm56, %v53, 0
  %vm105 = vcmask 1042432
  %v107 = vsel %vm105, %v55, 0
  %109 = vmatprep.subr.mxu0 0.0
  %110 = vmatpush1.msra.mxu0 0.0
  %111 = vmatprep.subr.mxu0 0.0
  %112 = vmatpush1.msra.mxu0 0.0
  %113 = vmatprep.subr.mxu0 0.0
  %114 = vmatpush1.msra.mxu0 0.0
  %115 = vmatprep.subr.mxu0 0.0
  %116 = vmatpush1.msra.mxu0 0.0
  %117 = vmatprep.subr.mxu0 0.0
  %118 = vmatpush1.msra.mxu0 0.0
  %119 = vmatprep.subr.mxu0 0.0
  %120 = vmatpush1.msra.mxu0 0.0
  %121 = vmatprep.subr.mxu0 0.0
  %122 = vmatpush1.msra.mxu0 0.0
  %123 = vmatprep.subr.mxu0 0.0
  %124 = vmatpush1.msra.mxu0 0.0
  %125 = vmatprep.subr.mxu0 0.0
  %126 = vmatpush1.msra.mxu0 0.0
  %127 = vmatprep.subr.mxu0 0.0
  %128 = vmatpush1.msra.mxu0 0.0
  %129 = vmatprep.subr.mxu0 0.0
  %130 = vmatpush1.msra.mxu0 0.0
  %131 = vmatprep.subr.mxu0 0.0
  %132 = vmatpush1.msra.mxu0 0.0
  %133 = vmatprep.subr.mxu0 0.0
  %134 = vmatpush1.msra.mxu0 0.0
  %135 = vmatprep.subr.mxu0 0.0
  %136 = vmatpush1.msra.mxu0 0.0
  %137 = vmatprep.subr.mxu0 0.0
  %138 = vmatpush1.msra.mxu0 0.0
  %139 = vmatprep.subr.mxu0 0.0
  %140 = vmatpush1.msra.mxu0 %v107
  %141 = vmatprep.subr.mxu0 0.0
  %142 = vmatpush2.msra.mxu0 0.0
  %143 = vmatprep.subr.mxu0 0.0
  %144 = vmatpush2.msra.mxu0 0.0
  %145 = vmatprep.subr.mxu0 0.0
  %146 = vmatpush2.msra.mxu0 0.0
  %147 = vmatprep.subr.mxu0 0.0
  %148 = vmatpush2.msra.mxu0 0.0
  %149 = vmatprep.subr.mxu0 0.0
  %150 = vmatpush2.msra.mxu0 0.0
  %151 = vmatprep.subr.mxu0 0.0
  %152 = vmatpush2.msra.mxu0 0.0
  %153 = vmatprep.subr.mxu0 0.0
  %154 = vmatpush2.msra.mxu0 0.0
  %155 = vmatprep.subr.mxu0 0.0
  %156 = vmatpush2.msra.mxu0 0.0
  %157 = vmatprep.subr.mxu0 0.0
  %158 = vmatpush2.msra.mxu0 0.0
  %159 = vmatprep.subr.mxu0 0.0
  %160 = vmatpush2.msra.mxu0 0.0
  %161 = vmatprep.subr.mxu0 0.0
  %162 = vmatpush2.msra.mxu0 0.0
  %163 = vmatprep.subr.mxu0 0.0
  %164 = vmatpush2.msra.mxu0 0.0
  %165 = vmatprep.subr.mxu0 0.0
  %166 = vmatpush2.msra.mxu0 0.0
  %167 = vmatprep.subr.mxu0 0.0
  %168 = vmatpush2.msra.mxu0 0.0
  %169 = vmatprep.subr.mxu0 0.0
  %170 = vmatpush2.msra.mxu0 0.0
  %171 = vmatprep.subr.mxu0 0.0
  %172 = vmatpush2.msra.mxu0 0.0
  %173 = vmatprep.mubr.f32.mxu0 0.0
  %174 = vmatmul.mubr.f32.gmra.mxu0 %v58
  %v175 = vpop.f32.mrf.mxu0
  %v176 = vadd.f32 0.0, %v175
  %v177 = vpop.f32.mrf.mxu0
  %178 = vmatprep.mubr.f32.mxu0 0.0
  %179 = vmatmul.mubr.f32.gmra.mxu0 %v61
  %v180 = vpop.f32.mrf.mxu0
  %v181 = vadd.f32 0.0, %v180
  %v182 = vpop.f32.mrf.mxu0
  %183 = vmatprep.mubr.f32.mxu0 0.0
  %184 = vmatmul.mubr.f32.gmra.mxu0 %v64
  %v185 = vpop.f32.mrf.mxu0
  %v186 = vadd.f32 0.0, %v185
  %v187 = vpop.f32.mrf.mxu0
  %188 = vmatprep.mubr.f32.mxu0 0.0
  %189 = vmatmul.mubr.f32.gmra.mxu0 %v67
  %v190 = vpop.f32.mrf.mxu0
  %v191 = vadd.f32 0.0, %v190
  %v192 = vpop.f32.mrf.mxu0
  %193 = vmatprep.mubr.f32.mxu0 0.0
  %194 = vmatmul.mubr.f32.gmra.mxu0 %v70
  %v195 = vpop.f32.mrf.mxu0
  %v196 = vadd.f32 0.0, %v195
  %v197 = vpop.f32.mrf.mxu0
  %198 = vmatprep.mubr.f32.mxu0 0.0
  %199 = vmatmul.mubr.f32.gmra.mxu0 %v73
  %v200 = vpop.f32.mrf.mxu0
  %v201 = vadd.f32 0.0, %v200
  %v202 = vpop.f32.mrf.mxu0
  %203 = vmatprep.mubr.f32.mxu0 0.0
  %204 = vmatmul.mubr.f32.gmra.mxu0 %v76
  %v205 = vpop.f32.mrf.mxu0
  %v206 = vadd.f32 0.0, %v205
  %v207 = vpop.f32.mrf.mxu0
  %208 = vmatprep.mubr.f32.mxu0 0.0
  %209 = vmatmul.mubr.f32.gmra.mxu0 %v79
  %v210 = vpop.f32.mrf.mxu0
  %v211 = vadd.f32 0.0, %v210
  %v212 = vpop.f32.mrf.mxu0
  %213 = vmatprep.mubr.f32.mxu0 0.0
  %214 = vmatmul.mubr.f32.gmra.mxu0 %v82
  %v215 = vpop.f32.mrf.mxu0
  %v216 = vadd.f32 0.0, %v215
  %v217 = vpop.f32.mrf.mxu0
  %218 = vmatprep.mubr.f32.mxu0 0.0
  %219 = vmatmul.mubr.f32.gmra.mxu0 %v85
  %v220 = vpop.f32.mrf.mxu0
  %v221 = vadd.f32 0.0, %v220
  %v222 = vpop.f32.mrf.mxu0
  %223 = vmatprep.mubr.f32.mxu0 0.0
  %224 = vmatmul.mubr.f32.gmra.mxu0 %v88
  %v225 = vpop.f32.mrf.mxu0
  %v226 = vadd.f32 0.0, %v225
  %v227 = vpop.f32.mrf.mxu0
  %228 = vmatprep.mubr.f32.mxu0 0.0
  %229 = vmatmul.mubr.f32.gmra.mxu0 %v91
  %v230 = vpop.f32.mrf.mxu0
  %v231 = vadd.f32 0.0, %v230
  %v232 = vpop.f32.mrf.mxu0
  %233 = vmatprep.mubr.f32.mxu0 0.0
  %234 = vmatmul.mubr.f32.gmra.mxu0 %v94
  %v235 = vpop.f32.mrf.mxu0
  %v236 = vadd.f32 0.0, %v235
  %v237 = vpop.f32.mrf.mxu0
  %238 = vmatprep.mubr.f32.mxu0 0.0
  %239 = vmatmul.mubr.f32.gmra.mxu0 %v97
  %v240 = vpop.f32.mrf.mxu0
  %v241 = vadd.f32 0.0, %v240
  %v242 = vpop.f32.mrf.mxu0
  %243 = vmatprep.mubr.f32.mxu0 0.0
  %244 = vmatmul.mubr.f32.gmra.mxu0 %v100
  %v245 = vpop.f32.mrf.mxu0
  %v246 = vadd.f32 0.0, %v245
  %v247 = vpop.f32.mrf.mxu0
  %248 = vmatprep.mubr.f32.mxu0 0.0
  %249 = vmatmul.mubr.f32.gmra.mxu0 %v103
  %v250 = vpop.f32.mrf.mxu0
  %v251 = vadd.f32 0.0, %v250
  %v252 = vpop.f32.mrf.mxu0
  %253 = vdwg.mxu0
  %v255 = vsel %vm56, %v20, 0
  %v258 = vsel %vm56, %v21, 0
  %v261 = vsel %vm56, %v22, 0
  %v264 = vsel %vm56, %v23, 0
  %v267 = vsel %vm56, %v24, 0
  %v270 = vsel %vm56, %v25, 0
  %v273 = vsel %vm56, %v26, 0
  %v276 = vsel %vm56, %v27, 0
  %v279 = vsel %vm56, %v28, 0
  %v282 = vsel %vm56, %v29, 0
  %v285 = vsel %vm56, %v30, 0
  %v288 = vsel %vm56, %v31, 0
  %v291 = vsel %vm56, %v32, 0
  %v294 = vsel %vm56, %v33, 0
  %v297 = vsel %vm56, %v34, 0
  %v300 = vsel %vm56, %v35, 0
  %v303 = vsel %vm105, %v36, 0
  %305 = vmatprep.subr.mxu0 0.0
  %306 = vmatpush1.msra.mxu0 0.0
  %307 = vmatprep.subr.mxu0 0.0
  %308 = vmatpush1.msra.mxu0 0.0
  %309 = vmatprep.subr.mxu0 0.0
  %310 = vmatpush1.msra.mxu0 0.0
  %311 = vmatprep.subr.mxu0 0.0
  %312 = vmatpush1.msra.mxu0 0.0
  %313 = vmatprep.subr.mxu0 0.0
  %314 = vmatpush1.msra.mxu0 0.0
  %315 = vmatprep.subr.mxu0 0.0
  %316 = vmatpush1.msra.mxu0 0.0
  %317 = vmatprep.subr.mxu0 0.0
  %318 = vmatpush1.msra.mxu0 0.0
  %319 = vmatprep.subr.mxu0 0.0
  %320 = vmatpush1.msra.mxu0 0.0
  %321 = vmatprep.subr.mxu0 0.0
  %322 = vmatpush1.msra.mxu0 0.0
  %323 = vmatprep.subr.mxu0 0.0
  %324 = vmatpush1.msra.mxu0 0.0
  %325 = vmatprep.subr.mxu0 0.0
  %326 = vmatpush1.msra.mxu0 0.0
  %327 = vmatprep.subr.mxu0 0.0
  %328 = vmatpush1.msra.mxu0 0.0
  %329 = vmatprep.subr.mxu0 0.0
  %330 = vmatpush1.msra.mxu0 0.0
  %331 = vmatprep.subr.mxu0 0.0
  %332 = vmatpush1.msra.mxu0 0.0
  %333 = vmatprep.subr.mxu0 0.0
  %334 = vmatpush1.msra.mxu0 0.0
  %335 = vmatprep.subr.mxu0 0.0
  %336 = vmatpush1.msra.mxu0 %v303
  %337 = vmatprep.subr.mxu0 0.0
  %338 = vmatpush2.msra.mxu0 0.0
  %339 = vmatprep.subr.mxu0 0.0
  %340 = vmatpush2.msra.mxu0 0.0
  %341 = vmatprep.subr.mxu0 0.0
  %342 = vmatpush2.msra.mxu0 0.0
  %343 = vmatprep.subr.mxu0 0.0
  %344 = vmatpush2.msra.mxu0 0.0
  %345 = vmatprep.subr.mxu0 0.0
  %346 = vmatpush2.msra.mxu0 0.0
  %347 = vmatprep.subr.mxu0 0.0
  %348 = vmatpush2.msra.mxu0 0.0
  %349 = vmatprep.subr.mxu0 0.0
  %350 = vmatpush2.msra.mxu0 0.0
  %351 = vmatprep.subr.mxu0 0.0
  %352 = vmatpush2.msra.mxu0 0.0
  %353 = vmatprep.subr.mxu0 0.0
  %354 = vmatpush2.msra.mxu0 0.0
  %355 = vmatprep.subr.mxu0 0.0
  %356 = vmatpush2.msra.mxu0 0.0
  %357 = vmatprep.subr.mxu0 0.0
  %358 = vmatpush2.msra.mxu0 0.0
  %359 = vmatprep.subr.mxu0 0.0
  %360 = vmatpush2.msra.mxu0 0.0
  %361 = vmatprep.subr.mxu0 0.0
  %362 = vmatpush2.msra.mxu0 0.0
  %363 = vmatprep.subr.mxu0 0.0
  %364 = vmatpush2.msra.mxu0 0.0
  %365 = vmatprep.subr.mxu0 0.0
  %366 = vmatpush2.msra.mxu0 0.0
  %367 = vmatprep.subr.mxu0 0.0
  %368 = vmatpush2.msra.mxu0 0.0
  %369 = vmatprep.mubr.f32.mxu0 0.0
  %370 = vmatmul.mubr.f32.gmra.mxu0 %v255
  %v371 = vpop.f32.mrf.mxu0
  %v372 = vadd.f32 %v176, %v371
  %v373 = vpop.f32.mrf.mxu0
  %374 = vmatprep.mubr.f32.mxu0 0.0
  %375 = vmatmul.mubr.f32.gmra.mxu0 %v258
  %v376 = vpop.f32.mrf.mxu0
  %v377 = vadd.f32 %v181, %v376
  %v378 = vpop.f32.mrf.mxu0
  %379 = vmatprep.mubr.f32.mxu0 0.0
  %380 = vmatmul.mubr.f32.gmra.mxu0 %v261
  %v381 = vpop.f32.mrf.mxu0
  %v382 = vadd.f32 %v186, %v381
  %v383 = vpop.f32.mrf.mxu0
  %384 = vmatprep.mubr.f32.mxu0 0.0
  %385 = vmatmul.mubr.f32.gmra.mxu0 %v264
  %v386 = vpop.f32.mrf.mxu0
  %v387 = vadd.f32 %v191, %v386
  %v388 = vpop.f32.mrf.mxu0
  %389 = vmatprep.mubr.f32.mxu0 0.0
  %390 = vmatmul.mubr.f32.gmra.mxu0 %v267
  %v391 = vpop.f32.mrf.mxu0
  %v392 = vadd.f32 %v196, %v391
  %v393 = vpop.f32.mrf.mxu0
  %394 = vmatprep.mubr.f32.mxu0 0.0
  %395 = vmatmul.mubr.f32.gmra.mxu0 %v270
  %v396 = vpop.f32.mrf.mxu0
  %v397 = vadd.f32 %v201, %v396
  %v398 = vpop.f32.mrf.mxu0
  %399 = vmatprep.mubr.f32.mxu0 0.0
  %400 = vmatmul.mubr.f32.gmra.mxu0 %v273
  %v401 = vpop.f32.mrf.mxu0
  %v402 = vadd.f32 %v206, %v401
  %v403 = vpop.f32.mrf.mxu0
  %404 = vmatprep.mubr.f32.mxu0 0.0
  %405 = vmatmul.mubr.f32.gmra.mxu0 %v276
  %v406 = vpop.f32.mrf.mxu0
  %v407 = vadd.f32 %v211, %v406
  %v408 = vpop.f32.mrf.mxu0
  %409 = vmatprep.mubr.f32.mxu0 0.0
  %410 = vmatmul.mubr.f32.gmra.mxu0 %v279
  %v411 = vpop.f32.mrf.mxu0
  %v412 = vadd.f32 %v216, %v411
  %v413 = vpop.f32.mrf.mxu0
  %414 = vmatprep.mubr.f32.mxu0 0.0
  %415 = vmatmul.mubr.f32.gmra.mxu0 %v282
  %v416 = vpop.f32.mrf.mxu0
  %v417 = vadd.f32 %v221, %v416
  %v418 = vpop.f32.mrf.mxu0
  %419 = vmatprep.mubr.f32.mxu0 0.0
  %420 = vmatmul.mubr.f32.gmra.mxu0 %v285
  %v421 = vpop.f32.mrf.mxu0
  %v422 = vadd.f32 %v226, %v421
  %v423 = vpop.f32.mrf.mxu0
  %424 = vmatprep.mubr.f32.mxu0 0.0
  %425 = vmatmul.mubr.f32.gmra.mxu0 %v288
  %v426 = vpop.f32.mrf.mxu0
  %v427 = vadd.f32 %v231, %v426
  %v428 = vpop.f32.mrf.mxu0
  %429 = vmatprep.mubr.f32.mxu0 0.0
  %430 = vmatmul.mubr.f32.gmra.mxu0 %v291
  %v431 = vpop.f32.mrf.mxu0
  %v432 = vadd.f32 %v236, %v431
  %v433 = vpop.f32.mrf.mxu0
  %434 = vmatprep.mubr.f32.mxu0 0.0
  %435 = vmatmul.mubr.f32.gmra.mxu0 %v294
  %v436 = vpop.f32.mrf.mxu0
  %v437 = vadd.f32 %v241, %v436
  %v438 = vpop.f32.mrf.mxu0
  %439 = vmatprep.mubr.f32.mxu0 0.0
  %440 = vmatmul.mubr.f32.gmra.mxu0 %v297
  %v441 = vpop.f32.mrf.mxu0
  %v442 = vadd.f32 %v246, %v441
  %v443 = vpop.f32.mrf.mxu0
  %444 = vmatprep.mubr.f32.mxu0 0.0
  %445 = vmatmul.mubr.f32.gmra.mxu0 %v300
  %v446 = vpop.f32.mrf.mxu0
  %v447 = vadd.f32 %v251, %v446
  %v448 = vpop.f32.mrf.mxu0
  %449 = vdwg.mxu0
  %v450 = vld [vmem:[%s0 + $0x1] sm:$0xff]
  %v451 = vld [vmem:[%s0 + $0x11] sm:$0xff]
  %v452 = vld [vmem:[%s0 + $0x21] sm:$0xff]
  %v453 = vld [vmem:[%s0 + $0x31] sm:$0xff]
  %v454 = vld [vmem:[%s0 + $0x41] sm:$0xff]
  %v455 = vld [vmem:[%s0 + $0x51] sm:$0xff]
  %v456 = vld [vmem:[%s0 + $0x61] sm:$0xff]
  %v457 = vld [vmem:[%s0 + $0x71] sm:$0xff]
  %v458 = vld [vmem:[%s0 + $0x91] sm:$0xff]
  %v459 = vld [vmem:[%s0 + $0xa1] sm:$0xff]
  %v460 = vld [vmem:[%s0 + $0xb1] sm:$0xff]
  %v461 = vld [vmem:[%s0 + $0xc1] sm:$0xff]
  %v462 = vld [vmem:[%s0 + $0xd1] sm:$0xff]
  %v463 = vld [vmem:[%s0 + $0xe1] sm:$0xff]
  %v464 = vld [vmem:[%s0 + $0xf1] sm:$0xff]
  %v465 = vld [vmem:[%s0 + $0x101] sm:$0xff]
  %s466 = scalar_lea.vmem %s1, 8
  %v467 = vld [vmem:[%s466] sm:$0x7]
  %v469 = vsel %vm56, %v450, 0
  %v472 = vsel %vm56, %v451, 0
  %v475 = vsel %vm56, %v452, 0
  %v478 = vsel %vm56, %v453, 0
  %v481 = vsel %vm56, %v454, 0
  %v484 = vsel %vm56, %v455, 0
  %v487 = vsel %vm56, %v456, 0
  %v490 = vsel %vm56, %v457, 0
  %v493 = vsel %vm56, %v458, 0
  %v496 = vsel %vm56, %v459, 0
  %v499 = vsel %vm56, %v460, 0
  %v502 = vsel %vm56, %v461, 0
  %v505 = vsel %vm56, %v462, 0
  %v508 = vsel %vm56, %v463, 0
  %v511 = vsel %vm56, %v464, 0
  %v514 = vsel %vm56, %v465, 0
  %v517 = vsel %vm105, %v467, 0
  %519 = vmatprep.subr.mxu0 0.0
  %520 = vmatpush1.msra.mxu0 0.0
  %521 = vmatprep.subr.mxu0 0.0
  %522 = vmatpush1.msra.mxu0 0.0
  %523 = vmatprep.subr.mxu0 0.0
  %524 = vmatpush1.msra.mxu0 0.0
  %525 = vmatprep.subr.mxu0 0.0
  %526 = vmatpush1.msra.mxu0 0.0
  %527 = vmatprep.subr.mxu0 0.0
  %528 = vmatpush1.msra.mxu0 0.0
  %529 = vmatprep.subr.mxu0 0.0
  %530 = vmatpush1.msra.mxu0 0.0
  %531 = vmatprep.subr.mxu0 0.0
  %532 = vmatpush1.msra.mxu0 0.0
  %533 = vmatprep.subr.mxu0 0.0
  %534 = vmatpush1.msra.mxu0 0.0
  %535 = vmatprep.subr.mxu0 0.0
  %536 = vmatpush1.msra.mxu0 0.0
  %537 = vmatprep.subr.mxu0 0.0
  %538 = vmatpush1.msra.mxu0 0.0
  %539 = vmatprep.subr.mxu0 0.0
  %540 = vmatpush1.msra.mxu0 0.0
  %541 = vmatprep.subr.mxu0 0.0
  %542 = vmatpush1.msra.mxu0 0.0
  %543 = vmatprep.subr.mxu0 0.0
  %544 = vmatpush1.msra.mxu0 0.0
  %545 = vmatprep.subr.mxu0 0.0
  %546 = vmatpush1.msra.mxu0 0.0
  %547 = vmatprep.subr.mxu0 0.0
  %548 = vmatpush1.msra.mxu0 0.0
  %549 = vmatprep.subr.mxu0 0.0
  %550 = vmatpush1.msra.mxu0 %v517
  %551 = vmatprep.subr.mxu0 0.0
  %552 = vmatpush2.msra.mxu0 0.0
  %553 = vmatprep.subr.mxu0 0.0
  %554 = vmatpush2.msra.mxu0 0.0
  %555 = vmatprep.subr.mxu0 0.0
  %556 = vmatpush2.msra.mxu0 0.0
  %557 = vmatprep.subr.mxu0 0.0
  %558 = vmatpush2.msra.mxu0 0.0
  %559 = vmatprep.subr.mxu0 0.0
  %560 = vmatpush2.msra.mxu0 0.0
  %561 = vmatprep.subr.mxu0 0.0
  %562 = vmatpush2.msra.mxu0 0.0
  %563 = vmatprep.subr.mxu0 0.0
  %564 = vmatpush2.msra.mxu0 0.0
  %565 = vmatprep.subr.mxu0 0.0
  %566 = vmatpush2.msra.mxu0 0.0
  %567 = vmatprep.subr.mxu0 0.0
  %568 = vmatpush2.msra.mxu0 0.0
  %569 = vmatprep.subr.mxu0 0.0
  %570 = vmatpush2.msra.mxu0 0.0
  %571 = vmatprep.subr.mxu0 0.0
  %572 = vmatpush2.msra.mxu0 0.0
  %573 = vmatprep.subr.mxu0 0.0
  %574 = vmatpush2.msra.mxu0 0.0
  %575 = vmatprep.subr.mxu0 0.0
  %576 = vmatpush2.msra.mxu0 0.0
  %577 = vmatprep.subr.mxu0 0.0
  %578 = vmatpush2.msra.mxu0 0.0
  %579 = vmatprep.subr.mxu0 0.0
  %580 = vmatpush2.msra.mxu0 0.0
  %581 = vmatprep.subr.mxu0 0.0
  %582 = vmatpush2.msra.mxu0 0.0
  %583 = vmatprep.mubr.f32.mxu0 0.0
  %584 = vmatmul.mubr.f32.gmra.mxu0 %v469
  %v585 = vpop.f32.mrf.mxu0
  %v586 = vadd.f32 0.0, %v585
  %v587 = vpop.f32.mrf.mxu0
  %588 = vmatprep.mubr.f32.mxu0 0.0
  %589 = vmatmul.mubr.f32.gmra.mxu0 %v472
  %v590 = vpop.f32.mrf.mxu0
  %v591 = vadd.f32 0.0, %v590
  %v592 = vpop.f32.mrf.mxu0
  %593 = vmatprep.mubr.f32.mxu0 0.0
  %594 = vmatmul.mubr.f32.gmra.mxu0 %v475
  %v595 = vpop.f32.mrf.mxu0
  %v596 = vadd.f32 0.0, %v595
  %v597 = vpop.f32.mrf.mxu0
  %598 = vmatprep.mubr.f32.mxu0 0.0
  %599 = vmatmul.mubr.f32.gmra.mxu0 %v478
  %v600 = vpop.f32.mrf.mxu0
  %v601 = vadd.f32 0.0, %v600
  %v602 = vpop.f32.mrf.mxu0
  %603 = vmatprep.mubr.f32.mxu0 0.0
  %604 = vmatmul.mubr.f32.gmra.mxu0 %v481
  %v605 = vpop.f32.mrf.mxu0
  %v606 = vadd.f32 0.0, %v605
  %v607 = vpop.f32.mrf.mxu0
  %608 = vmatprep.mubr.f32.mxu0 0.0
  %609 = vmatmul.mubr.f32.gmra.mxu0 %v484
  %v610 = vpop.f32.mrf.mxu0
  %v611 = vadd.f32 0.0, %v610
  %v612 = vpop.f32.mrf.mxu0
  %613 = vmatprep.mubr.f32.mxu0 0.0
  %614 = vmatmul.mubr.f32.gmra.mxu0 %v487
  %v615 = vpop.f32.mrf.mxu0
  %v616 = vadd.f32 0.0, %v615
  %v617 = vpop.f32.mrf.mxu0
  %618 = vmatprep.mubr.f32.mxu0 0.0
  %619 = vmatmul.mubr.f32.gmra.mxu0 %v490
  %v620 = vpop.f32.mrf.mxu0
  %v621 = vadd.f32 0.0, %v620
  %v622 = vpop.f32.mrf.mxu0
  %623 = vmatprep.mubr.f32.mxu0 0.0
  %624 = vmatmul.mubr.f32.gmra.mxu0 %v493
  %v625 = vpop.f32.mrf.mxu0
  %v626 = vadd.f32 0.0, %v625
  %v627 = vpop.f32.mrf.mxu0
  %628 = vmatprep.mubr.f32.mxu0 0.0
  %629 = vmatmul.mubr.f32.gmra.mxu0 %v496
  %v630 = vpop.f32.mrf.mxu0
  %v631 = vadd.f32 0.0, %v630
  %v632 = vpop.f32.mrf.mxu0
  %633 = vmatprep.mubr.f32.mxu0 0.0
  %634 = vmatmul.mubr.f32.gmra.mxu0 %v499
  %v635 = vpop.f32.mrf.mxu0
  %v636 = vadd.f32 0.0, %v635
  %v637 = vpop.f32.mrf.mxu0
  %638 = vmatprep.mubr.f32.mxu0 0.0
  %639 = vmatmul.mubr.f32.gmra.mxu0 %v502
  %v640 = vpop.f32.mrf.mxu0
  %v641 = vadd.f32 0.0, %v640
  %v642 = vpop.f32.mrf.mxu0
  %643 = vmatprep.mubr.f32.mxu0 0.0
  %644 = vmatmul.mubr.f32.gmra.mxu0 %v505
  %v645 = vpop.f32.mrf.mxu0
  %v646 = vadd.f32 0.0, %v645
  %v647 = vpop.f32.mrf.mxu0
  %648 = vmatprep.mubr.f32.mxu0 0.0
  %649 = vmatmul.mubr.f32.gmra.mxu0 %v508
  %v650 = vpop.f32.mrf.mxu0
  %v651 = vadd.f32 0.0, %v650
  %v652 = vpop.f32.mrf.mxu0
  %653 = vmatprep.mubr.f32.mxu0 0.0
  %654 = vmatmul.mubr.f32.gmra.mxu0 %v511
  %v655 = vpop.f32.mrf.mxu0
  %v656 = vadd.f32 0.0, %v655
  %v657 = vpop.f32.mrf.mxu0
  %658 = vmatprep.mubr.f32.mxu0 0.0
  %659 = vmatmul.mubr.f32.gmra.mxu0 %v514
  %v660 = vpop.f32.mrf.mxu0
  %v661 = vadd.f32 0.0, %v660
  %v662 = vpop.f32.mrf.mxu0
  %663 = vdwg.mxu0
  %v664 = vadd.f32 %v372, %v586
  %v665 = vadd.f32 %v377, %v591
  %v666 = vadd.f32 %v382, %v596
  %v667 = vadd.f32 %v387, %v601
  %v668 = vadd.f32 %v392, %v606
  %v669 = vadd.f32 %v397, %v611
  %v670 = vadd.f32 %v402, %v616
  %v671 = vadd.f32 %v407, %v621
  %v672 = vadd.f32 %v412, %v626
  %v673 = vadd.f32 %v417, %v631
  %v674 = vadd.f32 %v422, %v636
  %v675 = vadd.f32 %v427, %v641
  %v676 = vadd.f32 %v432, %v646
  %v677 = vadd.f32 %v437, %v651
  %v678 = vadd.f32 %v442, %v656
  %v679 = vadd.f32 %v447, %v661
  %s680 = scalar_lea.vmem %s0, 576
  %v681 = vld [vmem:[%s680] sm:$0xff]
  %v682 = vld [vmem:[%s680 + $0x10] sm:$0xff]
  %v683 = vld [vmem:[%s680 + $0x20] sm:$0xff]
  %v684 = vld [vmem:[%s680 + $0x30] sm:$0xff]
  %v685 = vld [vmem:[%s680 + $0x40] sm:$0xff]
  %v686 = vld [vmem:[%s680 + $0x50] sm:$0xff]
  %v687 = vld [vmem:[%s680 + $0x60] sm:$0xff]
  %v688 = vld [vmem:[%s680 + $0x70] sm:$0xff]
  %v689 = vld [vmem:[%s680 + $0x90] sm:$0xff]
  %v690 = vld [vmem:[%s680 + $0xa0] sm:$0xff]
  %v691 = vld [vmem:[%s680 + $0xb0] sm:$0xff]
  %v692 = vld [vmem:[%s680 + $0xc0] sm:$0xff]
  %v693 = vld [vmem:[%s680 + $0xd0] sm:$0xff]
  %v694 = vld [vmem:[%s680 + $0xe0] sm:$0xff]
  %v695 = vld [vmem:[%s680 + $0xf0] sm:$0xff]
  %v696 = vld [vmem:[%s680 + $0x100] sm:$0xff]
  %s697 = scalar_lea.vmem %s1, 12
  %v698 = vld [vmem:[%s697] sm:$0x7]
  %v700 = vsel %vm56, %v681, 0
  %v703 = vsel %vm56, %v682, 0
  %v706 = vsel %vm56, %v683, 0
  %v709 = vsel %vm56, %v684, 0
  %v712 = vsel %vm56, %v685, 0
  %v715 = vsel %vm56, %v686, 0
  %v718 = vsel %vm56, %v687, 0
  %v721 = vsel %vm56, %v688, 0
  %v724 = vsel %vm56, %v689, 0
  %v727 = vsel %vm56, %v690, 0
  %v730 = vsel %vm56, %v691, 0
  %v733 = vsel %vm56, %v692, 0
  %v736 = vsel %vm56, %v693, 0
  %v739 = vsel %vm56, %v694, 0
  %v742 = vsel %vm56, %v695, 0
  %v745 = vsel %vm56, %v696, 0
  %v748 = vsel %vm105, %v698, 0
  %750 = vmatprep.subr.mxu0 0.0
  %751 = vmatpush1.msra.mxu0 0.0
  %752 = vmatprep.subr.mxu0 0.0
  %753 = vmatpush1.msra.mxu0 0.0
  %754 = vmatprep.subr.mxu0 0.0
  %755 = vmatpush1.msra.mxu0 0.0
  %756 = vmatprep.subr.mxu0 0.0
  %757 = vmatpush1.msra.mxu0 0.0
  %758 = vmatprep.subr.mxu0 0.0
  %759 = vmatpush1.msra.mxu0 0.0
  %760 = vmatprep.subr.mxu0 0.0
  %761 = vmatpush1.msra.mxu0 0.0
  %762 = vmatprep.subr.mxu0 0.0
  %763 = vmatpush1.msra.mxu0 0.0
  %764 = vmatprep.subr.mxu0 0.0
  %765 = vmatpush1.msra.mxu0 0.0
  %766 = vmatprep.subr.mxu0 0.0
  %767 = vmatpush1.msra.mxu0 0.0
  %768 = vmatprep.subr.mxu0 0.0
  %769 = vmatpush1.msra.mxu0 0.0
  %770 = vmatprep.subr.mxu0 0.0
  %771 = vmatpush1.msra.mxu0 0.0
  %772 = vmatprep.subr.mxu0 0.0
  %773 = vmatpush1.msra.mxu0 0.0
  %774 = vmatprep.subr.mxu0 0.0
  %775 = vmatpush1.msra.mxu0 0.0
  %776 = vmatprep.subr.mxu0 0.0
  %777 = vmatpush1.msra.mxu0 0.0
  %778 = vmatprep.subr.mxu0 0.0
  %779 = vmatpush1.msra.mxu0 0.0
  %780 = vmatprep.subr.mxu0 0.0
  %781 = vmatpush1.msra.mxu0 %v748
  %782 = vmatprep.subr.mxu0 0.0
  %783 = vmatpush2.msra.mxu0 0.0
  %784 = vmatprep.subr.mxu0 0.0
  %785 = vmatpush2.msra.mxu0 0.0
  %786 = vmatprep.subr.mxu0 0.0
  %787 = vmatpush2.msra.mxu0 0.0
  %788 = vmatprep.subr.mxu0 0.0
  %789 = vmatpush2.msra.mxu0 0.0
  %790 = vmatprep.subr.mxu0 0.0
  %791 = vmatpush2.msra.mxu0 0.0
  %792 = vmatprep.subr.mxu0 0.0
  %793 = vmatpush2.msra.mxu0 0.0
  %794 = vmatprep.subr.mxu0 0.0
  %795 = vmatpush2.msra.mxu0 0.0
  %796 = vmatprep.subr.mxu0 0.0
  %797 = vmatpush2.msra.mxu0 0.0
  %798 = vmatprep.subr.mxu0 0.0
  %799 = vmatpush2.msra.mxu0 0.0
  %800 = vmatprep.subr.mxu0 0.0
  %801 = vmatpush2.msra.mxu0 0.0
  %802 = vmatprep.subr.mxu0 0.0
  %803 = vmatpush2.msra.mxu0 0.0
  %804 = vmatprep.subr.mxu0 0.0
  %805 = vmatpush2.msra.mxu0 0.0
  %806 = vmatprep.subr.mxu0 0.0
  %807 = vmatpush2.msra.mxu0 0.0
  %808 = vmatprep.subr.mxu0 0.0
  %809 = vmatpush2.msra.mxu0 0.0
  %810 = vmatprep.subr.mxu0 0.0
  %811 = vmatpush2.msra.mxu0 0.0
  %812 = vmatprep.subr.mxu0 0.0
  %813 = vmatpush2.msra.mxu0 0.0
  %814 = vmatprep.mubr.f32.mxu0 0.0
  %815 = vmatmul.mubr.f32.gmra.mxu0 %v700
  %v816 = vpop.f32.mrf.mxu0
  %v817 = vadd.f32 0.0, %v816
  %v818 = vpop.f32.mrf.mxu0
  %819 = vmatprep.mubr.f32.mxu0 0.0
  %820 = vmatmul.mubr.f32.gmra.mxu0 %v703
  %v821 = vpop.f32.mrf.mxu0
  %v822 = vadd.f32 0.0, %v821
  %v823 = vpop.f32.mrf.mxu0
  %824 = vmatprep.mubr.f32.mxu0 0.0
  %825 = vmatmul.mubr.f32.gmra.mxu0 %v706
  %v826 = vpop.f32.mrf.mxu0
  %v827 = vadd.f32 0.0, %v826
  %v828 = vpop.f32.mrf.mxu0
  %829 = vmatprep.mubr.f32.mxu0 0.0
  %830 = vmatmul.mubr.f32.gmra.mxu0 %v709
  %v831 = vpop.f32.mrf.mxu0
  %v832 = vadd.f32 0.0, %v831
  %v833 = vpop.f32.mrf.mxu0
  %834 = vmatprep.mubr.f32.mxu0 0.0
  %835 = vmatmul.mubr.f32.gmra.mxu0 %v712
  %v836 = vpop.f32.mrf.mxu0
  %v837 = vadd.f32 0.0, %v836
  %v838 = vpop.f32.mrf.mxu0
  %839 = vmatprep.mubr.f32.mxu0 0.0
  %840 = vmatmul.mubr.f32.gmra.mxu0 %v715
  %v841 = vpop.f32.mrf.mxu0
  %v842 = vadd.f32 0.0, %v841
  %v843 = vpop.f32.mrf.mxu0
  %844 = vmatprep.mubr.f32.mxu0 0.0
  %845 = vmatmul.mubr.f32.gmra.mxu0 %v718
  %v846 = vpop.f32.mrf.mxu0
  %v847 = vadd.f32 0.0, %v846
  %v848 = vpop.f32.mrf.mxu0
  %849 = vmatprep.mubr.f32.mxu0 0.0
  %850 = vmatmul.mubr.f32.gmra.mxu0 %v721
  %v851 = vpop.f32.mrf.mxu0
  %v852 = vadd.f32 0.0, %v851
  %v853 = vpop.f32.mrf.mxu0
  %854 = vmatprep.mubr.f32.mxu0 0.0
  %855 = vmatmul.mubr.f32.gmra.mxu0 %v724
  %v856 = vpop.f32.mrf.mxu0
  %v857 = vadd.f32 0.0, %v856
  %v858 = vpop.f32.mrf.mxu0
  %859 = vmatprep.mubr.f32.mxu0 0.0
  %860 = vmatmul.mubr.f32.gmra.mxu0 %v727
  %v861 = vpop.f32.mrf.mxu0
  %v862 = vadd.f32 0.0, %v861
  %v863 = vpop.f32.mrf.mxu0
  %864 = vmatprep.mubr.f32.mxu0 0.0
  %865 = vmatmul.mubr.f32.gmra.mxu0 %v730
  %v866 = vpop.f32.mrf.mxu0
  %v867 = vadd.f32 0.0, %v866
  %v868 = vpop.f32.mrf.mxu0
  %869 = vmatprep.mubr.f32.mxu0 0.0
  %870 = vmatmul.mubr.f32.gmra.mxu0 %v733
  %v871 = vpop.f32.mrf.mxu0
  %v872 = vadd.f32 0.0, %v871
  %v873 = vpop.f32.mrf.mxu0
  %874 = vmatprep.mubr.f32.mxu0 0.0
  %875 = vmatmul.mubr.f32.gmra.mxu0 %v736
  %v876 = vpop.f32.mrf.mxu0
  %v877 = vadd.f32 0.0, %v876
  %v878 = vpop.f32.mrf.mxu0
  %879 = vmatprep.mubr.f32.mxu0 0.0
  %880 = vmatmul.mubr.f32.gmra.mxu0 %v739
  %v881 = vpop.f32.mrf.mxu0
  %v882 = vadd.f32 0.0, %v881
  %v883 = vpop.f32.mrf.mxu0
  %884 = vmatprep.mubr.f32.mxu0 0.0
  %885 = vmatmul.mubr.f32.gmra.mxu0 %v742
  %v886 = vpop.f32.mrf.mxu0
  %v887 = vadd.f32 0.0, %v886
  %v888 = vpop.f32.mrf.mxu0
  %889 = vmatprep.mubr.f32.mxu0 0.0
  %890 = vmatmul.mubr.f32.gmra.mxu0 %v745
  %v891 = vpop.f32.mrf.mxu0
  %v892 = vadd.f32 0.0, %v891
  %v893 = vpop.f32.mrf.mxu0
  %894 = vdwg.mxu0
  %v895 = vadd.f32 %v664, %v817
  %v896 = vadd.f32 %v665, %v822
  %v897 = vadd.f32 %v666, %v827
  %v898 = vadd.f32 %v667, %v832
  %v899 = vadd.f32 %v668, %v837
  %v900 = vadd.f32 %v669, %v842
  %v901 = vadd.f32 %v670, %v847
  %v902 = vadd.f32 %v671, %v852
  %v903 = vadd.f32 %v672, %v857
  %v904 = vadd.f32 %v673, %v862
  %v905 = vadd.f32 %v674, %v867
  %v906 = vadd.f32 %v675, %v872
  %v907 = vadd.f32 %v676, %v877
  %v908 = vadd.f32 %v677, %v882
  %v909 = vadd.f32 %v678, %v887
  %v910 = vadd.f32 %v679, %v892
  %s911 = scalar_lea.vmem %s0, 864
  %v912 = vld [vmem:[%s911] sm:$0xff]
  %v913 = vld [vmem:[%s911 + $0x10] sm:$0xff]
  %v914 = vld [vmem:[%s911 + $0x20] sm:$0xff]
  %v915 = vld [vmem:[%s911 + $0x30] sm:$0xff]
  %v916 = vld [vmem:[%s911 + $0x40] sm:$0xff]
  %v917 = vld [vmem:[%s911 + $0x50] sm:$0xff]
  %v918 = vld [vmem:[%s911 + $0x60] sm:$0xff]
  %v919 = vld [vmem:[%s911 + $0x70] sm:$0xff]
  %v920 = vld [vmem:[%s911 + $0x90] sm:$0xff]
  %v921 = vld [vmem:[%s911 + $0xa0] sm:$0xff]
  %v922 = vld [vmem:[%s911 + $0xb0] sm:$0xff]
  %v923 = vld [vmem:[%s911 + $0xc0] sm:$0xff]
  %v924 = vld [vmem:[%s911 + $0xd0] sm:$0xff]
  %v925 = vld [vmem:[%s911 + $0xe0] sm:$0xff]
  %v926 = vld [vmem:[%s911 + $0xf0] sm:$0xff]
  %v927 = vld [vmem:[%s911 + $0x100] sm:$0xff]
  %s928 = scalar_lea.vmem %s1, 16
  %v929 = vld [vmem:[%s928] sm:$0x7]
  %v931 = vsel %vm56, %v912, 0
  %v934 = vsel %vm56, %v913, 0
  %v937 = vsel %vm56, %v914, 0
  %v940 = vsel %vm56, %v915, 0
  %v943 = vsel %vm56, %v916, 0
  %v946 = vsel %vm56, %v917, 0
  %v949 = vsel %vm56, %v918, 0
  %v952 = vsel %vm56, %v919, 0
  %v955 = vsel %vm56, %v920, 0
  %v958 = vsel %vm56, %v921, 0
  %v961 = vsel %vm56, %v922, 0
  %v964 = vsel %vm56, %v923, 0
  %v967 = vsel %vm56, %v924, 0
  %v970 = vsel %vm56, %v925, 0
  %v973 = vsel %vm56, %v926, 0
  %v976 = vsel %vm56, %v927, 0
  %v979 = vsel %vm105, %v929, 0
  %981 = vmatprep.subr.mxu0 0.0
  %982 = vmatpush1.msra.mxu0 0.0
  %983 = vmatprep.subr.mxu0 0.0
  %984 = vmatpush1.msra.mxu0 0.0
  %985 = vmatprep.subr.mxu0 0.0
  %986 = vmatpush1.msra.mxu0 0.0
  %987 = vmatprep.subr.mxu0 0.0
  %988 = vmatpush1.msra.mxu0 0.0
  %989 = vmatprep.subr.mxu0 0.0
  %990 = vmatpush1.msra.mxu0 0.0
  %991 = vmatprep.subr.mxu0 0.0
  %992 = vmatpush1.msra.mxu0 0.0
  %993 = vmatprep.subr.mxu0 0.0
  %994 = vmatpush1.msra.mxu0 0.0
  %995 = vmatprep.subr.mxu0 0.0
  %996 = vmatpush1.msra.mxu0 0.0
  %997 = vmatprep.subr.mxu0 0.0
  %998 = vmatpush1.msra.mxu0 0.0
  %999 = vmatprep.subr.mxu0 0.0
  %1000 = vmatpush1.msra.mxu0 0.0
  %1001 = vmatprep.subr.mxu0 0.0
  %1002 = vmatpush1.msra.mxu0 0.0
  %1003 = vmatprep.subr.mxu0 0.0
  %1004 = vmatpush1.msra.mxu0 0.0
  %1005 = vmatprep.subr.mxu0 0.0
  %1006 = vmatpush1.msra.mxu0 0.0
  %1007 = vmatprep.subr.mxu0 0.0
  %1008 = vmatpush1.msra.mxu0 0.0
  %1009 = vmatprep.subr.mxu0 0.0
  %1010 = vmatpush1.msra.mxu0 0.0
  %1011 = vmatprep.subr.mxu0 0.0
  %1012 = vmatpush1.msra.mxu0 %v979
  %1013 = vmatprep.subr.mxu0 0.0
  %1014 = vmatpush2.msra.mxu0 0.0
  %1015 = vmatprep.subr.mxu0 0.0
  %1016 = vmatpush2.msra.mxu0 0.0
  %1017 = vmatprep.subr.mxu0 0.0
  %1018 = vmatpush2.msra.mxu0 0.0
  %1019 = vmatprep.subr.mxu0 0.0
  %1020 = vmatpush2.msra.mxu0 0.0
  %1021 = vmatprep.subr.mxu0 0.0
  %1022 = vmatpush2.msra.mxu0 0.0
  %1023 = vmatprep.subr.mxu0 0.0
  %1024 = vmatpush2.msra.mxu0 0.0
  %1025 = vmatprep.subr.mxu0 0.0
  %1026 = vmatpush2.msra.mxu0 0.0
  %1027 = vmatprep.subr.mxu0 0.0
  %1028 = vmatpush2.msra.mxu0 0.0
  %1029 = vmatprep.subr.mxu0 0.0
  %1030 = vmatpush2.msra.mxu0 0.0
  %1031 = vmatprep.subr.mxu0 0.0
  %1032 = vmatpush2.msra.mxu0 0.0
  %1033 = vmatprep.subr.mxu0 0.0
  %1034 = vmatpush2.msra.mxu0 0.0
  %1035 = vmatprep.subr.mxu0 0.0
  %1036 = vmatpush2.msra.mxu0 0.0
  %1037 = vmatprep.subr.mxu0 0.0
  %1038 = vmatpush2.msra.mxu0 0.0
  %1039 = vmatprep.subr.mxu0 0.0
  %1040 = vmatpush2.msra.mxu0 0.0
  %1041 = vmatprep.subr.mxu0 0.0
  %1042 = vmatpush2.msra.mxu0 0.0
  %1043 = vmatprep.subr.mxu0 0.0
  %1044 = vmatpush2.msra.mxu0 0.0
  %1045 = vmatprep.mubr.f32.mxu0 0.0
  %1046 = vmatmul.mubr.f32.gmra.mxu0 %v931
  %v1047 = vpop.f32.mrf.mxu0
  %v1048 = vadd.f32 0.0, %v1047
  %v1049 = vpop.f32.mrf.mxu0
  %1050 = vmatprep.mubr.f32.mxu0 0.0
  %1051 = vmatmul.mubr.f32.gmra.mxu0 %v934
  %v1052 = vpop.f32.mrf.mxu0
  %v1053 = vadd.f32 0.0, %v1052
  %v1054 = vpop.f32.mrf.mxu0
  %1055 = vmatprep.mubr.f32.mxu0 0.0
  %1056 = vmatmul.mubr.f32.gmra.mxu0 %v937
  %v1057 = vpop.f32.mrf.mxu0
  %v1058 = vadd.f32 0.0, %v1057
  %v1059 = vpop.f32.mrf.mxu0
  %1060 = vmatprep.mubr.f32.mxu0 0.0
  %1061 = vmatmul.mubr.f32.gmra.mxu0 %v940
  %v1062 = vpop.f32.mrf.mxu0
  %v1063 = vadd.f32 0.0, %v1062
  %v1064 = vpop.f32.mrf.mxu0
  %1065 = vmatprep.mubr.f32.mxu0 0.0
  %1066 = vmatmul.mubr.f32.gmra.mxu0 %v943
  %v1067 = vpop.f32.mrf.mxu0
  %v1068 = vadd.f32 0.0, %v1067
  %v1069 = vpop.f32.mrf.mxu0
  %1070 = vmatprep.mubr.f32.mxu0 0.0
  %1071 = vmatmul.mubr.f32.gmra.mxu0 %v946
  %v1072 = vpop.f32.mrf.mxu0
  %v1073 = vadd.f32 0.0, %v1072
  %v1074 = vpop.f32.mrf.mxu0
  %1075 = vmatprep.mubr.f32.mxu0 0.0
  %1076 = vmatmul.mubr.f32.gmra.mxu0 %v949
  %v1077 = vpop.f32.mrf.mxu0
  %v1078 = vadd.f32 0.0, %v1077
  %v1079 = vpop.f32.mrf.mxu0
  %1080 = vmatprep.mubr.f32.mxu0 0.0
  %1081 = vmatmul.mubr.f32.gmra.mxu0 %v952
  %v1082 = vpop.f32.mrf.mxu0
  %v1083 = vadd.f32 0.0, %v1082
  %v1084 = vpop.f32.mrf.mxu0
  %1085 = vmatprep.mubr.f32.mxu0 0.0
  %1086 = vmatmul.mubr.f32.gmra.mxu0 %v955
  %v1087 = vpop.f32.mrf.mxu0
  %v1088 = vadd.f32 0.0, %v1087
  %v1089 = vpop.f32.mrf.mxu0
  %1090 = vmatprep.mubr.f32.mxu0 0.0
  %1091 = vmatmul.mubr.f32.gmra.mxu0 %v958
  %v1092 = vpop.f32.mrf.mxu0
  %v1093 = vadd.f32 0.0, %v1092
  %v1094 = vpop.f32.mrf.mxu0
  %1095 = vmatprep.mubr.f32.mxu0 0.0
  %1096 = vmatmul.mubr.f32.gmra.mxu0 %v961
  %v1097 = vpop.f32.mrf.mxu0
  %v1098 = vadd.f32 0.0, %v1097
  %v1099 = vpop.f32.mrf.mxu0
  %1100 = vmatprep.mubr.f32.mxu0 0.0
  %1101 = vmatmul.mubr.f32.gmra.mxu0 %v964
  %v1102 = vpop.f32.mrf.mxu0
  %v1103 = vadd.f32 0.0, %v1102
  %v1104 = vpop.f32.mrf.mxu0
  %1105 = vmatprep.mubr.f32.mxu0 0.0
  %1106 = vmatmul.mubr.f32.gmra.mxu0 %v967
  %v1107 = vpop.f32.mrf.mxu0
  %v1108 = vadd.f32 0.0, %v1107
  %v1109 = vpop.f32.mrf.mxu0
  %1110 = vmatprep.mubr.f32.mxu0 0.0
  %1111 = vmatmul.mubr.f32.gmra.mxu0 %v970
  %v1112 = vpop.f32.mrf.mxu0
  %v1113 = vadd.f32 0.0, %v1112
  %v1114 = vpop.f32.mrf.mxu0
  %1115 = vmatprep.mubr.f32.mxu0 0.0
  %1116 = vmatmul.mubr.f32.gmra.mxu0 %v973
  %v1117 = vpop.f32.mrf.mxu0
  %v1118 = vadd.f32 0.0, %v1117
  %v1119 = vpop.f32.mrf.mxu0
  %1120 = vmatprep.mubr.f32.mxu0 0.0
  %1121 = vmatmul.mubr.f32.gmra.mxu0 %v976
  %v1122 = vpop.f32.mrf.mxu0
  %v1123 = vadd.f32 0.0, %v1122
  %v1124 = vpop.f32.mrf.mxu0
  %1125 = vdwg.mxu0
  %v1126 = vadd.f32 %v895, %v1048
  %v1127 = vadd.f32 %v896, %v1053
  %v1128 = vadd.f32 %v897, %v1058
  %v1129 = vadd.f32 %v898, %v1063
  %v1130 = vadd.f32 %v899, %v1068
  %v1131 = vadd.f32 %v900, %v1073
  %v1132 = vadd.f32 %v901, %v1078
  %v1133 = vadd.f32 %v902, %v1083
  %v1134 = vadd.f32 %v903, %v1088
  %v1135 = vadd.f32 %v904, %v1093
  %v1136 = vadd.f32 %v905, %v1098
  %v1137 = vadd.f32 %v906, %v1103
  %v1138 = vadd.f32 %v907, %v1108
  %v1139 = vadd.f32 %v908, %v1113
  %v1140 = vadd.f32 %v909, %v1118
  %v1141 = vadd.f32 %v910, %v1123
  %v1142 = vld [vmem:[%s680 + $0x1] sm:$0xff]
  %v1143 = vld [vmem:[%s680 + $0x11] sm:$0xff]
  %v1144 = vld [vmem:[%s680 + $0x21] sm:$0xff]
  %v1145 = vld [vmem:[%s680 + $0x31] sm:$0xff]
  %v1146 = vld [vmem:[%s680 + $0x41] sm:$0xff]
  %v1147 = vld [vmem:[%s680 + $0x51] sm:$0xff]
  %v1148 = vld [vmem:[%s680 + $0x61] sm:$0xff]
  %v1149 = vld [vmem:[%s680 + $0x71] sm:$0xff]
  %v1150 = vld [vmem:[%s680 + $0x91] sm:$0xff]
  %v1151 = vld [vmem:[%s680 + $0xa1] sm:$0xff]
  %v1152 = vld [vmem:[%s680 + $0xb1] sm:$0xff]
  %v1153 = vld [vmem:[%s680 + $0xc1] sm:$0xff]
  %v1154 = vld [vmem:[%s680 + $0xd1] sm:$0xff]
  %v1155 = vld [vmem:[%s680 + $0xe1] sm:$0xff]
  %v1156 = vld [vmem:[%s680 + $0xf1] sm:$0xff]
  %v1157 = vld [vmem:[%s680 + $0x101] sm:$0xff]
  %s1158 = scalar_lea.vmem %s1, 20
  %v1159 = vld [vmem:[%s1158] sm:$0x7]
  %v1161 = vsel %vm56, %v1142, 0
  %v1164 = vsel %vm56, %v1143, 0
  %v1167 = vsel %vm56, %v1144, 0
  %v1170 = vsel %vm56, %v1145, 0
  %v1173 = vsel %vm56, %v1146, 0
  %v1176 = vsel %vm56, %v1147, 0
  %v1179 = vsel %vm56, %v1148, 0
  %v1182 = vsel %vm56, %v1149, 0
  %v1185 = vsel %vm56, %v1150, 0
  %v1188 = vsel %vm56, %v1151, 0
  %v1191 = vsel %vm56, %v1152, 0
  %v1194 = vsel %vm56, %v1153, 0
  %v1197 = vsel %vm56, %v1154, 0
  %v1200 = vsel %vm56, %v1155, 0
  %v1203 = vsel %vm56, %v1156, 0
  %v1206 = vsel %vm56, %v1157, 0
  %v1209 = vsel %vm105, %v1159, 0
  %1211 = vmatprep.subr.mxu0 0.0
  %1212 = vmatpush1.msra.mxu0 0.0
  %1213 = vmatprep.subr.mxu0 0.0
  %1214 = vmatpush1.msra.mxu0 0.0
  %1215 = vmatprep.subr.mxu0 0.0
  %1216 = vmatpush1.msra.mxu0 0.0
  %1217 = vmatprep.subr.mxu0 0.0
  %1218 = vmatpush1.msra.mxu0 0.0
  %1219 = vmatprep.subr.mxu0 0.0
  %1220 = vmatpush1.msra.mxu0 0.0
  %1221 = vmatprep.subr.mxu0 0.0
  %1222 = vmatpush1.msra.mxu0 0.0
  %1223 = vmatprep.subr.mxu0 0.0
  %1224 = vmatpush1.msra.mxu0 0.0
  %1225 = vmatprep.subr.mxu0 0.0
  %1226 = vmatpush1.msra.mxu0 0.0
  %1227 = vmatprep.subr.mxu0 0.0
  %1228 = vmatpush1.msra.mxu0 0.0
  %1229 = vmatprep.subr.mxu0 0.0
  %1230 = vmatpush1.msra.mxu0 0.0
  %1231 = vmatprep.subr.mxu0 0.0
  %1232 = vmatpush1.msra.mxu0 0.0
  %1233 = vmatprep.subr.mxu0 0.0
  %1234 = vmatpush1.msra.mxu0 0.0
  %1235 = vmatprep.subr.mxu0 0.0
  %1236 = vmatpush1.msra.mxu0 0.0
  %1237 = vmatprep.subr.mxu0 0.0
  %1238 = vmatpush1.msra.mxu0 0.0
  %1239 = vmatprep.subr.mxu0 0.0
  %1240 = vmatpush1.msra.mxu0 0.0
  %1241 = vmatprep.subr.mxu0 0.0
  %1242 = vmatpush1.msra.mxu0 %v1209
  %1243 = vmatprep.subr.mxu0 0.0
  %1244 = vmatpush2.msra.mxu0 0.0
  %1245 = vmatprep.subr.mxu0 0.0
  %1246 = vmatpush2.msra.mxu0 0.0
  %1247 = vmatprep.subr.mxu0 0.0
  %1248 = vmatpush2.msra.mxu0 0.0
  %1249 = vmatprep.subr.mxu0 0.0
  %1250 = vmatpush2.msra.mxu0 0.0
  %1251 = vmatprep.subr.mxu0 0.0
  %1252 = vmatpush2.msra.mxu0 0.0
  %1253 = vmatprep.subr.mxu0 0.0
  %1254 = vmatpush2.msra.mxu0 0.0
  %1255 = vmatprep.subr.mxu0 0.0
  %1256 = vmatpush2.msra.mxu0 0.0
  %1257 = vmatprep.subr.mxu0 0.0
  %1258 = vmatpush2.msra.mxu0 0.0
  %1259 = vmatprep.subr.mxu0 0.0
  %1260 = vmatpush2.msra.mxu0 0.0
  %1261 = vmatprep.subr.mxu0 0.0
  %1262 = vmatpush2.msra.mxu0 0.0
  %1263 = vmatprep.subr.mxu0 0.0
  %1264 = vmatpush2.msra.mxu0 0.0
  %1265 = vmatprep.subr.mxu0 0.0
  %1266 = vmatpush2.msra.mxu0 0.0
  %1267 = vmatprep.subr.mxu0 0.0
  %1268 = vmatpush2.msra.mxu0 0.0
  %1269 = vmatprep.subr.mxu0 0.0
  %1270 = vmatpush2.msra.mxu0 0.0
  %1271 = vmatprep.subr.mxu0 0.0
  %1272 = vmatpush2.msra.mxu0 0.0
  %1273 = vmatprep.subr.mxu0 0.0
  %1274 = vmatpush2.msra.mxu0 0.0
  %1275 = vmatprep.mubr.f32.mxu0 0.0
  %1276 = vmatmul.mubr.f32.gmra.mxu0 %v1161
  %v1277 = vpop.f32.mrf.mxu0
  %v1278 = vadd.f32 0.0, %v1277
  %v1279 = vpop.f32.mrf.mxu0
  %1280 = vmatprep.mubr.f32.mxu0 0.0
  %1281 = vmatmul.mubr.f32.gmra.mxu0 %v1164
  %v1282 = vpop.f32.mrf.mxu0
  %v1283 = vadd.f32 0.0, %v1282
  %v1284 = vpop.f32.mrf.mxu0
  %1285 = vmatprep.mubr.f32.mxu0 0.0
  %1286 = vmatmul.mubr.f32.gmra.mxu0 %v1167
  %v1287 = vpop.f32.mrf.mxu0
  %v1288 = vadd.f32 0.0, %v1287
  %v1289 = vpop.f32.mrf.mxu0
  %1290 = vmatprep.mubr.f32.mxu0 0.0
  %1291 = vmatmul.mubr.f32.gmra.mxu0 %v1170
  %v1292 = vpop.f32.mrf.mxu0
  %v1293 = vadd.f32 0.0, %v1292
  %v1294 = vpop.f32.mrf.mxu0
  %1295 = vmatprep.mubr.f32.mxu0 0.0
  %1296 = vmatmul.mubr.f32.gmra.mxu0 %v1173
  %v1297 = vpop.f32.mrf.mxu0
  %v1298 = vadd.f32 0.0, %v1297
  %v1299 = vpop.f32.mrf.mxu0
  %1300 = vmatprep.mubr.f32.mxu0 0.0
  %1301 = vmatmul.mubr.f32.gmra.mxu0 %v1176
  %v1302 = vpop.f32.mrf.mxu0
  %v1303 = vadd.f32 0.0, %v1302
  %v1304 = vpop.f32.mrf.mxu0
  %1305 = vmatprep.mubr.f32.mxu0 0.0
  %1306 = vmatmul.mubr.f32.gmra.mxu0 %v1179
  %v1307 = vpop.f32.mrf.mxu0
  %v1308 = vadd.f32 0.0, %v1307
  %v1309 = vpop.f32.mrf.mxu0
  %1310 = vmatprep.mubr.f32.mxu0 0.0
  %1311 = vmatmul.mubr.f32.gmra.mxu0 %v1182
  %v1312 = vpop.f32.mrf.mxu0
  %v1313 = vadd.f32 0.0, %v1312
  %v1314 = vpop.f32.mrf.mxu0
  %1315 = vmatprep.mubr.f32.mxu0 0.0
  %1316 = vmatmul.mubr.f32.gmra.mxu0 %v1185
  %v1317 = vpop.f32.mrf.mxu0
  %v1318 = vadd.f32 0.0, %v1317
  %v1319 = vpop.f32.mrf.mxu0
  %1320 = vmatprep.mubr.f32.mxu0 0.0
  %1321 = vmatmul.mubr.f32.gmra.mxu0 %v1188
  %v1322 = vpop.f32.mrf.mxu0
  %v1323 = vadd.f32 0.0, %v1322
  %v1324 = vpop.f32.mrf.mxu0
  %1325 = vmatprep.mubr.f32.mxu0 0.0
  %1326 = vmatmul.mubr.f32.gmra.mxu0 %v1191
  %v1327 = vpop.f32.mrf.mxu0
  %v1328 = vadd.f32 0.0, %v1327
  %v1329 = vpop.f32.mrf.mxu0
  %1330 = vmatprep.mubr.f32.mxu0 0.0
  %1331 = vmatmul.mubr.f32.gmra.mxu0 %v1194
  %v1332 = vpop.f32.mrf.mxu0
  %v1333 = vadd.f32 0.0, %v1332
  %v1334 = vpop.f32.mrf.mxu0
  %1335 = vmatprep.mubr.f32.mxu0 0.0
  %1336 = vmatmul.mubr.f32.gmra.mxu0 %v1197
  %v1337 = vpop.f32.mrf.mxu0
  %v1338 = vadd.f32 0.0, %v1337
  %v1339 = vpop.f32.mrf.mxu0
  %1340 = vmatprep.mubr.f32.mxu0 0.0
  %1341 = vmatmul.mubr.f32.gmra.mxu0 %v1200
  %v1342 = vpop.f32.mrf.mxu0
  %v1343 = vadd.f32 0.0, %v1342
  %v1344 = vpop.f32.mrf.mxu0
  %1345 = vmatprep.mubr.f32.mxu0 0.0
  %1346 = vmatmul.mubr.f32.gmra.mxu0 %v1203
  %v1347 = vpop.f32.mrf.mxu0
  %v1348 = vadd.f32 0.0, %v1347
  %v1349 = vpop.f32.mrf.mxu0
  %1350 = vmatprep.mubr.f32.mxu0 0.0
  %1351 = vmatmul.mubr.f32.gmra.mxu0 %v1206
  %v1352 = vpop.f32.mrf.mxu0
  %v1353 = vadd.f32 0.0, %v1352
  %v1354 = vpop.f32.mrf.mxu0
  %1355 = vdwg.mxu0
  %v1356 = vadd.f32 %v1126, %v1278
  %v1357 = vadd.f32 %v1127, %v1283
  %v1358 = vadd.f32 %v1128, %v1288
  %v1359 = vadd.f32 %v1129, %v1293
  %v1360 = vadd.f32 %v1130, %v1298
  %v1361 = vadd.f32 %v1131, %v1303
  %v1362 = vadd.f32 %v1132, %v1308
  %v1363 = vadd.f32 %v1133, %v1313
  %v1364 = vadd.f32 %v1134, %v1318
  %v1365 = vadd.f32 %v1135, %v1323
  %v1366 = vadd.f32 %v1136, %v1328
  %v1367 = vadd.f32 %v1137, %v1333
  %v1368 = vadd.f32 %v1138, %v1338
  %v1369 = vadd.f32 %v1139, %v1343
  %v1370 = vadd.f32 %v1140, %v1348
  %v1371 = vadd.f32 %v1141, %v1353
  %s1372 = scalar_lea.vmem %s0, 16
  %v1373 = vld [vmem:[%s1372] sm:$0xff]
  %v1374 = vld [vmem:[%s1372 + $0x10] sm:$0xff]
  %v1375 = vld [vmem:[%s1372 + $0x20] sm:$0xff]
  %v1376 = vld [vmem:[%s1372 + $0x30] sm:$0xff]
  %v1377 = vld [vmem:[%s1372 + $0x40] sm:$0xff]
  %v1378 = vld [vmem:[%s1372 + $0x50] sm:$0xff]
  %v1379 = vld [vmem:[%s1372 + $0x60] sm:$0xff]
  %v1380 = vld [vmem:[%s1372 + $0x70] sm:$0xff]
  %v1381 = vld [vmem:[%s1372 + $0x90] sm:$0xff]
  %v1382 = vld [vmem:[%s1372 + $0xa0] sm:$0xff]
  %v1383 = vld [vmem:[%s1372 + $0xb0] sm:$0xff]
  %v1384 = vld [vmem:[%s1372 + $0xc0] sm:$0xff]
  %v1385 = vld [vmem:[%s1372 + $0xd0] sm:$0xff]
  %v1386 = vld [vmem:[%s1372 + $0xe0] sm:$0xff]
  %v1387 = vld [vmem:[%s1372 + $0xf0] sm:$0xff]
  %v1388 = vld [vmem:[%s1372 + $0x100] sm:$0xff]
  %s1389 = scalar_lea.vmem %s1, 24
  %v1390 = vld [vmem:[%s1389] sm:$0x7]
  %v1392 = vsel %vm56, %v1373, 0
  %v1395 = vsel %vm56, %v1374, 0
  %v1398 = vsel %vm56, %v1375, 0
  %v1401 = vsel %vm56, %v1376, 0
  %v1404 = vsel %vm56, %v1377, 0
  %v1407 = vsel %vm56, %v1378, 0
  %v1410 = vsel %vm56, %v1379, 0
  %v1413 = vsel %vm56, %v1380, 0
  %v1416 = vsel %vm56, %v1381, 0
  %v1419 = vsel %vm56, %v1382, 0
  %v1422 = vsel %vm56, %v1383, 0
  %v1425 = vsel %vm56, %v1384, 0
  %v1428 = vsel %vm56, %v1385, 0
  %v1431 = vsel %vm56, %v1386, 0
  %v1434 = vsel %vm56, %v1387, 0
  %v1437 = vsel %vm56, %v1388, 0
  %v1440 = vsel %vm105, %v1390, 0
  %1442 = vmatprep.subr.mxu0 0.0
  %1443 = vmatpush1.msra.mxu0 0.0
  %1444 = vmatprep.subr.mxu0 0.0
  %1445 = vmatpush1.msra.mxu0 0.0
  %1446 = vmatprep.subr.mxu0 0.0
  %1447 = vmatpush1.msra.mxu0 0.0
  %1448 = vmatprep.subr.mxu0 0.0
  %1449 = vmatpush1.msra.mxu0 0.0
  %1450 = vmatprep.subr.mxu0 0.0
  %1451 = vmatpush1.msra.mxu0 0.0
  %1452 = vmatprep.subr.mxu0 0.0
  %1453 = vmatpush1.msra.mxu0 0.0
  %1454 = vmatprep.subr.mxu0 0.0
  %1455 = vmatpush1.msra.mxu0 0.0
  %1456 = vmatprep.subr.mxu0 0.0
  %1457 = vmatpush1.msra.mxu0 0.0
  %1458 = vmatprep.subr.mxu0 0.0
  %1459 = vmatpush1.msra.mxu0 0.0
  %1460 = vmatprep.subr.mxu0 0.0
  %1461 = vmatpush1.msra.mxu0 0.0
  %1462 = vmatprep.subr.mxu0 0.0
  %1463 = vmatpush1.msra.mxu0 0.0
  %1464 = vmatprep.subr.mxu0 0.0
  %1465 = vmatpush1.msra.mxu0 0.0
  %1466 = vmatprep.subr.mxu0 0.0
  %1467 = vmatpush1.msra.mxu0 0.0
  %1468 = vmatprep.subr.mxu0 0.0
  %1469 = vmatpush1.msra.mxu0 0.0
  %1470 = vmatprep.subr.mxu0 0.0
  %1471 = vmatpush1.msra.mxu0 0.0
  %1472 = vmatprep.subr.mxu0 0.0
  %1473 = vmatpush1.msra.mxu0 %v1440
  %1474 = vmatprep.subr.mxu0 0.0
  %1475 = vmatpush2.msra.mxu0 0.0
  %1476 = vmatprep.subr.mxu0 0.0
  %1477 = vmatpush2.msra.mxu0 0.0
  %1478 = vmatprep.subr.mxu0 0.0
  %1479 = vmatpush2.msra.mxu0 0.0
  %1480 = vmatprep.subr.mxu0 0.0
  %1481 = vmatpush2.msra.mxu0 0.0
  %1482 = vmatprep.subr.mxu0 0.0
  %1483 = vmatpush2.msra.mxu0 0.0
  %1484 = vmatprep.subr.mxu0 0.0
  %1485 = vmatpush2.msra.mxu0 0.0
  %1486 = vmatprep.subr.mxu0 0.0
  %1487 = vmatpush2.msra.mxu0 0.0
  %1488 = vmatprep.subr.mxu0 0.0
  %1489 = vmatpush2.msra.mxu0 0.0
  %1490 = vmatprep.subr.mxu0 0.0
  %1491 = vmatpush2.msra.mxu0 0.0
  %1492 = vmatprep.subr.mxu0 0.0
  %1493 = vmatpush2.msra.mxu0 0.0
  %1494 = vmatprep.subr.mxu0 0.0
  %1495 = vmatpush2.msra.mxu0 0.0
  %1496 = vmatprep.subr.mxu0 0.0
  %1497 = vmatpush2.msra.mxu0 0.0
  %1498 = vmatprep.subr.mxu0 0.0
  %1499 = vmatpush2.msra.mxu0 0.0
  %1500 = vmatprep.subr.mxu0 0.0
  %1501 = vmatpush2.msra.mxu0 0.0
  %1502 = vmatprep.subr.mxu0 0.0
  %1503 = vmatpush2.msra.mxu0 0.0
  %1504 = vmatprep.subr.mxu0 0.0
  %1505 = vmatpush2.msra.mxu0 0.0
  %1506 = vmatprep.mubr.f32.mxu0 0.0
  %1507 = vmatmul.mubr.f32.gmra.mxu0 %v1392
  %v1508 = vpop.f32.mrf.mxu0
  %v1509 = vadd.f32 0.0, %v1508
  %v1510 = vpop.f32.mrf.mxu0
  %1511 = vmatprep.mubr.f32.mxu0 0.0
  %1512 = vmatmul.mubr.f32.gmra.mxu0 %v1395
  %v1513 = vpop.f32.mrf.mxu0
  %v1514 = vadd.f32 0.0, %v1513
  %v1515 = vpop.f32.mrf.mxu0
  %1516 = vmatprep.mubr.f32.mxu0 0.0
  %1517 = vmatmul.mubr.f32.gmra.mxu0 %v1398
  %v1518 = vpop.f32.mrf.mxu0
  %v1519 = vadd.f32 0.0, %v1518
  %v1520 = vpop.f32.mrf.mxu0
  %1521 = vmatprep.mubr.f32.mxu0 0.0
  %1522 = vmatmul.mubr.f32.gmra.mxu0 %v1401
  %v1523 = vpop.f32.mrf.mxu0
  %v1524 = vadd.f32 0.0, %v1523
  %v1525 = vpop.f32.mrf.mxu0
  %1526 = vmatprep.mubr.f32.mxu0 0.0
  %1527 = vmatmul.mubr.f32.gmra.mxu0 %v1404
  %v1528 = vpop.f32.mrf.mxu0
  %v1529 = vadd.f32 0.0, %v1528
  %v1530 = vpop.f32.mrf.mxu0
  %1531 = vmatprep.mubr.f32.mxu0 0.0
  %1532 = vmatmul.mubr.f32.gmra.mxu0 %v1407
  %v1533 = vpop.f32.mrf.mxu0
  %v1534 = vadd.f32 0.0, %v1533
  %v1535 = vpop.f32.mrf.mxu0
  %1536 = vmatprep.mubr.f32.mxu0 0.0
  %1537 = vmatmul.mubr.f32.gmra.mxu0 %v1410
  %v1538 = vpop.f32.mrf.mxu0
  %v1539 = vadd.f32 0.0, %v1538
  %v1540 = vpop.f32.mrf.mxu0
  %1541 = vmatprep.mubr.f32.mxu0 0.0
  %1542 = vmatmul.mubr.f32.gmra.mxu0 %v1413
  %v1543 = vpop.f32.mrf.mxu0
  %v1544 = vadd.f32 0.0, %v1543
  %v1545 = vpop.f32.mrf.mxu0
  %1546 = vmatprep.mubr.f32.mxu0 0.0
  %1547 = vmatmul.mubr.f32.gmra.mxu0 %v1416
  %v1548 = vpop.f32.mrf.mxu0
  %v1549 = vadd.f32 0.0, %v1548
  %v1550 = vpop.f32.mrf.mxu0
  %1551 = vmatprep.mubr.f32.mxu0 0.0
  %1552 = vmatmul.mubr.f32.gmra.mxu0 %v1419
  %v1553 = vpop.f32.mrf.mxu0
  %v1554 = vadd.f32 0.0, %v1553
  %v1555 = vpop.f32.mrf.mxu0
  %1556 = vmatprep.mubr.f32.mxu0 0.0
  %1557 = vmatmul.mubr.f32.gmra.mxu0 %v1422
  %v1558 = vpop.f32.mrf.mxu0
  %v1559 = vadd.f32 0.0, %v1558
  %v1560 = vpop.f32.mrf.mxu0
  %1561 = vmatprep.mubr.f32.mxu0 0.0
  %1562 = vmatmul.mubr.f32.gmra.mxu0 %v1425
  %v1563 = vpop.f32.mrf.mxu0
  %v1564 = vadd.f32 0.0, %v1563
  %v1565 = vpop.f32.mrf.mxu0
  %1566 = vmatprep.mubr.f32.mxu0 0.0
  %1567 = vmatmul.mubr.f32.gmra.mxu0 %v1428
  %v1568 = vpop.f32.mrf.mxu0
  %v1569 = vadd.f32 0.0, %v1568
  %v1570 = vpop.f32.mrf.mxu0
  %1571 = vmatprep.mubr.f32.mxu0 0.0
  %1572 = vmatmul.mubr.f32.gmra.mxu0 %v1431
  %v1573 = vpop.f32.mrf.mxu0
  %v1574 = vadd.f32 0.0, %v1573
  %v1575 = vpop.f32.mrf.mxu0
  %1576 = vmatprep.mubr.f32.mxu0 0.0
  %1577 = vmatmul.mubr.f32.gmra.mxu0 %v1434
  %v1578 = vpop.f32.mrf.mxu0
  %v1579 = vadd.f32 0.0, %v1578
  %v1580 = vpop.f32.mrf.mxu0
  %1581 = vmatprep.mubr.f32.mxu0 0.0
  %1582 = vmatmul.mubr.f32.gmra.mxu0 %v1437
  %v1583 = vpop.f32.mrf.mxu0
  %v1584 = vadd.f32 0.0, %v1583
  %v1585 = vpop.f32.mrf.mxu0
  %1586 = vdwg.mxu0
  %v1587 = vadd.f32 %v1356, %v1509
  %v1588 = vadd.f32 %v1357, %v1514
  %v1589 = vadd.f32 %v1358, %v1519
  %v1590 = vadd.f32 %v1359, %v1524
  %v1591 = vadd.f32 %v1360, %v1529
  %v1592 = vadd.f32 %v1361, %v1534
  %v1593 = vadd.f32 %v1362, %v1539
  %v1594 = vadd.f32 %v1363, %v1544
  %v1595 = vadd.f32 %v1364, %v1549
  %v1596 = vadd.f32 %v1365, %v1554
  %v1597 = vadd.f32 %v1366, %v1559
  %v1598 = vadd.f32 %v1367, %v1564
  %v1599 = vadd.f32 %v1368, %v1569
  %v1600 = vadd.f32 %v1369, %v1574
  %v1601 = vadd.f32 %v1370, %v1579
  %v1602 = vadd.f32 %v1371, %v1584
  %s1603 = scalar_lea.vmem %s0, 304
  %v1604 = vld [vmem:[%s1603] sm:$0xff]
  %v1605 = vld [vmem:[%s1603 + $0x10] sm:$0xff]
  %v1606 = vld [vmem:[%s1603 + $0x20] sm:$0xff]
  %v1607 = vld [vmem:[%s1603 + $0x30] sm:$0xff]
  %v1608 = vld [vmem:[%s1603 + $0x40] sm:$0xff]
  %v1609 = vld [vmem:[%s1603 + $0x50] sm:$0xff]
  %v1610 = vld [vmem:[%s1603 + $0x60] sm:$0xff]
  %v1611 = vld [vmem:[%s1603 + $0x70] sm:$0xff]
  %v1612 = vld [vmem:[%s1603 + $0x90] sm:$0xff]
  %v1613 = vld [vmem:[%s1603 + $0xa0] sm:$0xff]
  %v1614 = vld [vmem:[%s1603 + $0xb0] sm:$0xff]
  %v1615 = vld [vmem:[%s1603 + $0xc0] sm:$0xff]
  %v1616 = vld [vmem:[%s1603 + $0xd0] sm:$0xff]
  %v1617 = vld [vmem:[%s1603 + $0xe0] sm:$0xff]
  %v1618 = vld [vmem:[%s1603 + $0xf0] sm:$0xff]
  %v1619 = vld [vmem:[%s1603 + $0x100] sm:$0xff]
  %s1620 = scalar_lea.vmem %s1, 28
  %v1621 = vld [vmem:[%s1620] sm:$0x7]
  %v1623 = vsel %vm56, %v1604, 0
  %v1626 = vsel %vm56, %v1605, 0
  %v1629 = vsel %vm56, %v1606, 0
  %v1632 = vsel %vm56, %v1607, 0
  %v1635 = vsel %vm56, %v1608, 0
  %v1638 = vsel %vm56, %v1609, 0
  %v1641 = vsel %vm56, %v1610, 0
  %v1644 = vsel %vm56, %v1611, 0
  %v1647 = vsel %vm56, %v1612, 0
  %v1650 = vsel %vm56, %v1613, 0
  %v1653 = vsel %vm56, %v1614, 0
  %v1656 = vsel %vm56, %v1615, 0
  %v1659 = vsel %vm56, %v1616, 0
  %v1662 = vsel %vm56, %v1617, 0
  %v1665 = vsel %vm56, %v1618, 0
  %v1668 = vsel %vm56, %v1619, 0
  %v1671 = vsel %vm105, %v1621, 0
  %1673 = vmatprep.subr.mxu0 0.0
  %1674 = vmatpush1.msra.mxu0 0.0
  %1675 = vmatprep.subr.mxu0 0.0
  %1676 = vmatpush1.msra.mxu0 0.0
  %1677 = vmatprep.subr.mxu0 0.0
  %1678 = vmatpush1.msra.mxu0 0.0
  %1679 = vmatprep.subr.mxu0 0.0
  %1680 = vmatpush1.msra.mxu0 0.0
  %1681 = vmatprep.subr.mxu0 0.0
  %1682 = vmatpush1.msra.mxu0 0.0
  %1683 = vmatprep.subr.mxu0 0.0
  %1684 = vmatpush1.msra.mxu0 0.0
  %1685 = vmatprep.subr.mxu0 0.0
  %1686 = vmatpush1.msra.mxu0 0.0
  %1687 = vmatprep.subr.mxu0 0.0
  %1688 = vmatpush1.msra.mxu0 0.0
  %1689 = vmatprep.subr.mxu0 0.0
  %1690 = vmatpush1.msra.mxu0 0.0
  %1691 = vmatprep.subr.mxu0 0.0
  %1692 = vmatpush1.msra.mxu0 0.0
  %1693 = vmatprep.subr.mxu0 0.0
  %1694 = vmatpush1.msra.mxu0 0.0
  %1695 = vmatprep.subr.mxu0 0.0
  %1696 = vmatpush1.msra.mxu0 0.0
  %1697 = vmatprep.subr.mxu0 0.0
  %1698 = vmatpush1.msra.mxu0 0.0
  %1699 = vmatprep.subr.mxu0 0.0
  %1700 = vmatpush1.msra.mxu0 0.0
  %1701 = vmatprep.subr.mxu0 0.0
  %1702 = vmatpush1.msra.mxu0 0.0
  %1703 = vmatprep.subr.mxu0 0.0
  %1704 = vmatpush1.msra.mxu0 %v1671
  %1705 = vmatprep.subr.mxu0 0.0
  %1706 = vmatpush2.msra.mxu0 0.0
  %1707 = vmatprep.subr.mxu0 0.0
  %1708 = vmatpush2.msra.mxu0 0.0
  %1709 = vmatprep.subr.mxu0 0.0
  %1710 = vmatpush2.msra.mxu0 0.0
  %1711 = vmatprep.subr.mxu0 0.0
  %1712 = vmatpush2.msra.mxu0 0.0
  %1713 = vmatprep.subr.mxu0 0.0
  %1714 = vmatpush2.msra.mxu0 0.0
  %1715 = vmatprep.subr.mxu0 0.0
  %1716 = vmatpush2.msra.mxu0 0.0
  %1717 = vmatprep.subr.mxu0 0.0
  %1718 = vmatpush2.msra.mxu0 0.0
  %1719 = vmatprep.subr.mxu0 0.0
  %1720 = vmatpush2.msra.mxu0 0.0
  %1721 = vmatprep.subr.mxu0 0.0
  %1722 = vmatpush2.msra.mxu0 0.0
  %1723 = vmatprep.subr.mxu0 0.0
  %1724 = vmatpush2.msra.mxu0 0.0
  %1725 = vmatprep.subr.mxu0 0.0
  %1726 = vmatpush2.msra.mxu0 0.0
  %1727 = vmatprep.subr.mxu0 0.0
  %1728 = vmatpush2.msra.mxu0 0.0
  %1729 = vmatprep.subr.mxu0 0.0
  %1730 = vmatpush2.msra.mxu0 0.0
  %1731 = vmatprep.subr.mxu0 0.0
  %1732 = vmatpush2.msra.mxu0 0.0
  %1733 = vmatprep.subr.mxu0 0.0
  %1734 = vmatpush2.msra.mxu0 0.0
  %1735 = vmatprep.subr.mxu0 0.0
  %1736 = vmatpush2.msra.mxu0 0.0
  %1737 = vmatprep.mubr.f32.mxu0 0.0
  %1738 = vmatmul.mubr.f32.gmra.mxu0 %v1623
  %v1739 = vpop.f32.mrf.mxu0
  %v1740 = vadd.f32 0.0, %v1739
  %v1741 = vpop.f32.mrf.mxu0
  %1742 = vmatprep.mubr.f32.mxu0 0.0
  %1743 = vmatmul.mubr.f32.gmra.mxu0 %v1626
  %v1744 = vpop.f32.mrf.mxu0
  %v1745 = vadd.f32 0.0, %v1744
  %v1746 = vpop.f32.mrf.mxu0
  %1747 = vmatprep.mubr.f32.mxu0 0.0
  %1748 = vmatmul.mubr.f32.gmra.mxu0 %v1629
  %v1749 = vpop.f32.mrf.mxu0
  %v1750 = vadd.f32 0.0, %v1749
  %v1751 = vpop.f32.mrf.mxu0
  %1752 = vmatprep.mubr.f32.mxu0 0.0
  %1753 = vmatmul.mubr.f32.gmra.mxu0 %v1632
  %v1754 = vpop.f32.mrf.mxu0
  %v1755 = vadd.f32 0.0, %v1754
  %v1756 = vpop.f32.mrf.mxu0
  %1757 = vmatprep.mubr.f32.mxu0 0.0
  %1758 = vmatmul.mubr.f32.gmra.mxu0 %v1635
  %v1759 = vpop.f32.mrf.mxu0
  %v1760 = vadd.f32 0.0, %v1759
  %v1761 = vpop.f32.mrf.mxu0
  %1762 = vmatprep.mubr.f32.mxu0 0.0
  %1763 = vmatmul.mubr.f32.gmra.mxu0 %v1638
  %v1764 = vpop.f32.mrf.mxu0
  %v1765 = vadd.f32 0.0, %v1764
  %v1766 = vpop.f32.mrf.mxu0
  %1767 = vmatprep.mubr.f32.mxu0 0.0
  %1768 = vmatmul.mubr.f32.gmra.mxu0 %v1641
  %v1769 = vpop.f32.mrf.mxu0
  %v1770 = vadd.f32 0.0, %v1769
  %v1771 = vpop.f32.mrf.mxu0
  %1772 = vmatprep.mubr.f32.mxu0 0.0
  %1773 = vmatmul.mubr.f32.gmra.mxu0 %v1644
  %v1774 = vpop.f32.mrf.mxu0
  %v1775 = vadd.f32 0.0, %v1774
  %v1776 = vpop.f32.mrf.mxu0
  %1777 = vmatprep.mubr.f32.mxu0 0.0
  %1778 = vmatmul.mubr.f32.gmra.mxu0 %v1647
  %v1779 = vpop.f32.mrf.mxu0
  %v1780 = vadd.f32 0.0, %v1779
  %v1781 = vpop.f32.mrf.mxu0
  %1782 = vmatprep.mubr.f32.mxu0 0.0
  %1783 = vmatmul.mubr.f32.gmra.mxu0 %v1650
  %v1784 = vpop.f32.mrf.mxu0
  %v1785 = vadd.f32 0.0, %v1784
  %v1786 = vpop.f32.mrf.mxu0
  %1787 = vmatprep.mubr.f32.mxu0 0.0
  %1788 = vmatmul.mubr.f32.gmra.mxu0 %v1653
  %v1789 = vpop.f32.mrf.mxu0
  %v1790 = vadd.f32 0.0, %v1789
  %v1791 = vpop.f32.mrf.mxu0
  %1792 = vmatprep.mubr.f32.mxu0 0.0
  %1793 = vmatmul.mubr.f32.gmra.mxu0 %v1656
  %v1794 = vpop.f32.mrf.mxu0
  %v1795 = vadd.f32 0.0, %v1794
  %v1796 = vpop.f32.mrf.mxu0
  %1797 = vmatprep.mubr.f32.mxu0 0.0
  %1798 = vmatmul.mubr.f32.gmra.mxu0 %v1659
  %v1799 = vpop.f32.mrf.mxu0
  %v1800 = vadd.f32 0.0, %v1799
  %v1801 = vpop.f32.mrf.mxu0
  %1802 = vmatprep.mubr.f32.mxu0 0.0
  %1803 = vmatmul.mubr.f32.gmra.mxu0 %v1662
  %v1804 = vpop.f32.mrf.mxu0
  %v1805 = vadd.f32 0.0, %v1804
  %v1806 = vpop.f32.mrf.mxu0
  %1807 = vmatprep.mubr.f32.mxu0 0.0
  %1808 = vmatmul.mubr.f32.gmra.mxu0 %v1665
  %v1809 = vpop.f32.mrf.mxu0
  %v1810 = vadd.f32 0.0, %v1809
  %v1811 = vpop.f32.mrf.mxu0
  %1812 = vmatprep.mubr.f32.mxu0 0.0
  %1813 = vmatmul.mubr.f32.gmra.mxu0 %v1668
  %v1814 = vpop.f32.mrf.mxu0
  %v1815 = vadd.f32 0.0, %v1814
  %v1816 = vpop.f32.mrf.mxu0
  %1817 = vdwg.mxu0
  %v1818 = vadd.f32 %v1587, %v1740
  %v1819 = vadd.f32 %v1588, %v1745
  %v1820 = vadd.f32 %v1589, %v1750
  %v1821 = vadd.f32 %v1590, %v1755
  %v1822 = vadd.f32 %v1591, %v1760
  %v1823 = vadd.f32 %v1592, %v1765
  %v1824 = vadd.f32 %v1593, %v1770
  %v1825 = vadd.f32 %v1594, %v1775
  %v1826 = vadd.f32 %v1595, %v1780
  %v1827 = vadd.f32 %v1596, %v1785
  %v1828 = vadd.f32 %v1597, %v1790
  %v1829 = vadd.f32 %v1598, %v1795
  %v1830 = vadd.f32 %v1599, %v1800
  %v1831 = vadd.f32 %v1600, %v1805
  %v1832 = vadd.f32 %v1601, %v1810
  %v1833 = vadd.f32 %v1602, %v1815
  %v1834 = vld [vmem:[%s1372 + $0x1] sm:$0xff]
  %v1835 = vld [vmem:[%s1372 + $0x11] sm:$0xff]
  %v1836 = vld [vmem:[%s1372 + $0x21] sm:$0xff]
  %v1837 = vld [vmem:[%s1372 + $0x31] sm:$0xff]
  %v1838 = vld [vmem:[%s1372 + $0x41] sm:$0xff]
  %v1839 = vld [vmem:[%s1372 + $0x51] sm:$0xff]
  %v1840 = vld [vmem:[%s1372 + $0x61] sm:$0xff]
  %v1841 = vld [vmem:[%s1372 + $0x71] sm:$0xff]
  %v1842 = vld [vmem:[%s1372 + $0x91] sm:$0xff]
  %v1843 = vld [vmem:[%s1372 + $0xa1] sm:$0xff]
  %v1844 = vld [vmem:[%s1372 + $0xb1] sm:$0xff]
  %v1845 = vld [vmem:[%s1372 + $0xc1] sm:$0xff]
  %v1846 = vld [vmem:[%s1372 + $0xd1] sm:$0xff]
  %v1847 = vld [vmem:[%s1372 + $0xe1] sm:$0xff]
  %v1848 = vld [vmem:[%s1372 + $0xf1] sm:$0xff]
  %v1849 = vld [vmem:[%s1372 + $0x101] sm:$0xff]
  %s1850 = scalar_lea.vmem %s1, 32
  %v1851 = vld [vmem:[%s1850] sm:$0x7]
  %v1853 = vsel %vm56, %v1834, 0
  %v1856 = vsel %vm56, %v1835, 0
  %v1859 = vsel %vm56, %v1836, 0
  %v1862 = vsel %vm56, %v1837, 0
  %v1865 = vsel %vm56, %v1838, 0
  %v1868 = vsel %vm56, %v1839, 0
  %v1871 = vsel %vm56, %v1840, 0
  %v1874 = vsel %vm56, %v1841, 0
  %v1877 = vsel %vm56, %v1842, 0
  %v1880 = vsel %vm56, %v1843, 0
  %v1883 = vsel %vm56, %v1844, 0
  %v1886 = vsel %vm56, %v1845, 0
  %v1889 = vsel %vm56, %v1846, 0
  %v1892 = vsel %vm56, %v1847, 0
  %v1895 = vsel %vm56, %v1848, 0
  %v1898 = vsel %vm56, %v1849, 0
  %v1901 = vsel %vm105, %v1851, 0
  %1903 = vmatprep.subr.mxu0 0.0
  %1904 = vmatpush1.msra.mxu0 0.0
  %1905 = vmatprep.subr.mxu0 0.0
  %1906 = vmatpush1.msra.mxu0 0.0
  %1907 = vmatprep.subr.mxu0 0.0
  %1908 = vmatpush1.msra.mxu0 0.0
  %1909 = vmatprep.subr.mxu0 0.0
  %1910 = vmatpush1.msra.mxu0 0.0
  %1911 = vmatprep.subr.mxu0 0.0
  %1912 = vmatpush1.msra.mxu0 0.0
  %1913 = vmatprep.subr.mxu0 0.0
  %1914 = vmatpush1.msra.mxu0 0.0
  %1915 = vmatprep.subr.mxu0 0.0
  %1916 = vmatpush1.msra.mxu0 0.0
  %1917 = vmatprep.subr.mxu0 0.0
  %1918 = vmatpush1.msra.mxu0 0.0
  %1919 = vmatprep.subr.mxu0 0.0
  %1920 = vmatpush1.msra.mxu0 0.0
  %1921 = vmatprep.subr.mxu0 0.0
  %1922 = vmatpush1.msra.mxu0 0.0
  %1923 = vmatprep.subr.mxu0 0.0
  %1924 = vmatpush1.msra.mxu0 0.0
  %1925 = vmatprep.subr.mxu0 0.0
  %1926 = vmatpush1.msra.mxu0 0.0
  %1927 = vmatprep.subr.mxu0 0.0
  %1928 = vmatpush1.msra.mxu0 0.0
  %1929 = vmatprep.subr.mxu0 0.0
  %1930 = vmatpush1.msra.mxu0 0.0
  %1931 = vmatprep.subr.mxu0 0.0
  %1932 = vmatpush1.msra.mxu0 0.0
  %1933 = vmatprep.subr.mxu0 0.0
  %1934 = vmatpush1.msra.mxu0 %v1901
  %1935 = vmatprep.subr.mxu0 0.0
  %1936 = vmatpush2.msra.mxu0 0.0
  %1937 = vmatprep.subr.mxu0 0.0
  %1938 = vmatpush2.msra.mxu0 0.0
  %1939 = vmatprep.subr.mxu0 0.0
  %1940 = vmatpush2.msra.mxu0 0.0
  %1941 = vmatprep.subr.mxu0 0.0
  %1942 = vmatpush2.msra.mxu0 0.0
  %1943 = vmatprep.subr.mxu0 0.0
  %1944 = vmatpush2.msra.mxu0 0.0
  %1945 = vmatprep.subr.mxu0 0.0
  %1946 = vmatpush2.msra.mxu0 0.0
  %1947 = vmatprep.subr.mxu0 0.0
  %1948 = vmatpush2.msra.mxu0 0.0
  %1949 = vmatprep.subr.mxu0 0.0
  %1950 = vmatpush2.msra.mxu0 0.0
  %1951 = vmatprep.subr.mxu0 0.0
  %1952 = vmatpush2.msra.mxu0 0.0
  %1953 = vmatprep.subr.mxu0 0.0
  %1954 = vmatpush2.msra.mxu0 0.0
  %1955 = vmatprep.subr.mxu0 0.0
  %1956 = vmatpush2.msra.mxu0 0.0
  %1957 = vmatprep.subr.mxu0 0.0
  %1958 = vmatpush2.msra.mxu0 0.0
  %1959 = vmatprep.subr.mxu0 0.0
  %1960 = vmatpush2.msra.mxu0 0.0
  %1961 = vmatprep.subr.mxu0 0.0
  %1962 = vmatpush2.msra.mxu0 0.0
  %1963 = vmatprep.subr.mxu0 0.0
  %1964 = vmatpush2.msra.mxu0 0.0
  %1965 = vmatprep.subr.mxu0 0.0
  %1966 = vmatpush2.msra.mxu0 0.0
  %1967 = vmatprep.mubr.f32.mxu0 0.0
  %1968 = vmatmul.mubr.f32.gmra.mxu0 %v1853
  %v1969 = vpop.f32.mrf.mxu0
  %v1970 = vadd.f32 0.0, %v1969
  %v1971 = vpop.f32.mrf.mxu0
  %1972 = vmatprep.mubr.f32.mxu0 0.0
  %1973 = vmatmul.mubr.f32.gmra.mxu0 %v1856
  %v1974 = vpop.f32.mrf.mxu0
  %v1975 = vadd.f32 0.0, %v1974
  %v1976 = vpop.f32.mrf.mxu0
  %1977 = vmatprep.mubr.f32.mxu0 0.0
  %1978 = vmatmul.mubr.f32.gmra.mxu0 %v1859
  %v1979 = vpop.f32.mrf.mxu0
  %v1980 = vadd.f32 0.0, %v1979
  %v1981 = vpop.f32.mrf.mxu0
  %1982 = vmatprep.mubr.f32.mxu0 0.0
  %1983 = vmatmul.mubr.f32.gmra.mxu0 %v1862
  %v1984 = vpop.f32.mrf.mxu0
  %v1985 = vadd.f32 0.0, %v1984
  %v1986 = vpop.f32.mrf.mxu0
  %1987 = vmatprep.mubr.f32.mxu0 0.0
  %1988 = vmatmul.mubr.f32.gmra.mxu0 %v1865
  %v1989 = vpop.f32.mrf.mxu0
  %v1990 = vadd.f32 0.0, %v1989
  %v1991 = vpop.f32.mrf.mxu0
  %1992 = vmatprep.mubr.f32.mxu0 0.0
  %1993 = vmatmul.mubr.f32.gmra.mxu0 %v1868
  %v1994 = vpop.f32.mrf.mxu0
  %v1995 = vadd.f32 0.0, %v1994
  %v1996 = vpop.f32.mrf.mxu0
  %1997 = vmatprep.mubr.f32.mxu0 0.0
  %1998 = vmatmul.mubr.f32.gmra.mxu0 %v1871
  %v1999 = vpop.f32.mrf.mxu0
  %v2000 = vadd.f32 0.0, %v1999
  %v2001 = vpop.f32.mrf.mxu0
  %2002 = vmatprep.mubr.f32.mxu0 0.0
  %2003 = vmatmul.mubr.f32.gmra.mxu0 %v1874
  %v2004 = vpop.f32.mrf.mxu0
  %v2005 = vadd.f32 0.0, %v2004
  %v2006 = vpop.f32.mrf.mxu0
  %2007 = vmatprep.mubr.f32.mxu0 0.0
  %2008 = vmatmul.mubr.f32.gmra.mxu0 %v1877
  %v2009 = vpop.f32.mrf.mxu0
  %v2010 = vadd.f32 0.0, %v2009
  %v2011 = vpop.f32.mrf.mxu0
  %2012 = vmatprep.mubr.f32.mxu0 0.0
  %2013 = vmatmul.mubr.f32.gmra.mxu0 %v1880
  %v2014 = vpop.f32.mrf.mxu0
  %v2015 = vadd.f32 0.0, %v2014
  %v2016 = vpop.f32.mrf.mxu0
  %2017 = vmatprep.mubr.f32.mxu0 0.0
  %2018 = vmatmul.mubr.f32.gmra.mxu0 %v1883
  %v2019 = vpop.f32.mrf.mxu0
  %v2020 = vadd.f32 0.0, %v2019
  %v2021 = vpop.f32.mrf.mxu0
  %2022 = vmatprep.mubr.f32.mxu0 0.0
  %2023 = vmatmul.mubr.f32.gmra.mxu0 %v1886
  %v2024 = vpop.f32.mrf.mxu0
  %v2025 = vadd.f32 0.0, %v2024
  %v2026 = vpop.f32.mrf.mxu0
  %2027 = vmatprep.mubr.f32.mxu0 0.0
  %2028 = vmatmul.mubr.f32.gmra.mxu0 %v1889
  %v2029 = vpop.f32.mrf.mxu0
  %v2030 = vadd.f32 0.0, %v2029
  %v2031 = vpop.f32.mrf.mxu0
  %2032 = vmatprep.mubr.f32.mxu0 0.0
  %2033 = vmatmul.mubr.f32.gmra.mxu0 %v1892
  %v2034 = vpop.f32.mrf.mxu0
  %v2035 = vadd.f32 0.0, %v2034
  %v2036 = vpop.f32.mrf.mxu0
  %2037 = vmatprep.mubr.f32.mxu0 0.0
  %2038 = vmatmul.mubr.f32.gmra.mxu0 %v1895
  %v2039 = vpop.f32.mrf.mxu0
  %v2040 = vadd.f32 0.0, %v2039
  %v2041 = vpop.f32.mrf.mxu0
  %2042 = vmatprep.mubr.f32.mxu0 0.0
  %2043 = vmatmul.mubr.f32.gmra.mxu0 %v1898
  %v2044 = vpop.f32.mrf.mxu0
  %v2045 = vadd.f32 0.0, %v2044
  %v2046 = vpop.f32.mrf.mxu0
  %2047 = vdwg.mxu0
  %v2048 = vadd.f32 %v1818, %v1970
  %v2049 = vadd.f32 %v1819, %v1975
  %v2050 = vadd.f32 %v1820, %v1980
  %v2051 = vadd.f32 %v1821, %v1985
  %v2052 = vadd.f32 %v1822, %v1990
  %v2053 = vadd.f32 %v1823, %v1995
  %v2054 = vadd.f32 %v1824, %v2000
  %v2055 = vadd.f32 %v1825, %v2005
  %v2056 = vadd.f32 %v1826, %v2010
  %v2057 = vadd.f32 %v1827, %v2015
  %v2058 = vadd.f32 %v1828, %v2020
  %v2059 = vadd.f32 %v1829, %v2025
  %v2060 = vadd.f32 %v1830, %v2030
  %v2061 = vadd.f32 %v1831, %v2035
  %v2062 = vadd.f32 %v1832, %v2040
  %v2063 = vadd.f32 %v1833, %v2045
  %v2064 = vld [vmem:[%s2] sm:$0x1]
  %v2066 = vlaneseq
  %v2067 = vshrl.u32 %v2066, 7
  %v2068 = vsub.s32 0, %v2067
  %v2069 = vrot.slane %v2064, %v2068
  %v2071 = vadd.f32 %v2048, %v2069
  %v2072 = vadd.f32 %v2049, %v2069
  %v2073 = vadd.f32 %v2050, %v2069
  %v2074 = vadd.f32 %v2051, %v2069
  %v2075 = vadd.f32 %v2052, %v2069
  %v2076 = vadd.f32 %v2053, %v2069
  %v2077 = vadd.f32 %v2054, %v2069
  %v2078 = vadd.f32 %v2055, %v2069
  %v2079 = vadd.f32 %v2056, %v2069
  %v2080 = vadd.f32 %v2057, %v2069
  %v2081 = vadd.f32 %v2058, %v2069
  %v2082 = vadd.f32 %v2059, %v2069
  %v2083 = vadd.f32 %v2060, %v2069
  %v2084 = vadd.f32 %v2061, %v2069
  %v2085 = vadd.f32 %v2062, %v2069
  %v2086 = vadd.f32 %v2063, %v2069
  %v2087 = vmax.f32 %v2071, 0.0
  %v2088 = vmax.f32 %v2072, 0.0
  %v2089 = vmax.f32 %v2073, 0.0
  %v2090 = vmax.f32 %v2074, 0.0
  %v2091 = vmax.f32 %v2075, 0.0
  %v2092 = vmax.f32 %v2076, 0.0
  %v2093 = vmax.f32 %v2077, 0.0
  %v2094 = vmax.f32 %v2078, 0.0
  %v2095 = vmax.f32 %v2079, 0.0
  %v2096 = vmax.f32 %v2080, 0.0
  %v2097 = vmax.f32 %v2081, 0.0
  %v2098 = vmax.f32 %v2082, 0.0
  %v2099 = vmax.f32 %v2083, 0.0
  %v2100 = vmax.f32 %v2084, 0.0
  %v2101 = vmax.f32 %v2085, 0.0
  %v2102 = vmax.f32 %v2086, 0.0
  %vm2103 = vcmask 130048
  %2104 = vst.msk [vmem:[#allocation2] sm:$0xff] %vm2103, 0.0
  %vm2105 = vcmask 123904
  %2106 = vst.msk [vmem:[#allocation2 + $0x8] sm:$0x3] %vm2105, 0.0
  %2107 = vst.msk [vmem:[#allocation2 + $0x10] sm:$0xff] %vm2103, 0.0
  %2108 = vst.msk [vmem:[#allocation2 + $0x18] sm:$0x3] %vm2105, 0.0
  %2109 = vst.msk [vmem:[#allocation2 + $0x20] sm:$0xff] %vm2103, 0.0
  %2110 = vst.msk [vmem:[#allocation2 + $0x28] sm:$0x3] %vm2105, 0.0
  %2111 = vst.msk [vmem:[#allocation2 + $0x30] sm:$0xff] %vm2103, 0.0
  %2112 = vst.msk [vmem:[#allocation2 + $0x38] sm:$0x3] %vm2105, 0.0
  %2113 = vst.msk [vmem:[#allocation2 + $0x40] sm:$0xff] %vm2103, 0.0
  %2114 = vst.msk [vmem:[#allocation2 + $0x48] sm:$0x3] %vm2105, 0.0
  %2115 = vst.msk [vmem:[#allocation2 + $0x50] sm:$0xff] %vm2103, 0.0
  %2116 = vst.msk [vmem:[#allocation2 + $0x58] sm:$0x3] %vm2105, 0.0
  %2117 = vst.msk [vmem:[#allocation2 + $0x60] sm:$0xff] %vm2103, 0.0
  %2118 = vst.msk [vmem:[#allocation2 + $0x68] sm:$0x3] %vm2105, 0.0
  %2119 = vst.msk [vmem:[#allocation2 + $0x70] sm:$0xff] %vm2103, 0.0
  %2120 = vst.msk [vmem:[#allocation2 + $0x78] sm:$0x3] %vm2105, 0.0
  %2121 = vst.msk [vmem:[#allocation2 + $0x80] sm:$0xff] %vm2103, 0.0
  %2122 = vst.msk [vmem:[#allocation2 + $0x88] sm:$0x3] %vm2105, 0.0
  %2123 = vst.msk [vmem:[#allocation2 + $0x90] sm:$0xff] %vm2103, 0.0
  %2124 = vst.msk [vmem:[#allocation2 + $0x98] sm:$0x3] %vm2105, 0.0
  %2125 = vst.msk [vmem:[#allocation2 + $0xa0] sm:$0xff] %vm2103, 0.0
  %2126 = vst.msk [vmem:[#allocation2 + $0xa8] sm:$0x3] %vm2105, 0.0
  %2127 = vst.msk [vmem:[#allocation2 + $0xb0] sm:$0xff] %vm2103, 0.0
  %2128 = vst.msk [vmem:[#allocation2 + $0xb8] sm:$0x3] %vm2105, 0.0
  %2129 = vst.msk [vmem:[#allocation2 + $0xc0] sm:$0xff] %vm2103, 0.0
  %2130 = vst.msk [vmem:[#allocation2 + $0xc8] sm:$0x3] %vm2105, 0.0
  %2131 = vst.msk [vmem:[#allocation2 + $0xd0] sm:$0xff] %vm2103, 0.0
  %2132 = vst.msk [vmem:[#allocation2 + $0xd8] sm:$0x3] %vm2105, 0.0
  %2133 = vst.msk [vmem:[#allocation2 + $0xe0] sm:$0xff] %vm2103, 0.0
  %2134 = vst.msk [vmem:[#allocation2 + $0xe8] sm:$0x3] %vm2105, 0.0
  %2135 = vst.msk [vmem:[#allocation2 + $0xf0] sm:$0xff] %vm2103, 0.0
  %2136 = vst.msk [vmem:[#allocation2 + $0xf8] sm:$0x3] %vm2105, 0.0
  %2137 = vst.msk [vmem:[#allocation2 + $0x100] sm:$0xff] %vm2103, 0.0
  %2138 = vst.msk [vmem:[#allocation2 + $0x108] sm:$0x3] %vm2105, 0.0
  %2139 = vst.msk [vmem:[#allocation2 + $0x110] sm:$0xff] %vm2103, 0.0
  %2140 = vst.msk [vmem:[#allocation2 + $0x118] sm:$0x3] %vm2105, 0.0
  %2141 = vst.msk [vmem:[#allocation2 + $0x120] sm:$0xff] %vm2103, 0.0
  %2142 = vst.msk [vmem:[#allocation2 + $0x128] sm:$0x3] %vm2105, 0.0
  %2143 = vst.msk [vmem:[#allocation2 + $0x130] sm:$0xff] %vm2103, 0.0
  %2144 = vst.msk [vmem:[#allocation2 + $0x138] sm:$0x3] %vm2105, 0.0
  %s2145 = scalar_lea.vmem [#allocation2], 16
  %2146 = vst.msk [vmem:[%s2145 + $0x1] sm:$0xff] %vm2103, %v2087
  %2147 = vst.msk [vmem:[%s2145 + $0x11] sm:$0xff] %vm2103, %v2088
  %2148 = vst.msk [vmem:[%s2145 + $0x21] sm:$0xff] %vm2103, %v2089
  %2149 = vst.msk [vmem:[%s2145 + $0x31] sm:$0xff] %vm2103, %v2090
  %2150 = vst.msk [vmem:[%s2145 + $0x41] sm:$0xff] %vm2103, %v2091
  %2151 = vst.msk [vmem:[%s2145 + $0x51] sm:$0xff] %vm2103, %v2092
  %2152 = vst.msk [vmem:[%s2145 + $0x61] sm:$0xff] %vm2103, %v2093
  %2153 = vst.msk [vmem:[%s2145 + $0x71] sm:$0xff] %vm2103, %v2094
  %2154 = vst.msk [vmem:[%s2145 + $0xa1] sm:$0xff] %vm2103, %v2095
  %2155 = vst.msk [vmem:[%s2145 + $0xb1] sm:$0xff] %vm2103, %v2096
  %2156 = vst.msk [vmem:[%s2145 + $0xc1] sm:$0xff] %vm2103, %v2097
  %2157 = vst.msk [vmem:[%s2145 + $0xd1] sm:$0xff] %vm2103, %v2098
  %2158 = vst.msk [vmem:[%s2145 + $0xe1] sm:$0xff] %vm2103, %v2099
  %2159 = vst.msk [vmem:[%s2145 + $0xf1] sm:$0xff] %vm2103, %v2100
  %2160 = vst.msk [vmem:[%s2145 + $0x101] sm:$0xff] %vm2103, %v2101
  %2161 = vst.msk [vmem:[%s2145 + $0x111] sm:$0xff] %vm2103, %v2102
  %v2162 = vld [vmem:[#allocation2] sm:$0xff]
  %v2163 = vld [vmem:[#allocation2 + $0x10] sm:$0xff]
  %v2164 = vld [vmem:[#allocation2 + $0x20] sm:$0xff]
  %v2165 = vld [vmem:[#allocation2 + $0x30] sm:$0xff]
  %v2166 = vld [vmem:[#allocation2 + $0x40] sm:$0xff]
  %v2167 = vld [vmem:[#allocation2 + $0x50] sm:$0xff]
  %v2168 = vld [vmem:[#allocation2 + $0x60] sm:$0xff]
  %v2169 = vld [vmem:[#allocation2 + $0x70] sm:$0xff]
  %v2170 = vld [vmem:[#allocation2 + $0xa0] sm:$0xff]
  %v2171 = vld [vmem:[#allocation2 + $0xb0] sm:$0xff]
  %v2172 = vld [vmem:[#allocation2 + $0xc0] sm:$0xff]
  %v2173 = vld [vmem:[#allocation2 + $0xd0] sm:$0xff]
  %v2174 = vld [vmem:[#allocation2 + $0xe0] sm:$0xff]
  %v2175 = vld [vmem:[#allocation2 + $0xf0] sm:$0xff]
  %v2176 = vld [vmem:[#allocation2 + $0x100] sm:$0xff]
  %v2177 = vld [vmem:[#allocation2 + $0x110] sm:$0xff]
  %v2178 = vld [vmem:[%s3] sm:$0xff]
  %v2179 = vld [vmem:[%s3 + $0x8] sm:$0xff]
  %v2180 = vld [vmem:[#allocation2 + $0x1] sm:$0xff]
  %v2181 = vld [vmem:[#allocation2 + $0x11] sm:$0xff]
  %v2182 = vld [vmem:[#allocation2 + $0x21] sm:$0xff]
  %v2183 = vld [vmem:[#allocation2 + $0x31] sm:$0xff]
  %v2184 = vld [vmem:[#allocation2 + $0x41] sm:$0xff]
  %v2185 = vld [vmem:[#allocation2 + $0x51] sm:$0xff]
  %v2186 = vld [vmem:[#allocation2 + $0x61] sm:$0xff]
  %v2187 = vld [vmem:[#allocation2 + $0x71] sm:$0xff]
  %v2188 = vld [vmem:[#allocation2 + $0xa1] sm:$0xff]
  %v2189 = vld [vmem:[#allocation2 + $0xb1] sm:$0xff]
  %v2190 = vld [vmem:[#allocation2 + $0xc1] sm:$0xff]
  %v2191 = vld [vmem:[#allocation2 + $0xd1] sm:$0xff]
  %v2192 = vld [vmem:[#allocation2 + $0xe1] sm:$0xff]
  %v2193 = vld [vmem:[#allocation2 + $0xf1] sm:$0xff]
  %v2194 = vld [vmem:[#allocation2 + $0x101] sm:$0xff]
  %v2195 = vld [vmem:[#allocation2 + $0x111] sm:$0xff]
  %s2196 = scalar_lea.vmem %s3, 16
  %v2197 = vld [vmem:[%s2196] sm:$0xff]
  %v2198 = vld [vmem:[%s2196 + $0x8] sm:$0xff]
  %v2200 = vsel %vm2103, %v2180, 0
  %v2203 = vsel %vm2103, %v2181, 0
  %v2206 = vsel %vm2103, %v2182, 0
  %v2209 = vsel %vm2103, %v2183, 0
  %v2212 = vsel %vm2103, %v2184, 0
  %v2215 = vsel %vm2103, %v2185, 0
  %v2218 = vsel %vm2103, %v2186, 0
  %v2221 = vsel %vm2103, %v2187, 0
  %v2224 = vsel %vm2103, %v2188, 0
  %v2227 = vsel %vm2103, %v2189, 0
  %v2230 = vsel %vm2103, %v2190, 0
  %v2233 = vsel %vm2103, %v2191, 0
  %v2236 = vsel %vm2103, %v2192, 0
  %v2239 = vsel %vm2103, %v2193, 0
  %v2242 = vsel %vm2103, %v2194, 0
  %v2245 = vsel %vm2103, %v2195, 0
  %2247 = vmatprep.subr.mxu0 0.0
  %2248 = vmatpush1.msra.mxu0 0.0
  %2249 = vmatprep.subr.mxu0 0.0
  %2250 = vmatpush1.msra.mxu0 0.0
  %2251 = vmatprep.subr.mxu0 0.0
  %2252 = vmatpush1.msra.mxu0 0.0
  %2253 = vmatprep.subr.mxu0 0.0
  %2254 = vmatpush1.msra.mxu0 0.0
  %2255 = vmatprep.subr.mxu0 0.0
  %2256 = vmatpush1.msra.mxu0 0.0
  %2257 = vmatprep.subr.mxu0 0.0
  %2258 = vmatpush1.msra.mxu0 0.0
  %2259 = vmatprep.subr.mxu0 0.0
  %2260 = vmatpush1.msra.mxu0 0.0
  %2261 = vmatprep.subr.mxu0 0.0
  %2262 = vmatpush1.msra.mxu0 0.0
  %2263 = vmatprep.subr.mxu0 0.0
  %2264 = vmatpush1.msra.mxu0 0.0
  %2265 = vmatprep.subr.mxu0 0.0
  %2266 = vmatpush1.msra.mxu0 0.0
  %2267 = vmatprep.subr.mxu0 0.0
  %2268 = vmatpush1.msra.mxu0 0.0
  %2269 = vmatprep.subr.mxu0 0.0
  %2270 = vmatpush1.msra.mxu0 0.0
  %2271 = vmatprep.subr.mxu0 0.0
  %2272 = vmatpush1.msra.mxu0 0.0
  %2273 = vmatprep.subr.mxu0 0.0
  %2274 = vmatpush1.msra.mxu0 0.0
  %2275 = vmatprep.subr.mxu0 0.0
  %2276 = vmatpush1.msra.mxu0 %v2198
  %2277 = vmatprep.subr.mxu0 0.0
  %2278 = vmatpush1.msra.mxu0 %v2197
  %2279 = vmatprep.subr.mxu0 0.0
  %2280 = vmatpush2.msra.mxu0 0.0
  %2281 = vmatprep.subr.mxu0 0.0
  %2282 = vmatpush2.msra.mxu0 0.0
  %2283 = vmatprep.subr.mxu0 0.0
  %2284 = vmatpush2.msra.mxu0 0.0
  %2285 = vmatprep.subr.mxu0 0.0
  %2286 = vmatpush2.msra.mxu0 0.0
  %2287 = vmatprep.subr.mxu0 0.0
  %2288 = vmatpush2.msra.mxu0 0.0
  %2289 = vmatprep.subr.mxu0 0.0
  %2290 = vmatpush2.msra.mxu0 0.0
  %2291 = vmatprep.subr.mxu0 0.0
  %2292 = vmatpush2.msra.mxu0 0.0
  %2293 = vmatprep.subr.mxu0 0.0
  %2294 = vmatpush2.msra.mxu0 0.0
  %2295 = vmatprep.subr.mxu0 0.0
  %2296 = vmatpush2.msra.mxu0 0.0
  %2297 = vmatprep.subr.mxu0 0.0
  %2298 = vmatpush2.msra.mxu0 0.0
  %2299 = vmatprep.subr.mxu0 0.0
  %2300 = vmatpush2.msra.mxu0 0.0
  %2301 = vmatprep.subr.mxu0 0.0
  %2302 = vmatpush2.msra.mxu0 0.0
  %2303 = vmatprep.subr.mxu0 0.0
  %2304 = vmatpush2.msra.mxu0 0.0
  %2305 = vmatprep.subr.mxu0 0.0
  %2306 = vmatpush2.msra.mxu0 0.0
  %2307 = vmatprep.subr.mxu0 0.0
  %2308 = vmatpush2.msra.mxu0 0.0
  %2309 = vmatprep.subr.mxu0 0.0
  %2310 = vmatpush2.msra.mxu0 0.0
  %2311 = vmatprep.mubr.f32.mxu0 0.0
  %2312 = vmatmul.mubr.f32.gmra.mxu0 %v2200
  %v2313 = vpop.f32.mrf.mxu0
  %v2314 = vadd.f32 0.0, %v2313
  %v2315 = vpop.f32.mrf.mxu0
  %2316 = vmatprep.mubr.f32.mxu0 0.0
  %2317 = vmatmul.mubr.f32.gmra.mxu0 %v2203
  %v2318 = vpop.f32.mrf.mxu0
  %v2319 = vadd.f32 0.0, %v2318
  %v2320 = vpop.f32.mrf.mxu0
  %2321 = vmatprep.mubr.f32.mxu0 0.0
  %2322 = vmatmul.mubr.f32.gmra.mxu0 %v2206
  %v2323 = vpop.f32.mrf.mxu0
  %v2324 = vadd.f32 0.0, %v2323
  %v2325 = vpop.f32.mrf.mxu0
  %2326 = vmatprep.mubr.f32.mxu0 0.0
  %2327 = vmatmul.mubr.f32.gmra.mxu0 %v2209
  %v2328 = vpop.f32.mrf.mxu0
  %v2329 = vadd.f32 0.0, %v2328
  %v2330 = vpop.f32.mrf.mxu0
  %2331 = vmatprep.mubr.f32.mxu0 0.0
  %2332 = vmatmul.mubr.f32.gmra.mxu0 %v2212
  %v2333 = vpop.f32.mrf.mxu0
  %v2334 = vadd.f32 0.0, %v2333
  %v2335 = vpop.f32.mrf.mxu0
  %2336 = vmatprep.mubr.f32.mxu0 0.0
  %2337 = vmatmul.mubr.f32.gmra.mxu0 %v2215
  %v2338 = vpop.f32.mrf.mxu0
  %v2339 = vadd.f32 0.0, %v2338
  %v2340 = vpop.f32.mrf.mxu0
  %2341 = vmatprep.mubr.f32.mxu0 0.0
  %2342 = vmatmul.mubr.f32.gmra.mxu0 %v2218
  %v2343 = vpop.f32.mrf.mxu0
  %v2344 = vadd.f32 0.0, %v2343
  %v2345 = vpop.f32.mrf.mxu0
  %2346 = vmatprep.mubr.f32.mxu0 0.0
  %2347 = vmatmul.mubr.f32.gmra.mxu0 %v2221
  %v2348 = vpop.f32.mrf.mxu0
  %v2349 = vadd.f32 0.0, %v2348
  %v2350 = vpop.f32.mrf.mxu0
  %2351 = vmatprep.mubr.f32.mxu0 0.0
  %2352 = vmatmul.mubr.f32.gmra.mxu0 %v2224
  %v2353 = vpop.f32.mrf.mxu0
  %v2354 = vadd.f32 0.0, %v2353
  %v2355 = vpop.f32.mrf.mxu0
  %2356 = vmatprep.mubr.f32.mxu0 0.0
  %2357 = vmatmul.mubr.f32.gmra.mxu0 %v2227
  %v2358 = vpop.f32.mrf.mxu0
  %v2359 = vadd.f32 0.0, %v2358
  %v2360 = vpop.f32.mrf.mxu0
  %2361 = vmatprep.mubr.f32.mxu0 0.0
  %2362 = vmatmul.mubr.f32.gmra.mxu0 %v2230
  %v2363 = vpop.f32.mrf.mxu0
  %v2364 = vadd.f32 0.0, %v2363
  %v2365 = vpop.f32.mrf.mxu0
  %2366 = vmatprep.mubr.f32.mxu0 0.0
  %2367 = vmatmul.mubr.f32.gmra.mxu0 %v2233
  %v2368 = vpop.f32.mrf.mxu0
  %v2369 = vadd.f32 0.0, %v2368
  %v2370 = vpop.f32.mrf.mxu0
  %2371 = vmatprep.mubr.f32.mxu0 0.0
  %2372 = vmatmul.mubr.f32.gmra.mxu0 %v2236
  %v2373 = vpop.f32.mrf.mxu0
  %v2374 = vadd.f32 0.0, %v2373
  %v2375 = vpop.f32.mrf.mxu0
  %2376 = vmatprep.mubr.f32.mxu0 0.0
  %2377 = vmatmul.mubr.f32.gmra.mxu0 %v2239
  %v2378 = vpop.f32.mrf.mxu0
  %v2379 = vadd.f32 0.0, %v2378
  %v2380 = vpop.f32.mrf.mxu0
  %2381 = vmatprep.mubr.f32.mxu0 0.0
  %2382 = vmatmul.mubr.f32.gmra.mxu0 %v2242
  %v2383 = vpop.f32.mrf.mxu0
  %v2384 = vadd.f32 0.0, %v2383
  %v2385 = vpop.f32.mrf.mxu0
  %2386 = vmatprep.mubr.f32.mxu0 0.0
  %2387 = vmatmul.mubr.f32.gmra.mxu0 %v2245
  %v2388 = vpop.f32.mrf.mxu0
  %v2389 = vadd.f32 0.0, %v2388
  %v2390 = vpop.f32.mrf.mxu0
  %2391 = vdwg.mxu0
  %v2393 = vsel %vm2103, %v2162, 0
  %v2396 = vsel %vm2103, %v2163, 0
  %v2399 = vsel %vm2103, %v2164, 0
  %v2402 = vsel %vm2103, %v2165, 0
  %v2405 = vsel %vm2103, %v2166, 0
  %v2408 = vsel %vm2103, %v2167, 0
  %v2411 = vsel %vm2103, %v2168, 0
  %v2414 = vsel %vm2103, %v2169, 0
  %v2417 = vsel %vm2103, %v2170, 0
  %v2420 = vsel %vm2103, %v2171, 0
  %v2423 = vsel %vm2103, %v2172, 0
  %v2426 = vsel %vm2103, %v2173, 0
  %v2429 = vsel %vm2103, %v2174, 0
  %v2432 = vsel %vm2103, %v2175, 0
  %v2435 = vsel %vm2103, %v2176, 0
  %v2438 = vsel %vm2103, %v2177, 0
  %2440 = vmatprep.subr.mxu0 0.0
  %2441 = vmatpush1.msra.mxu0 0.0
  %2442 = vmatprep.subr.mxu0 0.0
  %2443 = vmatpush1.msra.mxu0 0.0
  %2444 = vmatprep.subr.mxu0 0.0
  %2445 = vmatpush1.msra.mxu0 0.0
  %2446 = vmatprep.subr.mxu0 0.0
  %2447 = vmatpush1.msra.mxu0 0.0
  %2448 = vmatprep.subr.mxu0 0.0
  %2449 = vmatpush1.msra.mxu0 0.0
  %2450 = vmatprep.subr.mxu0 0.0
  %2451 = vmatpush1.msra.mxu0 0.0
  %2452 = vmatprep.subr.mxu0 0.0
  %2453 = vmatpush1.msra.mxu0 0.0
  %2454 = vmatprep.subr.mxu0 0.0
  %2455 = vmatpush1.msra.mxu0 0.0
  %2456 = vmatprep.subr.mxu0 0.0
  %2457 = vmatpush1.msra.mxu0 0.0
  %2458 = vmatprep.subr.mxu0 0.0
  %2459 = vmatpush1.msra.mxu0 0.0
  %2460 = vmatprep.subr.mxu0 0.0
  %2461 = vmatpush1.msra.mxu0 0.0
  %2462 = vmatprep.subr.mxu0 0.0
  %2463 = vmatpush1.msra.mxu0 0.0
  %2464 = vmatprep.subr.mxu0 0.0
  %2465 = vmatpush1.msra.mxu0 0.0
  %2466 = vmatprep.subr.mxu0 0.0
  %2467 = vmatpush1.msra.mxu0 0.0
  %2468 = vmatprep.subr.mxu0 0.0
  %2469 = vmatpush1.msra.mxu0 %v2179
  %2470 = vmatprep.subr.mxu0 0.0
  %2471 = vmatpush1.msra.mxu0 %v2178
  %2472 = vmatprep.subr.mxu0 0.0
  %2473 = vmatpush2.msra.mxu0 0.0
  %2474 = vmatprep.subr.mxu0 0.0
  %2475 = vmatpush2.msra.mxu0 0.0
  %2476 = vmatprep.subr.mxu0 0.0
  %2477 = vmatpush2.msra.mxu0 0.0
  %2478 = vmatprep.subr.mxu0 0.0
  %2479 = vmatpush2.msra.mxu0 0.0
  %2480 = vmatprep.subr.mxu0 0.0
  %2481 = vmatpush2.msra.mxu0 0.0
  %2482 = vmatprep.subr.mxu0 0.0
  %2483 = vmatpush2.msra.mxu0 0.0
  %2484 = vmatprep.subr.mxu0 0.0
  %2485 = vmatpush2.msra.mxu0 0.0
  %2486 = vmatprep.subr.mxu0 0.0
  %2487 = vmatpush2.msra.mxu0 0.0
  %2488 = vmatprep.subr.mxu0 0.0
  %2489 = vmatpush2.msra.mxu0 0.0
  %2490 = vmatprep.subr.mxu0 0.0
  %2491 = vmatpush2.msra.mxu0 0.0
  %2492 = vmatprep.subr.mxu0 0.0
  %2493 = vmatpush2.msra.mxu0 0.0
  %2494 = vmatprep.subr.mxu0 0.0
  %2495 = vmatpush2.msra.mxu0 0.0
  %2496 = vmatprep.subr.mxu0 0.0
  %2497 = vmatpush2.msra.mxu0 0.0
  %2498 = vmatprep.subr.mxu0 0.0
  %2499 = vmatpush2.msra.mxu0 0.0
  %2500 = vmatprep.subr.mxu0 0.0
  %2501 = vmatpush2.msra.mxu0 0.0
  %2502 = vmatprep.subr.mxu0 0.0
  %2503 = vmatpush2.msra.mxu0 0.0
  %2504 = vmatprep.mubr.f32.mxu0 0.0
  %2505 = vmatmul.mubr.f32.gmra.mxu0 %v2393
  %v2506 = vpop.f32.mrf.mxu0
  %v2507 = vadd.f32 %v2314, %v2506
  %v2508 = vpop.f32.mrf.mxu0
  %2509 = vmatprep.mubr.f32.mxu0 0.0
  %2510 = vmatmul.mubr.f32.gmra.mxu0 %v2396
  %v2511 = vpop.f32.mrf.mxu0
  %v2512 = vadd.f32 %v2319, %v2511
  %v2513 = vpop.f32.mrf.mxu0
  %2514 = vmatprep.mubr.f32.mxu0 0.0
  %2515 = vmatmul.mubr.f32.gmra.mxu0 %v2399
  %v2516 = vpop.f32.mrf.mxu0
  %v2517 = vadd.f32 %v2324, %v2516
  %v2518 = vpop.f32.mrf.mxu0
  %2519 = vmatprep.mubr.f32.mxu0 0.0
  %2520 = vmatmul.mubr.f32.gmra.mxu0 %v2402
  %v2521 = vpop.f32.mrf.mxu0
  %v2522 = vadd.f32 %v2329, %v2521
  %v2523 = vpop.f32.mrf.mxu0
  %2524 = vmatprep.mubr.f32.mxu0 0.0
  %2525 = vmatmul.mubr.f32.gmra.mxu0 %v2405
  %v2526 = vpop.f32.mrf.mxu0
  %v2527 = vadd.f32 %v2334, %v2526
  %v2528 = vpop.f32.mrf.mxu0
  %2529 = vmatprep.mubr.f32.mxu0 0.0
  %2530 = vmatmul.mubr.f32.gmra.mxu0 %v2408
  %v2531 = vpop.f32.mrf.mxu0
  %v2532 = vadd.f32 %v2339, %v2531
  %v2533 = vpop.f32.mrf.mxu0
  %2534 = vmatprep.mubr.f32.mxu0 0.0
  %2535 = vmatmul.mubr.f32.gmra.mxu0 %v2411
  %v2536 = vpop.f32.mrf.mxu0
  %v2537 = vadd.f32 %v2344, %v2536
  %v2538 = vpop.f32.mrf.mxu0
  %2539 = vmatprep.mubr.f32.mxu0 0.0
  %2540 = vmatmul.mubr.f32.gmra.mxu0 %v2414
  %v2541 = vpop.f32.mrf.mxu0
  %v2542 = vadd.f32 %v2349, %v2541
  %v2543 = vpop.f32.mrf.mxu0
  %2544 = vmatprep.mubr.f32.mxu0 0.0
  %2545 = vmatmul.mubr.f32.gmra.mxu0 %v2417
  %v2546 = vpop.f32.mrf.mxu0
  %v2547 = vadd.f32 %v2354, %v2546
  %v2548 = vpop.f32.mrf.mxu0
  %2549 = vmatprep.mubr.f32.mxu0 0.0
  %2550 = vmatmul.mubr.f32.gmra.mxu0 %v2420
  %v2551 = vpop.f32.mrf.mxu0
  %v2552 = vadd.f32 %v2359, %v2551
  %v2553 = vpop.f32.mrf.mxu0
  %2554 = vmatprep.mubr.f32.mxu0 0.0
  %2555 = vmatmul.mubr.f32.gmra.mxu0 %v2423
  %v2556 = vpop.f32.mrf.mxu0
  %v2557 = vadd.f32 %v2364, %v2556
  %v2558 = vpop.f32.mrf.mxu0
  %2559 = vmatprep.mubr.f32.mxu0 0.0
  %2560 = vmatmul.mubr.f32.gmra.mxu0 %v2426
  %v2561 = vpop.f32.mrf.mxu0
  %v2562 = vadd.f32 %v2369, %v2561
  %v2563 = vpop.f32.mrf.mxu0
  %2564 = vmatprep.mubr.f32.mxu0 0.0
  %2565 = vmatmul.mubr.f32.gmra.mxu0 %v2429
  %v2566 = vpop.f32.mrf.mxu0
  %v2567 = vadd.f32 %v2374, %v2566
  %v2568 = vpop.f32.mrf.mxu0
  %2569 = vmatprep.mubr.f32.mxu0 0.0
  %2570 = vmatmul.mubr.f32.gmra.mxu0 %v2432
  %v2571 = vpop.f32.mrf.mxu0
  %v2572 = vadd.f32 %v2379, %v2571
  %v2573 = vpop.f32.mrf.mxu0
  %2574 = vmatprep.mubr.f32.mxu0 0.0
  %2575 = vmatmul.mubr.f32.gmra.mxu0 %v2435
  %v2576 = vpop.f32.mrf.mxu0
  %v2577 = vadd.f32 %v2384, %v2576
  %v2578 = vpop.f32.mrf.mxu0
  %2579 = vmatprep.mubr.f32.mxu0 0.0
  %2580 = vmatmul.mubr.f32.gmra.mxu0 %v2438
  %v2581 = vpop.f32.mrf.mxu0
  %v2582 = vadd.f32 %v2389, %v2581
  %v2583 = vpop.f32.mrf.mxu0
  %2584 = vdwg.mxu0
  %v2585 = vld [vmem:[#allocation2 + $0x2] sm:$0xff]
  %v2586 = vld [vmem:[#allocation2 + $0x12] sm:$0xff]
  %v2587 = vld [vmem:[#allocation2 + $0x22] sm:$0xff]
  %v2588 = vld [vmem:[#allocation2 + $0x32] sm:$0xff]
  %v2589 = vld [vmem:[#allocation2 + $0x42] sm:$0xff]
  %v2590 = vld [vmem:[#allocation2 + $0x52] sm:$0xff]
  %v2591 = vld [vmem:[#allocation2 + $0x62] sm:$0xff]
  %v2592 = vld [vmem:[#allocation2 + $0x72] sm:$0xff]
  %v2593 = vld [vmem:[#allocation2 + $0xa2] sm:$0xff]
  %v2594 = vld [vmem:[#allocation2 + $0xb2] sm:$0xff]
  %v2595 = vld [vmem:[#allocation2 + $0xc2] sm:$0xff]
  %v2596 = vld [vmem:[#allocation2 + $0xd2] sm:$0xff]
  %v2597 = vld [vmem:[#allocation2 + $0xe2] sm:$0xff]
  %v2598 = vld [vmem:[#allocation2 + $0xf2] sm:$0xff]
  %v2599 = vld [vmem:[#allocation2 + $0x102] sm:$0xff]
  %v2600 = vld [vmem:[#allocation2 + $0x112] sm:$0xff]
  %s2601 = scalar_lea.vmem %s3, 32
  %v2602 = vld [vmem:[%s2601] sm:$0xff]
  %v2603 = vld [vmem:[%s2601 + $0x8] sm:$0xff]
  %v2605 = vsel %vm2103, %v2585, 0
  %v2608 = vsel %vm2103, %v2586, 0
  %v2611 = vsel %vm2103, %v2587, 0
  %v2614 = vsel %vm2103, %v2588, 0
  %v2617 = vsel %vm2103, %v2589, 0
  %v2620 = vsel %vm2103, %v2590, 0
  %v2623 = vsel %vm2103, %v2591, 0
  %v2626 = vsel %vm2103, %v2592, 0
  %v2629 = vsel %vm2103, %v2593, 0
  %v2632 = vsel %vm2103, %v2594, 0
  %v2635 = vsel %vm2103, %v2595, 0
  %v2638 = vsel %vm2103, %v2596, 0
  %v2641 = vsel %vm2103, %v2597, 0
  %v2644 = vsel %vm2103, %v2598, 0
  %v2647 = vsel %vm2103, %v2599, 0
  %v2650 = vsel %vm2103, %v2600, 0
  %2652 = vmatprep.subr.mxu0 0.0
  %2653 = vmatpush1.msra.mxu0 0.0
  %2654 = vmatprep.subr.mxu0 0.0
  %2655 = vmatpush1.msra.mxu0 0.0
  %2656 = vmatprep.subr.mxu0 0.0
  %2657 = vmatpush1.msra.mxu0 0.0
  %2658 = vmatprep.subr.mxu0 0.0
  %2659 = vmatpush1.msra.mxu0 0.0
  %2660 = vmatprep.subr.mxu0 0.0
  %2661 = vmatpush1.msra.mxu0 0.0
  %2662 = vmatprep.subr.mxu0 0.0
  %2663 = vmatpush1.msra.mxu0 0.0
  %2664 = vmatprep.subr.mxu0 0.0
  %2665 = vmatpush1.msra.mxu0 0.0
  %2666 = vmatprep.subr.mxu0 0.0
  %2667 = vmatpush1.msra.mxu0 0.0
  %2668 = vmatprep.subr.mxu0 0.0
  %2669 = vmatpush1.msra.mxu0 0.0
  %2670 = vmatprep.subr.mxu0 0.0
  %2671 = vmatpush1.msra.mxu0 0.0
  %2672 = vmatprep.subr.mxu0 0.0
  %2673 = vmatpush1.msra.mxu0 0.0
  %2674 = vmatprep.subr.mxu0 0.0
  %2675 = vmatpush1.msra.mxu0 0.0
  %2676 = vmatprep.subr.mxu0 0.0
  %2677 = vmatpush1.msra.mxu0 0.0
  %2678 = vmatprep.subr.mxu0 0.0
  %2679 = vmatpush1.msra.mxu0 0.0
  %2680 = vmatprep.subr.mxu0 0.0
  %2681 = vmatpush1.msra.mxu0 %v2603
  %2682 = vmatprep.subr.mxu0 0.0
  %2683 = vmatpush1.msra.mxu0 %v2602
  %2684 = vmatprep.subr.mxu0 0.0
  %2685 = vmatpush2.msra.mxu0 0.0
  %2686 = vmatprep.subr.mxu0 0.0
  %2687 = vmatpush2.msra.mxu0 0.0
  %2688 = vmatprep.subr.mxu0 0.0
  %2689 = vmatpush2.msra.mxu0 0.0
  %2690 = vmatprep.subr.mxu0 0.0
  %2691 = vmatpush2.msra.mxu0 0.0
  %2692 = vmatprep.subr.mxu0 0.0
  %2693 = vmatpush2.msra.mxu0 0.0
  %2694 = vmatprep.subr.mxu0 0.0
  %2695 = vmatpush2.msra.mxu0 0.0
  %2696 = vmatprep.subr.mxu0 0.0
  %2697 = vmatpush2.msra.mxu0 0.0
  %2698 = vmatprep.subr.mxu0 0.0
  %2699 = vmatpush2.msra.mxu0 0.0
  %2700 = vmatprep.subr.mxu0 0.0
  %2701 = vmatpush2.msra.mxu0 0.0
  %2702 = vmatprep.subr.mxu0 0.0
  %2703 = vmatpush2.msra.mxu0 0.0
  %2704 = vmatprep.subr.mxu0 0.0
  %2705 = vmatpush2.msra.mxu0 0.0
  %2706 = vmatprep.subr.mxu0 0.0
  %2707 = vmatpush2.msra.mxu0 0.0
  %2708 = vmatprep.subr.mxu0 0.0
  %2709 = vmatpush2.msra.mxu0 0.0
  %2710 = vmatprep.subr.mxu0 0.0
  %2711 = vmatpush2.msra.mxu0 0.0
  %2712 = vmatprep.subr.mxu0 0.0
  %2713 = vmatpush2.msra.mxu0 0.0
  %2714 = vmatprep.subr.mxu0 0.0
  %2715 = vmatpush2.msra.mxu0 0.0
  %2716 = vmatprep.mubr.f32.mxu0 0.0
  %2717 = vmatmul.mubr.f32.gmra.mxu0 %v2605
  %v2718 = vpop.f32.mrf.mxu0
  %v2719 = vadd.f32 0.0, %v2718
  %v2720 = vpop.f32.mrf.mxu0
  %2721 = vmatprep.mubr.f32.mxu0 0.0
  %2722 = vmatmul.mubr.f32.gmra.mxu0 %v2608
  %v2723 = vpop.f32.mrf.mxu0
  %v2724 = vadd.f32 0.0, %v2723
  %v2725 = vpop.f32.mrf.mxu0
  %2726 = vmatprep.mubr.f32.mxu0 0.0
  %2727 = vmatmul.mubr.f32.gmra.mxu0 %v2611
  %v2728 = vpop.f32.mrf.mxu0
  %v2729 = vadd.f32 0.0, %v2728
  %v2730 = vpop.f32.mrf.mxu0
  %2731 = vmatprep.mubr.f32.mxu0 0.0
  %2732 = vmatmul.mubr.f32.gmra.mxu0 %v2614
  %v2733 = vpop.f32.mrf.mxu0
  %v2734 = vadd.f32 0.0, %v2733
  %v2735 = vpop.f32.mrf.mxu0
  %2736 = vmatprep.mubr.f32.mxu0 0.0
  %2737 = vmatmul.mubr.f32.gmra.mxu0 %v2617
  %v2738 = vpop.f32.mrf.mxu0
  %v2739 = vadd.f32 0.0, %v2738
  %v2740 = vpop.f32.mrf.mxu0
  %2741 = vmatprep.mubr.f32.mxu0 0.0
  %2742 = vmatmul.mubr.f32.gmra.mxu0 %v2620
  %v2743 = vpop.f32.mrf.mxu0
  %v2744 = vadd.f32 0.0, %v2743
  %v2745 = vpop.f32.mrf.mxu0
  %2746 = vmatprep.mubr.f32.mxu0 0.0
  %2747 = vmatmul.mubr.f32.gmra.mxu0 %v2623
  %v2748 = vpop.f32.mrf.mxu0
  %v2749 = vadd.f32 0.0, %v2748
  %v2750 = vpop.f32.mrf.mxu0
  %2751 = vmatprep.mubr.f32.mxu0 0.0
  %2752 = vmatmul.mubr.f32.gmra.mxu0 %v2626
  %v2753 = vpop.f32.mrf.mxu0
  %v2754 = vadd.f32 0.0, %v2753
  %v2755 = vpop.f32.mrf.mxu0
  %2756 = vmatprep.mubr.f32.mxu0 0.0
  %2757 = vmatmul.mubr.f32.gmra.mxu0 %v2629
  %v2758 = vpop.f32.mrf.mxu0
  %v2759 = vadd.f32 0.0, %v2758
  %v2760 = vpop.f32.mrf.mxu0
  %2761 = vmatprep.mubr.f32.mxu0 0.0
  %2762 = vmatmul.mubr.f32.gmra.mxu0 %v2632
  %v2763 = vpop.f32.mrf.mxu0
  %v2764 = vadd.f32 0.0, %v2763
  %v2765 = vpop.f32.mrf.mxu0
  %2766 = vmatprep.mubr.f32.mxu0 0.0
  %2767 = vmatmul.mubr.f32.gmra.mxu0 %v2635
  %v2768 = vpop.f32.mrf.mxu0
  %v2769 = vadd.f32 0.0, %v2768
  %v2770 = vpop.f32.mrf.mxu0
  %2771 = vmatprep.mubr.f32.mxu0 0.0
  %2772 = vmatmul.mubr.f32.gmra.mxu0 %v2638
  %v2773 = vpop.f32.mrf.mxu0
  %v2774 = vadd.f32 0.0, %v2773
  %v2775 = vpop.f32.mrf.mxu0
  %2776 = vmatprep.mubr.f32.mxu0 0.0
  %2777 = vmatmul.mubr.f32.gmra.mxu0 %v2641
  %v2778 = vpop.f32.mrf.mxu0
  %v2779 = vadd.f32 0.0, %v2778
  %v2780 = vpop.f32.mrf.mxu0
  %2781 = vmatprep.mubr.f32.mxu0 0.0
  %2782 = vmatmul.mubr.f32.gmra.mxu0 %v2644
  %v2783 = vpop.f32.mrf.mxu0
  %v2784 = vadd.f32 0.0, %v2783
  %v2785 = vpop.f32.mrf.mxu0
  %2786 = vmatprep.mubr.f32.mxu0 0.0
  %2787 = vmatmul.mubr.f32.gmra.mxu0 %v2647
  %v2788 = vpop.f32.mrf.mxu0
  %v2789 = vadd.f32 0.0, %v2788
  %v2790 = vpop.f32.mrf.mxu0
  %2791 = vmatprep.mubr.f32.mxu0 0.0
  %2792 = vmatmul.mubr.f32.gmra.mxu0 %v2650
  %v2793 = vpop.f32.mrf.mxu0
  %v2794 = vadd.f32 0.0, %v2793
  %v2795 = vpop.f32.mrf.mxu0
  %2796 = vdwg.mxu0
  %v2797 = vadd.f32 %v2507, %v2719
  %v2798 = vadd.f32 %v2512, %v2724
  %v2799 = vadd.f32 %v2517, %v2729
  %v2800 = vadd.f32 %v2522, %v2734
  %v2801 = vadd.f32 %v2527, %v2739
  %v2802 = vadd.f32 %v2532, %v2744
  %v2803 = vadd.f32 %v2537, %v2749
  %v2804 = vadd.f32 %v2542, %v2754
  %v2805 = vadd.f32 %v2547, %v2759
  %v2806 = vadd.f32 %v2552, %v2764
  %v2807 = vadd.f32 %v2557, %v2769
  %v2808 = vadd.f32 %v2562, %v2774
  %v2809 = vadd.f32 %v2567, %v2779
  %v2810 = vadd.f32 %v2572, %v2784
  %v2811 = vadd.f32 %v2577, %v2789
  %v2812 = vadd.f32 %v2582, %v2794
  %v2813 = vld [vmem:[%s2145] sm:$0xff]
  %v2814 = vld [vmem:[%s2145 + $0x10] sm:$0xff]
  %v2815 = vld [vmem:[%s2145 + $0x20] sm:$0xff]
  %v2816 = vld [vmem:[%s2145 + $0x30] sm:$0xff]
  %v2817 = vld [vmem:[%s2145 + $0x40] sm:$0xff]
  %v2818 = vld [vmem:[%s2145 + $0x50] sm:$0xff]
  %v2819 = vld [vmem:[%s2145 + $0x60] sm:$0xff]
  %v2820 = vld [vmem:[%s2145 + $0x70] sm:$0xff]
  %v2821 = vld [vmem:[%s2145 + $0xa0] sm:$0xff]
  %v2822 = vld [vmem:[%s2145 + $0xb0] sm:$0xff]
  %v2823 = vld [vmem:[%s2145 + $0xc0] sm:$0xff]
  %v2824 = vld [vmem:[%s2145 + $0xd0] sm:$0xff]
  %v2825 = vld [vmem:[%s2145 + $0xe0] sm:$0xff]
  %v2826 = vld [vmem:[%s2145 + $0xf0] sm:$0xff]
  %v2827 = vld [vmem:[%s2145 + $0x100] sm:$0xff]
  %v2828 = vld [vmem:[%s2145 + $0x110] sm:$0xff]
  %s2829 = scalar_lea.vmem %s3, 48
  %v2830 = vld [vmem:[%s2829] sm:$0xff]
  %v2831 = vld [vmem:[%s2829 + $0x8] sm:$0xff]
  %v2833 = vsel %vm2103, %v2813, 0
  %v2836 = vsel %vm2103, %v2814, 0
  %v2839 = vsel %vm2103, %v2815, 0
  %v2842 = vsel %vm2103, %v2816, 0
  %v2845 = vsel %vm2103, %v2817, 0
  %v2848 = vsel %vm2103, %v2818, 0
  %v2851 = vsel %vm2103, %v2819, 0
  %v2854 = vsel %vm2103, %v2820, 0
  %v2857 = vsel %vm2103, %v2821, 0
  %v2860 = vsel %vm2103, %v2822, 0
  %v2863 = vsel %vm2103, %v2823, 0
  %v2866 = vsel %vm2103, %v2824, 0
  %v2869 = vsel %vm2103, %v2825, 0
  %v2872 = vsel %vm2103, %v2826, 0
  %v2875 = vsel %vm2103, %v2827, 0
  %v2878 = vsel %vm2103, %v2828, 0
  %2880 = vmatprep.subr.mxu0 0.0
  %2881 = vmatpush1.msra.mxu0 0.0
  %2882 = vmatprep.subr.mxu0 0.0
  %2883 = vmatpush1.msra.mxu0 0.0
  %2884 = vmatprep.subr.mxu0 0.0
  %2885 = vmatpush1.msra.mxu0 0.0
  %2886 = vmatprep.subr.mxu0 0.0
  %2887 = vmatpush1.msra.mxu0 0.0
  %2888 = vmatprep.subr.mxu0 0.0
  %2889 = vmatpush1.msra.mxu0 0.0
  %2890 = vmatprep.subr.mxu0 0.0
  %2891 = vmatpush1.msra.mxu0 0.0
  %2892 = vmatprep.subr.mxu0 0.0
  %2893 = vmatpush1.msra.mxu0 0.0
  %2894 = vmatprep.subr.mxu0 0.0
  %2895 = vmatpush1.msra.mxu0 0.0
  %2896 = vmatprep.subr.mxu0 0.0
  %2897 = vmatpush1.msra.mxu0 0.0
  %2898 = vmatprep.subr.mxu0 0.0
  %2899 = vmatpush1.msra.mxu0 0.0
  %2900 = vmatprep.subr.mxu0 0.0
  %2901 = vmatpush1.msra.mxu0 0.0
  %2902 = vmatprep.subr.mxu0 0.0
  %2903 = vmatpush1.msra.mxu0 0.0
  %2904 = vmatprep.subr.mxu0 0.0
  %2905 = vmatpush1.msra.mxu0 0.0
  %2906 = vmatprep.subr.mxu0 0.0
  %2907 = vmatpush1.msra.mxu0 0.0
  %2908 = vmatprep.subr.mxu0 0.0
  %2909 = vmatpush1.msra.mxu0 %v2831
  %2910 = vmatprep.subr.mxu0 0.0
  %2911 = vmatpush1.msra.mxu0 %v2830
  %2912 = vmatprep.subr.mxu0 0.0
  %2913 = vmatpush2.msra.mxu0 0.0
  %2914 = vmatprep.subr.mxu0 0.0
  %2915 = vmatpush2.msra.mxu0 0.0
  %2916 = vmatprep.subr.mxu0 0.0
  %2917 = vmatpush2.msra.mxu0 0.0
  %2918 = vmatprep.subr.mxu0 0.0
  %2919 = vmatpush2.msra.mxu0 0.0
  %2920 = vmatprep.subr.mxu0 0.0
  %2921 = vmatpush2.msra.mxu0 0.0
  %2922 = vmatprep.subr.mxu0 0.0
  %2923 = vmatpush2.msra.mxu0 0.0
  %2924 = vmatprep.subr.mxu0 0.0
  %2925 = vmatpush2.msra.mxu0 0.0
  %2926 = vmatprep.subr.mxu0 0.0
  %2927 = vmatpush2.msra.mxu0 0.0
  %2928 = vmatprep.subr.mxu0 0.0
  %2929 = vmatpush2.msra.mxu0 0.0
  %2930 = vmatprep.subr.mxu0 0.0
  %2931 = vmatpush2.msra.mxu0 0.0
  %2932 = vmatprep.subr.mxu0 0.0
  %2933 = vmatpush2.msra.mxu0 0.0
  %2934 = vmatprep.subr.mxu0 0.0
  %2935 = vmatpush2.msra.mxu0 0.0
  %2936 = vmatprep.subr.mxu0 0.0
  %2937 = vmatpush2.msra.mxu0 0.0
  %2938 = vmatprep.subr.mxu0 0.0
  %2939 = vmatpush2.msra.mxu0 0.0
  %2940 = vmatprep.subr.mxu0 0.0
  %2941 = vmatpush2.msra.mxu0 0.0
  %2942 = vmatprep.subr.mxu0 0.0
  %2943 = vmatpush2.msra.mxu0 0.0
  %2944 = vmatprep.mubr.f32.mxu0 0.0
  %2945 = vmatmul.mubr.f32.gmra.mxu0 %v2833
  %v2946 = vpop.f32.mrf.mxu0
  %v2947 = vadd.f32 0.0, %v2946
  %v2948 = vpop.f32.mrf.mxu0
  %2949 = vmatprep.mubr.f32.mxu0 0.0
  %2950 = vmatmul.mubr.f32.gmra.mxu0 %v2836
  %v2951 = vpop.f32.mrf.mxu0
  %v2952 = vadd.f32 0.0, %v2951
  %v2953 = vpop.f32.mrf.mxu0
  %2954 = vmatprep.mubr.f32.mxu0 0.0
  %2955 = vmatmul.mubr.f32.gmra.mxu0 %v2839
  %v2956 = vpop.f32.mrf.mxu0
  %v2957 = vadd.f32 0.0, %v2956
  %v2958 = vpop.f32.mrf.mxu0
  %2959 = vmatprep.mubr.f32.mxu0 0.0
  %2960 = vmatmul.mubr.f32.gmra.mxu0 %v2842
  %v2961 = vpop.f32.mrf.mxu0
  %v2962 = vadd.f32 0.0, %v2961
  %v2963 = vpop.f32.mrf.mxu0
  %2964 = vmatprep.mubr.f32.mxu0 0.0
  %2965 = vmatmul.mubr.f32.gmra.mxu0 %v2845
  %v2966 = vpop.f32.mrf.mxu0
  %v2967 = vadd.f32 0.0, %v2966
  %v2968 = vpop.f32.mrf.mxu0
  %2969 = vmatprep.mubr.f32.mxu0 0.0
  %2970 = vmatmul.mubr.f32.gmra.mxu0 %v2848
  %v2971 = vpop.f32.mrf.mxu0
  %v2972 = vadd.f32 0.0, %v2971
  %v2973 = vpop.f32.mrf.mxu0
  %2974 = vmatprep.mubr.f32.mxu0 0.0
  %2975 = vmatmul.mubr.f32.gmra.mxu0 %v2851
  %v2976 = vpop.f32.mrf.mxu0
  %v2977 = vadd.f32 0.0, %v2976
  %v2978 = vpop.f32.mrf.mxu0
  %2979 = vmatprep.mubr.f32.mxu0 0.0
  %2980 = vmatmul.mubr.f32.gmra.mxu0 %v2854
  %v2981 = vpop.f32.mrf.mxu0
  %v2982 = vadd.f32 0.0, %v2981
  %v2983 = vpop.f32.mrf.mxu0
  %2984 = vmatprep.mubr.f32.mxu0 0.0
  %2985 = vmatmul.mubr.f32.gmra.mxu0 %v2857
  %v2986 = vpop.f32.mrf.mxu0
  %v2987 = vadd.f32 0.0, %v2986
  %v2988 = vpop.f32.mrf.mxu0
  %2989 = vmatprep.mubr.f32.mxu0 0.0
  %2990 = vmatmul.mubr.f32.gmra.mxu0 %v2860
  %v2991 = vpop.f32.mrf.mxu0
  %v2992 = vadd.f32 0.0, %v2991
  %v2993 = vpop.f32.mrf.mxu0
  %2994 = vmatprep.mubr.f32.mxu0 0.0
  %2995 = vmatmul.mubr.f32.gmra.mxu0 %v2863
  %v2996 = vpop.f32.mrf.mxu0
  %v2997 = vadd.f32 0.0, %v2996
  %v2998 = vpop.f32.mrf.mxu0
  %2999 = vmatprep.mubr.f32.mxu0 0.0
  %3000 = vmatmul.mubr.f32.gmra.mxu0 %v2866
  %v3001 = vpop.f32.mrf.mxu0
  %v3002 = vadd.f32 0.0, %v3001
  %v3003 = vpop.f32.mrf.mxu0
  %3004 = vmatprep.mubr.f32.mxu0 0.0
  %3005 = vmatmul.mubr.f32.gmra.mxu0 %v2869
  %v3006 = vpop.f32.mrf.mxu0
  %v3007 = vadd.f32 0.0, %v3006
  %v3008 = vpop.f32.mrf.mxu0
  %3009 = vmatprep.mubr.f32.mxu0 0.0
  %3010 = vmatmul.mubr.f32.gmra.mxu0 %v2872
  %v3011 = vpop.f32.mrf.mxu0
  %v3012 = vadd.f32 0.0, %v3011
  %v3013 = vpop.f32.mrf.mxu0
  %3014 = vmatprep.mubr.f32.mxu0 0.0
  %3015 = vmatmul.mubr.f32.gmra.mxu0 %v2875
  %v3016 = vpop.f32.mrf.mxu0
  %v3017 = vadd.f32 0.0, %v3016
  %v3018 = vpop.f32.mrf.mxu0
  %3019 = vmatprep.mubr.f32.mxu0 0.0
  %3020 = vmatmul.mubr.f32.gmra.mxu0 %v2878
  %v3021 = vpop.f32.mrf.mxu0
  %v3022 = vadd.f32 0.0, %v3021
  %v3023 = vpop.f32.mrf.mxu0
  %3024 = vdwg.mxu0
  %v3025 = vadd.f32 %v2797, %v2947
  %v3026 = vadd.f32 %v2798, %v2952
  %v3027 = vadd.f32 %v2799, %v2957
  %v3028 = vadd.f32 %v2800, %v2962
  %v3029 = vadd.f32 %v2801, %v2967
  %v3030 = vadd.f32 %v2802, %v2972
  %v3031 = vadd.f32 %v2803, %v2977
  %v3032 = vadd.f32 %v2804, %v2982
  %v3033 = vadd.f32 %v2805, %v2987
  %v3034 = vadd.f32 %v2806, %v2992
  %v3035 = vadd.f32 %v2807, %v2997
  %v3036 = vadd.f32 %v2808, %v3002
  %v3037 = vadd.f32 %v2809, %v3007
  %v3038 = vadd.f32 %v2810, %v3012
  %v3039 = vadd.f32 %v2811, %v3017
  %v3040 = vadd.f32 %v2812, %v3022
  %v3041 = vld [vmem:[%s2145 + $0x1] sm:$0xff]
  %v3042 = vld [vmem:[%s2145 + $0x11] sm:$0xff]
  %v3043 = vld [vmem:[%s2145 + $0x21] sm:$0xff]
  %v3044 = vld [vmem:[%s2145 + $0x31] sm:$0xff]
  %v3045 = vld [vmem:[%s2145 + $0x41] sm:$0xff]
  %v3046 = vld [vmem:[%s2145 + $0x51] sm:$0xff]
  %v3047 = vld [vmem:[%s2145 + $0x61] sm:$0xff]
  %v3048 = vld [vmem:[%s2145 + $0x71] sm:$0xff]
  %v3049 = vld [vmem:[%s2145 + $0xa1] sm:$0xff]
  %v3050 = vld [vmem:[%s2145 + $0xb1] sm:$0xff]
  %v3051 = vld [vmem:[%s2145 + $0xc1] sm:$0xff]
  %v3052 = vld [vmem:[%s2145 + $0xd1] sm:$0xff]
  %v3053 = vld [vmem:[%s2145 + $0xe1] sm:$0xff]
  %v3054 = vld [vmem:[%s2145 + $0xf1] sm:$0xff]
  %v3055 = vld [vmem:[%s2145 + $0x101] sm:$0xff]
  %v3056 = vld [vmem:[%s2145 + $0x111] sm:$0xff]
  %s3057 = scalar_lea.vmem %s3, 64
  %v3058 = vld [vmem:[%s3057] sm:$0xff]
  %v3059 = vld [vmem:[%s3057 + $0x8] sm:$0xff]
  %v3061 = vsel %vm2103, %v3041, 0
  %v3064 = vsel %vm2103, %v3042, 0
  %v3067 = vsel %vm2103, %v3043, 0
  %v3070 = vsel %vm2103, %v3044, 0
  %v3073 = vsel %vm2103, %v3045, 0
  %v3076 = vsel %vm2103, %v3046, 0
  %v3079 = vsel %vm2103, %v3047, 0
  %v3082 = vsel %vm2103, %v3048, 0
  %v3085 = vsel %vm2103, %v3049, 0
  %v3088 = vsel %vm2103, %v3050, 0
  %v3091 = vsel %vm2103, %v3051, 0
  %v3094 = vsel %vm2103, %v3052, 0
  %v3097 = vsel %vm2103, %v3053, 0
  %v3100 = vsel %vm2103, %v3054, 0
  %v3103 = vsel %vm2103, %v3055, 0
  %v3106 = vsel %vm2103, %v3056, 0
  %3108 = vmatprep.subr.mxu0 0.0
  %3109 = vmatpush1.msra.mxu0 0.0
  %3110 = vmatprep.subr.mxu0 0.0
  %3111 = vmatpush1.msra.mxu0 0.0
  %3112 = vmatprep.subr.mxu0 0.0
  %3113 = vmatpush1.msra.mxu0 0.0
  %3114 = vmatprep.subr.mxu0 0.0
  %3115 = vmatpush1.msra.mxu0 0.0
  %3116 = vmatprep.subr.mxu0 0.0
  %3117 = vmatpush1.msra.mxu0 0.0
  %3118 = vmatprep.subr.mxu0 0.0
  %3119 = vmatpush1.msra.mxu0 0.0
  %3120 = vmatprep.subr.mxu0 0.0
  %3121 = vmatpush1.msra.mxu0 0.0
  %3122 = vmatprep.subr.mxu0 0.0
  %3123 = vmatpush1.msra.mxu0 0.0
  %3124 = vmatprep.subr.mxu0 0.0
  %3125 = vmatpush1.msra.mxu0 0.0
  %3126 = vmatprep.subr.mxu0 0.0
  %3127 = vmatpush1.msra.mxu0 0.0
  %3128 = vmatprep.subr.mxu0 0.0
  %3129 = vmatpush1.msra.mxu0 0.0
  %3130 = vmatprep.subr.mxu0 0.0
  %3131 = vmatpush1.msra.mxu0 0.0
  %3132 = vmatprep.subr.mxu0 0.0
  %3133 = vmatpush1.msra.mxu0 0.0
  %3134 = vmatprep.subr.mxu0 0.0
  %3135 = vmatpush1.msra.mxu0 0.0
  %3136 = vmatprep.subr.mxu0 0.0
  %3137 = vmatpush1.msra.mxu0 %v3059
  %3138 = vmatprep.subr.mxu0 0.0
  %3139 = vmatpush1.msra.mxu0 %v3058
  %3140 = vmatprep.subr.mxu0 0.0
  %3141 = vmatpush2.msra.mxu0 0.0
  %3142 = vmatprep.subr.mxu0 0.0
  %3143 = vmatpush2.msra.mxu0 0.0
  %3144 = vmatprep.subr.mxu0 0.0
  %3145 = vmatpush2.msra.mxu0 0.0
  %3146 = vmatprep.subr.mxu0 0.0
  %3147 = vmatpush2.msra.mxu0 0.0
  %3148 = vmatprep.subr.mxu0 0.0
  %3149 = vmatpush2.msra.mxu0 0.0
  %3150 = vmatprep.subr.mxu0 0.0
  %3151 = vmatpush2.msra.mxu0 0.0
  %3152 = vmatprep.subr.mxu0 0.0
  %3153 = vmatpush2.msra.mxu0 0.0
  %3154 = vmatprep.subr.mxu0 0.0
  %3155 = vmatpush2.msra.mxu0 0.0
  %3156 = vmatprep.subr.mxu0 0.0
  %3157 = vmatpush2.msra.mxu0 0.0
  %3158 = vmatprep.subr.mxu0 0.0
  %3159 = vmatpush2.msra.mxu0 0.0
  %3160 = vmatprep.subr.mxu0 0.0
  %3161 = vmatpush2.msra.mxu0 0.0
  %3162 = vmatprep.subr.mxu0 0.0
  %3163 = vmatpush2.msra.mxu0 0.0
  %3164 = vmatprep.subr.mxu0 0.0
  %3165 = vmatpush2.msra.mxu0 0.0
  %3166 = vmatprep.subr.mxu0 0.0
  %3167 = vmatpush2.msra.mxu0 0.0
  %3168 = vmatprep.subr.mxu0 0.0
  %3169 = vmatpush2.msra.mxu0 0.0
  %3170 = vmatprep.subr.mxu0 0.0
  %3171 = vmatpush2.msra.mxu0 0.0
  %3172 = vmatprep.mubr.f32.mxu0 0.0
  %3173 = vmatmul.mubr.f32.gmra.mxu0 %v3061
  %v3174 = vpop.f32.mrf.mxu0
  %v3175 = vadd.f32 0.0, %v3174
  %v3176 = vpop.f32.mrf.mxu0
  %3177 = vmatprep.mubr.f32.mxu0 0.0
  %3178 = vmatmul.mubr.f32.gmra.mxu0 %v3064
  %v3179 = vpop.f32.mrf.mxu0
  %v3180 = vadd.f32 0.0, %v3179
  %v3181 = vpop.f32.mrf.mxu0
  %3182 = vmatprep.mubr.f32.mxu0 0.0
  %3183 = vmatmul.mubr.f32.gmra.mxu0 %v3067
  %v3184 = vpop.f32.mrf.mxu0
  %v3185 = vadd.f32 0.0, %v3184
  %v3186 = vpop.f32.mrf.mxu0
  %3187 = vmatprep.mubr.f32.mxu0 0.0
  %3188 = vmatmul.mubr.f32.gmra.mxu0 %v3070
  %v3189 = vpop.f32.mrf.mxu0
  %v3190 = vadd.f32 0.0, %v3189
  %v3191 = vpop.f32.mrf.mxu0
  %3192 = vmatprep.mubr.f32.mxu0 0.0
  %3193 = vmatmul.mubr.f32.gmra.mxu0 %v3073
  %v3194 = vpop.f32.mrf.mxu0
  %v3195 = vadd.f32 0.0, %v3194
  %v3196 = vpop.f32.mrf.mxu0
  %3197 = vmatprep.mubr.f32.mxu0 0.0
  %3198 = vmatmul.mubr.f32.gmra.mxu0 %v3076
  %v3199 = vpop.f32.mrf.mxu0
  %v3200 = vadd.f32 0.0, %v3199
  %v3201 = vpop.f32.mrf.mxu0
  %3202 = vmatprep.mubr.f32.mxu0 0.0
  %3203 = vmatmul.mubr.f32.gmra.mxu0 %v3079
  %v3204 = vpop.f32.mrf.mxu0
  %v3205 = vadd.f32 0.0, %v3204
  %v3206 = vpop.f32.mrf.mxu0
  %3207 = vmatprep.mubr.f32.mxu0 0.0
  %3208 = vmatmul.mubr.f32.gmra.mxu0 %v3082
  %v3209 = vpop.f32.mrf.mxu0
  %v3210 = vadd.f32 0.0, %v3209
  %v3211 = vpop.f32.mrf.mxu0
  %3212 = vmatprep.mubr.f32.mxu0 0.0
  %3213 = vmatmul.mubr.f32.gmra.mxu0 %v3085
  %v3214 = vpop.f32.mrf.mxu0
  %v3215 = vadd.f32 0.0, %v3214
  %v3216 = vpop.f32.mrf.mxu0
  %3217 = vmatprep.mubr.f32.mxu0 0.0
  %3218 = vmatmul.mubr.f32.gmra.mxu0 %v3088
  %v3219 = vpop.f32.mrf.mxu0
  %v3220 = vadd.f32 0.0, %v3219
  %v3221 = vpop.f32.mrf.mxu0
  %3222 = vmatprep.mubr.f32.mxu0 0.0
  %3223 = vmatmul.mubr.f32.gmra.mxu0 %v3091
  %v3224 = vpop.f32.mrf.mxu0
  %v3225 = vadd.f32 0.0, %v3224
  %v3226 = vpop.f32.mrf.mxu0
  %3227 = vmatprep.mubr.f32.mxu0 0.0
  %3228 = vmatmul.mubr.f32.gmra.mxu0 %v3094
  %v3229 = vpop.f32.mrf.mxu0
  %v3230 = vadd.f32 0.0, %v3229
  %v3231 = vpop.f32.mrf.mxu0
  %3232 = vmatprep.mubr.f32.mxu0 0.0
  %3233 = vmatmul.mubr.f32.gmra.mxu0 %v3097
  %v3234 = vpop.f32.mrf.mxu0
  %v3235 = vadd.f32 0.0, %v3234
  %v3236 = vpop.f32.mrf.mxu0
  %3237 = vmatprep.mubr.f32.mxu0 0.0
  %3238 = vmatmul.mubr.f32.gmra.mxu0 %v3100
  %v3239 = vpop.f32.mrf.mxu0
  %v3240 = vadd.f32 0.0, %v3239
  %v3241 = vpop.f32.mrf.mxu0
  %3242 = vmatprep.mubr.f32.mxu0 0.0
  %3243 = vmatmul.mubr.f32.gmra.mxu0 %v3103
  %v3244 = vpop.f32.mrf.mxu0
  %v3245 = vadd.f32 0.0, %v3244
  %v3246 = vpop.f32.mrf.mxu0
  %3247 = vmatprep.mubr.f32.mxu0 0.0
  %3248 = vmatmul.mubr.f32.gmra.mxu0 %v3106
  %v3249 = vpop.f32.mrf.mxu0
  %v3250 = vadd.f32 0.0, %v3249
  %v3251 = vpop.f32.mrf.mxu0
  %3252 = vdwg.mxu0
  %v3253 = vadd.f32 %v3025, %v3175
  %v3254 = vadd.f32 %v3026, %v3180
  %v3255 = vadd.f32 %v3027, %v3185
  %v3256 = vadd.f32 %v3028, %v3190
  %v3257 = vadd.f32 %v3029, %v3195
  %v3258 = vadd.f32 %v3030, %v3200
  %v3259 = vadd.f32 %v3031, %v3205
  %v3260 = vadd.f32 %v3032, %v3210
  %v3261 = vadd.f32 %v3033, %v3215
  %v3262 = vadd.f32 %v3034, %v3220
  %v3263 = vadd.f32 %v3035, %v3225
  %v3264 = vadd.f32 %v3036, %v3230
  %v3265 = vadd.f32 %v3037, %v3235
  %v3266 = vadd.f32 %v3038, %v3240
  %v3267 = vadd.f32 %v3039, %v3245
  %v3268 = vadd.f32 %v3040, %v3250
  %v3269 = vld [vmem:[%s2145 + $0x2] sm:$0xff]
  %v3270 = vld [vmem:[%s2145 + $0x12] sm:$0xff]
  %v3271 = vld [vmem:[%s2145 + $0x22] sm:$0xff]
  %v3272 = vld [vmem:[%s2145 + $0x32] sm:$0xff]
  %v3273 = vld [vmem:[%s2145 + $0x42] sm:$0xff]
  %v3274 = vld [vmem:[%s2145 + $0x52] sm:$0xff]
  %v3275 = vld [vmem:[%s2145 + $0x62] sm:$0xff]
  %v3276 = vld [vmem:[%s2145 + $0x72] sm:$0xff]
  %v3277 = vld [vmem:[%s2145 + $0xa2] sm:$0xff]
  %v3278 = vld [vmem:[%s2145 + $0xb2] sm:$0xff]
  %v3279 = vld [vmem:[%s2145 + $0xc2] sm:$0xff]
  %v3280 = vld [vmem:[%s2145 + $0xd2] sm:$0xff]
  %v3281 = vld [vmem:[%s2145 + $0xe2] sm:$0xff]
  %v3282 = vld [vmem:[%s2145 + $0xf2] sm:$0xff]
  %v3283 = vld [vmem:[%s2145 + $0x102] sm:$0xff]
  %v3284 = vld [vmem:[%s2145 + $0x112] sm:$0xff]
  %s3285 = scalar_lea.vmem %s3, 80
  %v3286 = vld [vmem:[%s3285] sm:$0xff]
  %v3287 = vld [vmem:[%s3285 + $0x8] sm:$0xff]
  %v3289 = vsel %vm2103, %v3269, 0
  %v3292 = vsel %vm2103, %v3270, 0
  %v3295 = vsel %vm2103, %v3271, 0
  %v3298 = vsel %vm2103, %v3272, 0
  %v3301 = vsel %vm2103, %v3273, 0
  %v3304 = vsel %vm2103, %v3274, 0
  %v3307 = vsel %vm2103, %v3275, 0
  %v3310 = vsel %vm2103, %v3276, 0
  %v3313 = vsel %vm2103, %v3277, 0
  %v3316 = vsel %vm2103, %v3278, 0
  %v3319 = vsel %vm2103, %v3279, 0
  %v3322 = vsel %vm2103, %v3280, 0
  %v3325 = vsel %vm2103, %v3281, 0
  %v3328 = vsel %vm2103, %v3282, 0
  %v3331 = vsel %vm2103, %v3283, 0
  %v3334 = vsel %vm2103, %v3284, 0
  %3336 = vmatprep.subr.mxu0 0.0
  %3337 = vmatpush1.msra.mxu0 0.0
  %3338 = vmatprep.subr.mxu0 0.0
  %3339 = vmatpush1.msra.mxu0 0.0
  %3340 = vmatprep.subr.mxu0 0.0
  %3341 = vmatpush1.msra.mxu0 0.0
  %3342 = vmatprep.subr.mxu0 0.0
  %3343 = vmatpush1.msra.mxu0 0.0
  %3344 = vmatprep.subr.mxu0 0.0
  %3345 = vmatpush1.msra.mxu0 0.0
  %3346 = vmatprep.subr.mxu0 0.0
  %3347 = vmatpush1.msra.mxu0 0.0
  %3348 = vmatprep.subr.mxu0 0.0
  %3349 = vmatpush1.msra.mxu0 0.0
  %3350 = vmatprep.subr.mxu0 0.0
  %3351 = vmatpush1.msra.mxu0 0.0
  %3352 = vmatprep.subr.mxu0 0.0
  %3353 = vmatpush1.msra.mxu0 0.0
  %3354 = vmatprep.subr.mxu0 0.0
  %3355 = vmatpush1.msra.mxu0 0.0
  %3356 = vmatprep.subr.mxu0 0.0
  %3357 = vmatpush1.msra.mxu0 0.0
  %3358 = vmatprep.subr.mxu0 0.0
  %3359 = vmatpush1.msra.mxu0 0.0
  %3360 = vmatprep.subr.mxu0 0.0
  %3361 = vmatpush1.msra.mxu0 0.0
  %3362 = vmatprep.subr.mxu0 0.0
  %3363 = vmatpush1.msra.mxu0 0.0
  %3364 = vmatprep.subr.mxu0 0.0
  %3365 = vmatpush1.msra.mxu0 %v3287
  %3366 = vmatprep.subr.mxu0 0.0
  %3367 = vmatpush1.msra.mxu0 %v3286
  %3368 = vmatprep.subr.mxu0 0.0
  %3369 = vmatpush2.msra.mxu0 0.0
  %3370 = vmatprep.subr.mxu0 0.0
  %3371 = vmatpush2.msra.mxu0 0.0
  %3372 = vmatprep.subr.mxu0 0.0
  %3373 = vmatpush2.msra.mxu0 0.0
  %3374 = vmatprep.subr.mxu0 0.0
  %3375 = vmatpush2.msra.mxu0 0.0
  %3376 = vmatprep.subr.mxu0 0.0
  %3377 = vmatpush2.msra.mxu0 0.0
  %3378 = vmatprep.subr.mxu0 0.0
  %3379 = vmatpush2.msra.mxu0 0.0
  %3380 = vmatprep.subr.mxu0 0.0
  %3381 = vmatpush2.msra.mxu0 0.0
  %3382 = vmatprep.subr.mxu0 0.0
  %3383 = vmatpush2.msra.mxu0 0.0
  %3384 = vmatprep.subr.mxu0 0.0
  %3385 = vmatpush2.msra.mxu0 0.0
  %3386 = vmatprep.subr.mxu0 0.0
  %3387 = vmatpush2.msra.mxu0 0.0
  %3388 = vmatprep.subr.mxu0 0.0
  %3389 = vmatpush2.msra.mxu0 0.0
  %3390 = vmatprep.subr.mxu0 0.0
  %3391 = vmatpush2.msra.mxu0 0.0
  %3392 = vmatprep.subr.mxu0 0.0
  %3393 = vmatpush2.msra.mxu0 0.0
  %3394 = vmatprep.subr.mxu0 0.0
  %3395 = vmatpush2.msra.mxu0 0.0
  %3396 = vmatprep.subr.mxu0 0.0
  %3397 = vmatpush2.msra.mxu0 0.0
  %3398 = vmatprep.subr.mxu0 0.0
  %3399 = vmatpush2.msra.mxu0 0.0
  %3400 = vmatprep.mubr.f32.mxu0 0.0
  %3401 = vmatmul.mubr.f32.gmra.mxu0 %v3289
  %v3402 = vpop.f32.mrf.mxu0
  %v3403 = vadd.f32 0.0, %v3402
  %v3404 = vpop.f32.mrf.mxu0
  %3405 = vmatprep.mubr.f32.mxu0 0.0
  %3406 = vmatmul.mubr.f32.gmra.mxu0 %v3292
  %v3407 = vpop.f32.mrf.mxu0
  %v3408 = vadd.f32 0.0, %v3407
  %v3409 = vpop.f32.mrf.mxu0
  %3410 = vmatprep.mubr.f32.mxu0 0.0
  %3411 = vmatmul.mubr.f32.gmra.mxu0 %v3295
  %v3412 = vpop.f32.mrf.mxu0
  %v3413 = vadd.f32 0.0, %v3412
  %v3414 = vpop.f32.mrf.mxu0
  %3415 = vmatprep.mubr.f32.mxu0 0.0
  %3416 = vmatmul.mubr.f32.gmra.mxu0 %v3298
  %v3417 = vpop.f32.mrf.mxu0
  %v3418 = vadd.f32 0.0, %v3417
  %v3419 = vpop.f32.mrf.mxu0
  %3420 = vmatprep.mubr.f32.mxu0 0.0
  %3421 = vmatmul.mubr.f32.gmra.mxu0 %v3301
  %v3422 = vpop.f32.mrf.mxu0
  %v3423 = vadd.f32 0.0, %v3422
  %v3424 = vpop.f32.mrf.mxu0
  %3425 = vmatprep.mubr.f32.mxu0 0.0
  %3426 = vmatmul.mubr.f32.gmra.mxu0 %v3304
  %v3427 = vpop.f32.mrf.mxu0
  %v3428 = vadd.f32 0.0, %v3427
  %v3429 = vpop.f32.mrf.mxu0
  %3430 = vmatprep.mubr.f32.mxu0 0.0
  %3431 = vmatmul.mubr.f32.gmra.mxu0 %v3307
  %v3432 = vpop.f32.mrf.mxu0
  %v3433 = vadd.f32 0.0, %v3432
  %v3434 = vpop.f32.mrf.mxu0
  %3435 = vmatprep.mubr.f32.mxu0 0.0
  %3436 = vmatmul.mubr.f32.gmra.mxu0 %v3310
  %v3437 = vpop.f32.mrf.mxu0
  %v3438 = vadd.f32 0.0, %v3437
  %v3439 = vpop.f32.mrf.mxu0
  %3440 = vmatprep.mubr.f32.mxu0 0.0
  %3441 = vmatmul.mubr.f32.gmra.mxu0 %v3313
  %v3442 = vpop.f32.mrf.mxu0
  %v3443 = vadd.f32 0.0, %v3442
  %v3444 = vpop.f32.mrf.mxu0
  %3445 = vmatprep.mubr.f32.mxu0 0.0
  %3446 = vmatmul.mubr.f32.gmra.mxu0 %v3316
  %v3447 = vpop.f32.mrf.mxu0
  %v3448 = vadd.f32 0.0, %v3447
  %v3449 = vpop.f32.mrf.mxu0
  %3450 = vmatprep.mubr.f32.mxu0 0.0
  %3451 = vmatmul.mubr.f32.gmra.mxu0 %v3319
  %v3452 = vpop.f32.mrf.mxu0
  %v3453 = vadd.f32 0.0, %v3452
  %v3454 = vpop.f32.mrf.mxu0
  %3455 = vmatprep.mubr.f32.mxu0 0.0
  %3456 = vmatmul.mubr.f32.gmra.mxu0 %v3322
  %v3457 = vpop.f32.mrf.mxu0
  %v3458 = vadd.f32 0.0, %v3457
  %v3459 = vpop.f32.mrf.mxu0
  %3460 = vmatprep.mubr.f32.mxu0 0.0
  %3461 = vmatmul.mubr.f32.gmra.mxu0 %v3325
  %v3462 = vpop.f32.mrf.mxu0
  %v3463 = vadd.f32 0.0, %v3462
  %v3464 = vpop.f32.mrf.mxu0
  %3465 = vmatprep.mubr.f32.mxu0 0.0
  %3466 = vmatmul.mubr.f32.gmra.mxu0 %v3328
  %v3467 = vpop.f32.mrf.mxu0
  %v3468 = vadd.f32 0.0, %v3467
  %v3469 = vpop.f32.mrf.mxu0
  %3470 = vmatprep.mubr.f32.mxu0 0.0
  %3471 = vmatmul.mubr.f32.gmra.mxu0 %v3331
  %v3472 = vpop.f32.mrf.mxu0
  %v3473 = vadd.f32 0.0, %v3472
  %v3474 = vpop.f32.mrf.mxu0
  %3475 = vmatprep.mubr.f32.mxu0 0.0
  %3476 = vmatmul.mubr.f32.gmra.mxu0 %v3334
  %v3477 = vpop.f32.mrf.mxu0
  %v3478 = vadd.f32 0.0, %v3477
  %v3479 = vpop.f32.mrf.mxu0
  %3480 = vdwg.mxu0
  %v3481 = vadd.f32 %v3253, %v3403
  %v3482 = vadd.f32 %v3254, %v3408
  %v3483 = vadd.f32 %v3255, %v3413
  %v3484 = vadd.f32 %v3256, %v3418
  %v3485 = vadd.f32 %v3257, %v3423
  %v3486 = vadd.f32 %v3258, %v3428
  %v3487 = vadd.f32 %v3259, %v3433
  %v3488 = vadd.f32 %v3260, %v3438
  %v3489 = vadd.f32 %v3261, %v3443
  %v3490 = vadd.f32 %v3262, %v3448
  %v3491 = vadd.f32 %v3263, %v3453
  %v3492 = vadd.f32 %v3264, %v3458
  %v3493 = vadd.f32 %v3265, %v3463
  %v3494 = vadd.f32 %v3266, %v3468
  %v3495 = vadd.f32 %v3267, %v3473
  %v3496 = vadd.f32 %v3268, %v3478
  %s3497 = scalar_lea.vmem [#allocation2], 32
  %v3498 = vld [vmem:[%s3497] sm:$0xff]
  %v3499 = vld [vmem:[%s3497 + $0x10] sm:$0xff]
  %v3500 = vld [vmem:[%s3497 + $0x20] sm:$0xff]
  %v3501 = vld [vmem:[%s3497 + $0x30] sm:$0xff]
  %v3502 = vld [vmem:[%s3497 + $0x40] sm:$0xff]
  %v3503 = vld [vmem:[%s3497 + $0x50] sm:$0xff]
  %v3504 = vld [vmem:[%s3497 + $0x60] sm:$0xff]
  %v3505 = vld [vmem:[%s3497 + $0x70] sm:$0xff]
  %v3506 = vld [vmem:[%s3497 + $0xa0] sm:$0xff]
  %v3507 = vld [vmem:[%s3497 + $0xb0] sm:$0xff]
  %v3508 = vld [vmem:[%s3497 + $0xc0] sm:$0xff]
  %v3509 = vld [vmem:[%s3497 + $0xd0] sm:$0xff]
  %v3510 = vld [vmem:[%s3497 + $0xe0] sm:$0xff]
  %v3511 = vld [vmem:[%s3497 + $0xf0] sm:$0xff]
  %v3512 = vld [vmem:[%s3497 + $0x100] sm:$0xff]
  %v3513 = vld [vmem:[%s3497 + $0x110] sm:$0xff]
  %s3514 = scalar_lea.vmem %s3, 96
  %v3515 = vld [vmem:[%s3514] sm:$0xff]
  %v3516 = vld [vmem:[%s3514 + $0x8] sm:$0xff]
  %v3518 = vsel %vm2103, %v3498, 0
  %v3521 = vsel %vm2103, %v3499, 0
  %v3524 = vsel %vm2103, %v3500, 0
  %v3527 = vsel %vm2103, %v3501, 0
  %v3530 = vsel %vm2103, %v3502, 0
  %v3533 = vsel %vm2103, %v3503, 0
  %v3536 = vsel %vm2103, %v3504, 0
  %v3539 = vsel %vm2103, %v3505, 0
  %v3542 = vsel %vm2103, %v3506, 0
  %v3545 = vsel %vm2103, %v3507, 0
  %v3548 = vsel %vm2103, %v3508, 0
  %v3551 = vsel %vm2103, %v3509, 0
  %v3554 = vsel %vm2103, %v3510, 0
  %v3557 = vsel %vm2103, %v3511, 0
  %v3560 = vsel %vm2103, %v3512, 0
  %v3563 = vsel %vm2103, %v3513, 0
  %3565 = vmatprep.subr.mxu0 0.0
  %3566 = vmatpush1.msra.mxu0 0.0
  %3567 = vmatprep.subr.mxu0 0.0
  %3568 = vmatpush1.msra.mxu0 0.0
  %3569 = vmatprep.subr.mxu0 0.0
  %3570 = vmatpush1.msra.mxu0 0.0
  %3571 = vmatprep.subr.mxu0 0.0
  %3572 = vmatpush1.msra.mxu0 0.0
  %3573 = vmatprep.subr.mxu0 0.0
  %3574 = vmatpush1.msra.mxu0 0.0
  %3575 = vmatprep.subr.mxu0 0.0
  %3576 = vmatpush1.msra.mxu0 0.0
  %3577 = vmatprep.subr.mxu0 0.0
  %3578 = vmatpush1.msra.mxu0 0.0
  %3579 = vmatprep.subr.mxu0 0.0
  %3580 = vmatpush1.msra.mxu0 0.0
  %3581 = vmatprep.subr.mxu0 0.0
  %3582 = vmatpush1.msra.mxu0 0.0
  %3583 = vmatprep.subr.mxu0 0.0
  %3584 = vmatpush1.msra.mxu0 0.0
  %3585 = vmatprep.subr.mxu0 0.0
  %3586 = vmatpush1.msra.mxu0 0.0
  %3587 = vmatprep.subr.mxu0 0.0
  %3588 = vmatpush1.msra.mxu0 0.0
  %3589 = vmatprep.subr.mxu0 0.0
  %3590 = vmatpush1.msra.mxu0 0.0
  %3591 = vmatprep.subr.mxu0 0.0
  %3592 = vmatpush1.msra.mxu0 0.0
  %3593 = vmatprep.subr.mxu0 0.0
  %3594 = vmatpush1.msra.mxu0 %v3516
  %3595 = vmatprep.subr.mxu0 0.0
  %3596 = vmatpush1.msra.mxu0 %v3515
  %3597 = vmatprep.subr.mxu0 0.0
  %3598 = vmatpush2.msra.mxu0 0.0
  %3599 = vmatprep.subr.mxu0 0.0
  %3600 = vmatpush2.msra.mxu0 0.0
  %3601 = vmatprep.subr.mxu0 0.0
  %3602 = vmatpush2.msra.mxu0 0.0
  %3603 = vmatprep.subr.mxu0 0.0
  %3604 = vmatpush2.msra.mxu0 0.0
  %3605 = vmatprep.subr.mxu0 0.0
  %3606 = vmatpush2.msra.mxu0 0.0
  %3607 = vmatprep.subr.mxu0 0.0
  %3608 = vmatpush2.msra.mxu0 0.0
  %3609 = vmatprep.subr.mxu0 0.0
  %3610 = vmatpush2.msra.mxu0 0.0
  %3611 = vmatprep.subr.mxu0 0.0
  %3612 = vmatpush2.msra.mxu0 0.0
  %3613 = vmatprep.subr.mxu0 0.0
  %3614 = vmatpush2.msra.mxu0 0.0
  %3615 = vmatprep.subr.mxu0 0.0
  %3616 = vmatpush2.msra.mxu0 0.0
  %3617 = vmatprep.subr.mxu0 0.0
  %3618 = vmatpush2.msra.mxu0 0.0
  %3619 = vmatprep.subr.mxu0 0.0
  %3620 = vmatpush2.msra.mxu0 0.0
  %3621 = vmatprep.subr.mxu0 0.0
  %3622 = vmatpush2.msra.mxu0 0.0
  %3623 = vmatprep.subr.mxu0 0.0
  %3624 = vmatpush2.msra.mxu0 0.0
  %3625 = vmatprep.subr.mxu0 0.0
  %3626 = vmatpush2.msra.mxu0 0.0
  %3627 = vmatprep.subr.mxu0 0.0
  %3628 = vmatpush2.msra.mxu0 0.0
  %3629 = vmatprep.mubr.f32.mxu0 0.0
  %3630 = vmatmul.mubr.f32.gmra.mxu0 %v3518
  %v3631 = vpop.f32.mrf.mxu0
  %v3632 = vadd.f32 0.0, %v3631
  %v3633 = vpop.f32.mrf.mxu0
  %3634 = vmatprep.mubr.f32.mxu0 0.0
  %3635 = vmatmul.mubr.f32.gmra.mxu0 %v3521
  %v3636 = vpop.f32.mrf.mxu0
  %v3637 = vadd.f32 0.0, %v3636
  %v3638 = vpop.f32.mrf.mxu0
  %3639 = vmatprep.mubr.f32.mxu0 0.0
  %3640 = vmatmul.mubr.f32.gmra.mxu0 %v3524
  %v3641 = vpop.f32.mrf.mxu0
  %v3642 = vadd.f32 0.0, %v3641
  %v3643 = vpop.f32.mrf.mxu0
  %3644 = vmatprep.mubr.f32.mxu0 0.0
  %3645 = vmatmul.mubr.f32.gmra.mxu0 %v3527
  %v3646 = vpop.f32.mrf.mxu0
  %v3647 = vadd.f32 0.0, %v3646
  %v3648 = vpop.f32.mrf.mxu0
  %3649 = vmatprep.mubr.f32.mxu0 0.0
  %3650 = vmatmul.mubr.f32.gmra.mxu0 %v3530
  %v3651 = vpop.f32.mrf.mxu0
  %v3652 = vadd.f32 0.0, %v3651
  %v3653 = vpop.f32.mrf.mxu0
  %3654 = vmatprep.mubr.f32.mxu0 0.0
  %3655 = vmatmul.mubr.f32.gmra.mxu0 %v3533
  %v3656 = vpop.f32.mrf.mxu0
  %v3657 = vadd.f32 0.0, %v3656
  %v3658 = vpop.f32.mrf.mxu0
  %3659 = vmatprep.mubr.f32.mxu0 0.0
  %3660 = vmatmul.mubr.f32.gmra.mxu0 %v3536
  %v3661 = vpop.f32.mrf.mxu0
  %v3662 = vadd.f32 0.0, %v3661
  %v3663 = vpop.f32.mrf.mxu0
  %3664 = vmatprep.mubr.f32.mxu0 0.0
  %3665 = vmatmul.mubr.f32.gmra.mxu0 %v3539
  %v3666 = vpop.f32.mrf.mxu0
  %v3667 = vadd.f32 0.0, %v3666
  %v3668 = vpop.f32.mrf.mxu0
  %3669 = vmatprep.mubr.f32.mxu0 0.0
  %3670 = vmatmul.mubr.f32.gmra.mxu0 %v3542
  %v3671 = vpop.f32.mrf.mxu0
  %v3672 = vadd.f32 0.0, %v3671
  %v3673 = vpop.f32.mrf.mxu0
  %3674 = vmatprep.mubr.f32.mxu0 0.0
  %3675 = vmatmul.mubr.f32.gmra.mxu0 %v3545
  %v3676 = vpop.f32.mrf.mxu0
  %v3677 = vadd.f32 0.0, %v3676
  %v3678 = vpop.f32.mrf.mxu0
  %3679 = vmatprep.mubr.f32.mxu0 0.0
  %3680 = vmatmul.mubr.f32.gmra.mxu0 %v3548
  %v3681 = vpop.f32.mrf.mxu0
  %v3682 = vadd.f32 0.0, %v3681
  %v3683 = vpop.f32.mrf.mxu0
  %3684 = vmatprep.mubr.f32.mxu0 0.0
  %3685 = vmatmul.mubr.f32.gmra.mxu0 %v3551
  %v3686 = vpop.f32.mrf.mxu0
  %v3687 = vadd.f32 0.0, %v3686
  %v3688 = vpop.f32.mrf.mxu0
  %3689 = vmatprep.mubr.f32.mxu0 0.0
  %3690 = vmatmul.mubr.f32.gmra.mxu0 %v3554
  %v3691 = vpop.f32.mrf.mxu0
  %v3692 = vadd.f32 0.0, %v3691
  %v3693 = vpop.f32.mrf.mxu0
  %3694 = vmatprep.mubr.f32.mxu0 0.0
  %3695 = vmatmul.mubr.f32.gmra.mxu0 %v3557
  %v3696 = vpop.f32.mrf.mxu0
  %v3697 = vadd.f32 0.0, %v3696
  %v3698 = vpop.f32.mrf.mxu0
  %3699 = vmatprep.mubr.f32.mxu0 0.0
  %3700 = vmatmul.mubr.f32.gmra.mxu0 %v3560
  %v3701 = vpop.f32.mrf.mxu0
  %v3702 = vadd.f32 0.0, %v3701
  %v3703 = vpop.f32.mrf.mxu0
  %3704 = vmatprep.mubr.f32.mxu0 0.0
  %3705 = vmatmul.mubr.f32.gmra.mxu0 %v3563
  %v3706 = vpop.f32.mrf.mxu0
  %v3707 = vadd.f32 0.0, %v3706
  %v3708 = vpop.f32.mrf.mxu0
  %3709 = vdwg.mxu0
  %v3710 = vadd.f32 %v3481, %v3632
  %v3711 = vadd.f32 %v3482, %v3637
  %v3712 = vadd.f32 %v3483, %v3642
  %v3713 = vadd.f32 %v3484, %v3647
  %v3714 = vadd.f32 %v3485, %v3652
  %v3715 = vadd.f32 %v3486, %v3657
  %v3716 = vadd.f32 %v3487, %v3662
  %v3717 = vadd.f32 %v3488, %v3667
  %v3718 = vadd.f32 %v3489, %v3672
  %v3719 = vadd.f32 %v3490, %v3677
  %v3720 = vadd.f32 %v3491, %v3682
  %v3721 = vadd.f32 %v3492, %v3687
  %v3722 = vadd.f32 %v3493, %v3692
  %v3723 = vadd.f32 %v3494, %v3697
  %v3724 = vadd.f32 %v3495, %v3702
  %v3725 = vadd.f32 %v3496, %v3707
  %v3726 = vld [vmem:[%s3497 + $0x1] sm:$0xff]
  %v3727 = vld [vmem:[%s3497 + $0x11] sm:$0xff]
  %v3728 = vld [vmem:[%s3497 + $0x21] sm:$0xff]
  %v3729 = vld [vmem:[%s3497 + $0x31] sm:$0xff]
  %v3730 = vld [vmem:[%s3497 + $0x41] sm:$0xff]
  %v3731 = vld [vmem:[%s3497 + $0x51] sm:$0xff]
  %v3732 = vld [vmem:[%s3497 + $0x61] sm:$0xff]
  %v3733 = vld [vmem:[%s3497 + $0x71] sm:$0xff]
  %v3734 = vld [vmem:[%s3497 + $0xa1] sm:$0xff]
  %v3735 = vld [vmem:[%s3497 + $0xb1] sm:$0xff]
  %v3736 = vld [vmem:[%s3497 + $0xc1] sm:$0xff]
  %v3737 = vld [vmem:[%s3497 + $0xd1] sm:$0xff]
  %v3738 = vld [vmem:[%s3497 + $0xe1] sm:$0xff]
  %v3739 = vld [vmem:[%s3497 + $0xf1] sm:$0xff]
  %v3740 = vld [vmem:[%s3497 + $0x101] sm:$0xff]
  %v3741 = vld [vmem:[%s3497 + $0x111] sm:$0xff]
  %s3742 = scalar_lea.vmem %s3, 112
  %v3743 = vld [vmem:[%s3742] sm:$0xff]
  %v3744 = vld [vmem:[%s3742 + $0x8] sm:$0xff]
  %v3746 = vsel %vm2103, %v3726, 0
  %v3749 = vsel %vm2103, %v3727, 0
  %v3752 = vsel %vm2103, %v3728, 0
  %v3755 = vsel %vm2103, %v3729, 0
  %v3758 = vsel %vm2103, %v3730, 0
  %v3761 = vsel %vm2103, %v3731, 0
  %v3764 = vsel %vm2103, %v3732, 0
  %v3767 = vsel %vm2103, %v3733, 0
  %v3770 = vsel %vm2103, %v3734, 0
  %v3773 = vsel %vm2103, %v3735, 0
  %v3776 = vsel %vm2103, %v3736, 0
  %v3779 = vsel %vm2103, %v3737, 0
  %v3782 = vsel %vm2103, %v3738, 0
  %v3785 = vsel %vm2103, %v3739, 0
  %v3788 = vsel %vm2103, %v3740, 0
  %v3791 = vsel %vm2103, %v3741, 0
  %3793 = vmatprep.subr.mxu0 0.0
  %3794 = vmatpush1.msra.mxu0 0.0
  %3795 = vmatprep.subr.mxu0 0.0
  %3796 = vmatpush1.msra.mxu0 0.0
  %3797 = vmatprep.subr.mxu0 0.0
  %3798 = vmatpush1.msra.mxu0 0.0
  %3799 = vmatprep.subr.mxu0 0.0
  %3800 = vmatpush1.msra.mxu0 0.0
  %3801 = vmatprep.subr.mxu0 0.0
  %3802 = vmatpush1.msra.mxu0 0.0
  %3803 = vmatprep.subr.mxu0 0.0
  %3804 = vmatpush1.msra.mxu0 0.0
  %3805 = vmatprep.subr.mxu0 0.0
  %3806 = vmatpush1.msra.mxu0 0.0
  %3807 = vmatprep.subr.mxu0 0.0
  %3808 = vmatpush1.msra.mxu0 0.0
  %3809 = vmatprep.subr.mxu0 0.0
  %3810 = vmatpush1.msra.mxu0 0.0
  %3811 = vmatprep.subr.mxu0 0.0
  %3812 = vmatpush1.msra.mxu0 0.0
  %3813 = vmatprep.subr.mxu0 0.0
  %3814 = vmatpush1.msra.mxu0 0.0
  %3815 = vmatprep.subr.mxu0 0.0
  %3816 = vmatpush1.msra.mxu0 0.0
  %3817 = vmatprep.subr.mxu0 0.0
  %3818 = vmatpush1.msra.mxu0 0.0
  %3819 = vmatprep.subr.mxu0 0.0
  %3820 = vmatpush1.msra.mxu0 0.0
  %3821 = vmatprep.subr.mxu0 0.0
  %3822 = vmatpush1.msra.mxu0 %v3744
  %3823 = vmatprep.subr.mxu0 0.0
  %3824 = vmatpush1.msra.mxu0 %v3743
  %3825 = vmatprep.subr.mxu0 0.0
  %3826 = vmatpush2.msra.mxu0 0.0
  %3827 = vmatprep.subr.mxu0 0.0
  %3828 = vmatpush2.msra.mxu0 0.0
  %3829 = vmatprep.subr.mxu0 0.0
  %3830 = vmatpush2.msra.mxu0 0.0
  %3831 = vmatprep.subr.mxu0 0.0
  %3832 = vmatpush2.msra.mxu0 0.0
  %3833 = vmatprep.subr.mxu0 0.0
  %3834 = vmatpush2.msra.mxu0 0.0
  %3835 = vmatprep.subr.mxu0 0.0
  %3836 = vmatpush2.msra.mxu0 0.0
  %3837 = vmatprep.subr.mxu0 0.0
  %3838 = vmatpush2.msra.mxu0 0.0
  %3839 = vmatprep.subr.mxu0 0.0
  %3840 = vmatpush2.msra.mxu0 0.0
  %3841 = vmatprep.subr.mxu0 0.0
  %3842 = vmatpush2.msra.mxu0 0.0
  %3843 = vmatprep.subr.mxu0 0.0
  %3844 = vmatpush2.msra.mxu0 0.0
  %3845 = vmatprep.subr.mxu0 0.0
  %3846 = vmatpush2.msra.mxu0 0.0
  %3847 = vmatprep.subr.mxu0 0.0
  %3848 = vmatpush2.msra.mxu0 0.0
  %3849 = vmatprep.subr.mxu0 0.0
  %3850 = vmatpush2.msra.mxu0 0.0
  %3851 = vmatprep.subr.mxu0 0.0
  %3852 = vmatpush2.msra.mxu0 0.0
  %3853 = vmatprep.subr.mxu0 0.0
  %3854 = vmatpush2.msra.mxu0 0.0
  %3855 = vmatprep.subr.mxu0 0.0
  %3856 = vmatpush2.msra.mxu0 0.0
  %3857 = vmatprep.mubr.f32.mxu0 0.0
  %3858 = vmatmul.mubr.f32.gmra.mxu0 %v3746
  %v3859 = vpop.f32.mrf.mxu0
  %v3860 = vadd.f32 0.0, %v3859
  %v3861 = vpop.f32.mrf.mxu0
  %3862 = vmatprep.mubr.f32.mxu0 0.0
  %3863 = vmatmul.mubr.f32.gmra.mxu0 %v3749
  %v3864 = vpop.f32.mrf.mxu0
  %v3865 = vadd.f32 0.0, %v3864
  %v3866 = vpop.f32.mrf.mxu0
  %3867 = vmatprep.mubr.f32.mxu0 0.0
  %3868 = vmatmul.mubr.f32.gmra.mxu0 %v3752
  %v3869 = vpop.f32.mrf.mxu0
  %v3870 = vadd.f32 0.0, %v3869
  %v3871 = vpop.f32.mrf.mxu0
  %3872 = vmatprep.mubr.f32.mxu0 0.0
  %3873 = vmatmul.mubr.f32.gmra.mxu0 %v3755
  %v3874 = vpop.f32.mrf.mxu0
  %v3875 = vadd.f32 0.0, %v3874
  %v3876 = vpop.f32.mrf.mxu0
  %3877 = vmatprep.mubr.f32.mxu0 0.0
  %3878 = vmatmul.mubr.f32.gmra.mxu0 %v3758
  %v3879 = vpop.f32.mrf.mxu0
  %v3880 = vadd.f32 0.0, %v3879
  %v3881 = vpop.f32.mrf.mxu0
  %3882 = vmatprep.mubr.f32.mxu0 0.0
  %3883 = vmatmul.mubr.f32.gmra.mxu0 %v3761
  %v3884 = vpop.f32.mrf.mxu0
  %v3885 = vadd.f32 0.0, %v3884
  %v3886 = vpop.f32.mrf.mxu0
  %3887 = vmatprep.mubr.f32.mxu0 0.0
  %3888 = vmatmul.mubr.f32.gmra.mxu0 %v3764
  %v3889 = vpop.f32.mrf.mxu0
  %v3890 = vadd.f32 0.0, %v3889
  %v3891 = vpop.f32.mrf.mxu0
  %3892 = vmatprep.mubr.f32.mxu0 0.0
  %3893 = vmatmul.mubr.f32.gmra.mxu0 %v3767
  %v3894 = vpop.f32.mrf.mxu0
  %v3895 = vadd.f32 0.0, %v3894
  %v3896 = vpop.f32.mrf.mxu0
  %3897 = vmatprep.mubr.f32.mxu0 0.0
  %3898 = vmatmul.mubr.f32.gmra.mxu0 %v3770
  %v3899 = vpop.f32.mrf.mxu0
  %v3900 = vadd.f32 0.0, %v3899
  %v3901 = vpop.f32.mrf.mxu0
  %3902 = vmatprep.mubr.f32.mxu0 0.0
  %3903 = vmatmul.mubr.f32.gmra.mxu0 %v3773
  %v3904 = vpop.f32.mrf.mxu0
  %v3905 = vadd.f32 0.0, %v3904
  %v3906 = vpop.f32.mrf.mxu0
  %3907 = vmatprep.mubr.f32.mxu0 0.0
  %3908 = vmatmul.mubr.f32.gmra.mxu0 %v3776
  %v3909 = vpop.f32.mrf.mxu0
  %v3910 = vadd.f32 0.0, %v3909
  %v3911 = vpop.f32.mrf.mxu0
  %3912 = vmatprep.mubr.f32.mxu0 0.0
  %3913 = vmatmul.mubr.f32.gmra.mxu0 %v3779
  %v3914 = vpop.f32.mrf.mxu0
  %v3915 = vadd.f32 0.0, %v3914
  %v3916 = vpop.f32.mrf.mxu0
  %3917 = vmatprep.mubr.f32.mxu0 0.0
  %3918 = vmatmul.mubr.f32.gmra.mxu0 %v3782
  %v3919 = vpop.f32.mrf.mxu0
  %v3920 = vadd.f32 0.0, %v3919
  %v3921 = vpop.f32.mrf.mxu0
  %3922 = vmatprep.mubr.f32.mxu0 0.0
  %3923 = vmatmul.mubr.f32.gmra.mxu0 %v3785
  %v3924 = vpop.f32.mrf.mxu0
  %v3925 = vadd.f32 0.0, %v3924
  %v3926 = vpop.f32.mrf.mxu0
  %3927 = vmatprep.mubr.f32.mxu0 0.0
  %3928 = vmatmul.mubr.f32.gmra.mxu0 %v3788
  %v3929 = vpop.f32.mrf.mxu0
  %v3930 = vadd.f32 0.0, %v3929
  %v3931 = vpop.f32.mrf.mxu0
  %3932 = vmatprep.mubr.f32.mxu0 0.0
  %3933 = vmatmul.mubr.f32.gmra.mxu0 %v3791
  %v3934 = vpop.f32.mrf.mxu0
  %v3935 = vadd.f32 0.0, %v3934
  %v3936 = vpop.f32.mrf.mxu0
  %3937 = vdwg.mxu0
  %v3938 = vadd.f32 %v3710, %v3860
  %v3939 = vadd.f32 %v3711, %v3865
  %v3940 = vadd.f32 %v3712, %v3870
  %v3941 = vadd.f32 %v3713, %v3875
  %v3942 = vadd.f32 %v3714, %v3880
  %v3943 = vadd.f32 %v3715, %v3885
  %v3944 = vadd.f32 %v3716, %v3890
  %v3945 = vadd.f32 %v3717, %v3895
  %v3946 = vadd.f32 %v3718, %v3900
  %v3947 = vadd.f32 %v3719, %v3905
  %v3948 = vadd.f32 %v3720, %v3910
  %v3949 = vadd.f32 %v3721, %v3915
  %v3950 = vadd.f32 %v3722, %v3920
  %v3951 = vadd.f32 %v3723, %v3925
  %v3952 = vadd.f32 %v3724, %v3930
  %v3953 = vadd.f32 %v3725, %v3935
  %v3954 = vld [vmem:[%s3497 + $0x2] sm:$0xff]
  %v3955 = vld [vmem:[%s3497 + $0x12] sm:$0xff]
  %v3956 = vld [vmem:[%s3497 + $0x22] sm:$0xff]
  %v3957 = vld [vmem:[%s3497 + $0x32] sm:$0xff]
  %v3958 = vld [vmem:[%s3497 + $0x42] sm:$0xff]
  %v3959 = vld [vmem:[%s3497 + $0x52] sm:$0xff]
  %v3960 = vld [vmem:[%s3497 + $0x62] sm:$0xff]
  %v3961 = vld [vmem:[%s3497 + $0x72] sm:$0xff]
  %v3962 = vld [vmem:[%s3497 + $0xa2] sm:$0xff]
  %v3963 = vld [vmem:[%s3497 + $0xb2] sm:$0xff]
  %v3964 = vld [vmem:[%s3497 + $0xc2] sm:$0xff]
  %v3965 = vld [vmem:[%s3497 + $0xd2] sm:$0xff]
  %v3966 = vld [vmem:[%s3497 + $0xe2] sm:$0xff]
  %v3967 = vld [vmem:[%s3497 + $0xf2] sm:$0xff]
  %v3968 = vld [vmem:[%s3497 + $0x102] sm:$0xff]
  %v3969 = vld [vmem:[%s3497 + $0x112] sm:$0xff]
  %s3970 = scalar_lea.vmem %s3, 128
  %v3971 = vld [vmem:[%s3970] sm:$0xff]
  %v3972 = vld [vmem:[%s3970 + $0x8] sm:$0xff]
  %v3974 = vsel %vm2103, %v3954, 0
  %v3977 = vsel %vm2103, %v3955, 0
  %v3980 = vsel %vm2103, %v3956, 0
  %v3983 = vsel %vm2103, %v3957, 0
  %v3986 = vsel %vm2103, %v3958, 0
  %v3989 = vsel %vm2103, %v3959, 0
  %v3992 = vsel %vm2103, %v3960, 0
  %v3995 = vsel %vm2103, %v3961, 0
  %v3998 = vsel %vm2103, %v3962, 0
  %v4001 = vsel %vm2103, %v3963, 0
  %v4004 = vsel %vm2103, %v3964, 0
  %v4007 = vsel %vm2103, %v3965, 0
  %v4010 = vsel %vm2103, %v3966, 0
  %v4013 = vsel %vm2103, %v3967, 0
  %v4016 = vsel %vm2103, %v3968, 0
  %v4019 = vsel %vm2103, %v3969, 0
  %4021 = vmatprep.subr.mxu0 0.0
  %4022 = vmatpush1.msra.mxu0 0.0
  %4023 = vmatprep.subr.mxu0 0.0
  %4024 = vmatpush1.msra.mxu0 0.0
  %4025 = vmatprep.subr.mxu0 0.0
  %4026 = vmatpush1.msra.mxu0 0.0
  %4027 = vmatprep.subr.mxu0 0.0
  %4028 = vmatpush1.msra.mxu0 0.0
  %4029 = vmatprep.subr.mxu0 0.0
  %4030 = vmatpush1.msra.mxu0 0.0
  %4031 = vmatprep.subr.mxu0 0.0
  %4032 = vmatpush1.msra.mxu0 0.0
  %4033 = vmatprep.subr.mxu0 0.0
  %4034 = vmatpush1.msra.mxu0 0.0
  %4035 = vmatprep.subr.mxu0 0.0
  %4036 = vmatpush1.msra.mxu0 0.0
  %4037 = vmatprep.subr.mxu0 0.0
  %4038 = vmatpush1.msra.mxu0 0.0
  %4039 = vmatprep.subr.mxu0 0.0
  %4040 = vmatpush1.msra.mxu0 0.0
  %4041 = vmatprep.subr.mxu0 0.0
  %4042 = vmatpush1.msra.mxu0 0.0
  %4043 = vmatprep.subr.mxu0 0.0
  %4044 = vmatpush1.msra.mxu0 0.0
  %4045 = vmatprep.subr.mxu0 0.0
  %4046 = vmatpush1.msra.mxu0 0.0
  %4047 = vmatprep.subr.mxu0 0.0
  %4048 = vmatpush1.msra.mxu0 0.0
  %4049 = vmatprep.subr.mxu0 0.0
  %4050 = vmatpush1.msra.mxu0 %v3972
  %4051 = vmatprep.subr.mxu0 0.0
  %4052 = vmatpush1.msra.mxu0 %v3971
  %4053 = vmatprep.subr.mxu0 0.0
  %4054 = vmatpush2.msra.mxu0 0.0
  %4055 = vmatprep.subr.mxu0 0.0
  %4056 = vmatpush2.msra.mxu0 0.0
  %4057 = vmatprep.subr.mxu0 0.0
  %4058 = vmatpush2.msra.mxu0 0.0
  %4059 = vmatprep.subr.mxu0 0.0
  %4060 = vmatpush2.msra.mxu0 0.0
  %4061 = vmatprep.subr.mxu0 0.0
  %4062 = vmatpush2.msra.mxu0 0.0
  %4063 = vmatprep.subr.mxu0 0.0
  %4064 = vmatpush2.msra.mxu0 0.0
  %4065 = vmatprep.subr.mxu0 0.0
  %4066 = vmatpush2.msra.mxu0 0.0
  %4067 = vmatprep.subr.mxu0 0.0
  %4068 = vmatpush2.msra.mxu0 0.0
  %4069 = vmatprep.subr.mxu0 0.0
  %4070 = vmatpush2.msra.mxu0 0.0
  %4071 = vmatprep.subr.mxu0 0.0
  %4072 = vmatpush2.msra.mxu0 0.0
  %4073 = vmatprep.subr.mxu0 0.0
  %4074 = vmatpush2.msra.mxu0 0.0
  %4075 = vmatprep.subr.mxu0 0.0
  %4076 = vmatpush2.msra.mxu0 0.0
  %4077 = vmatprep.subr.mxu0 0.0
  %4078 = vmatpush2.msra.mxu0 0.0
  %4079 = vmatprep.subr.mxu0 0.0
  %4080 = vmatpush2.msra.mxu0 0.0
  %4081 = vmatprep.subr.mxu0 0.0
  %4082 = vmatpush2.msra.mxu0 0.0
  %4083 = vmatprep.subr.mxu0 0.0
  %4084 = vmatpush2.msra.mxu0 0.0
  %4085 = vmatprep.mubr.f32.mxu0 0.0
  %4086 = vmatmul.mubr.f32.gmra.mxu0 %v3974
  %v4087 = vpop.f32.mrf.mxu0
  %v4088 = vadd.f32 0.0, %v4087
  %v4089 = vpop.f32.mrf.mxu0
  %4090 = vmatprep.mubr.f32.mxu0 0.0
  %4091 = vmatmul.mubr.f32.gmra.mxu0 %v3977
  %v4092 = vpop.f32.mrf.mxu0
  %v4093 = vadd.f32 0.0, %v4092
  %v4094 = vpop.f32.mrf.mxu0
  %4095 = vmatprep.mubr.f32.mxu0 0.0
  %4096 = vmatmul.mubr.f32.gmra.mxu0 %v3980
  %v4097 = vpop.f32.mrf.mxu0
  %v4098 = vadd.f32 0.0, %v4097
  %v4099 = vpop.f32.mrf.mxu0
  %4100 = vmatprep.mubr.f32.mxu0 0.0
  %4101 = vmatmul.mubr.f32.gmra.mxu0 %v3983
  %v4102 = vpop.f32.mrf.mxu0
  %v4103 = vadd.f32 0.0, %v4102
  %v4104 = vpop.f32.mrf.mxu0
  %4105 = vmatprep.mubr.f32.mxu0 0.0
  %4106 = vmatmul.mubr.f32.gmra.mxu0 %v3986
  %v4107 = vpop.f32.mrf.mxu0
  %v4108 = vadd.f32 0.0, %v4107
  %v4109 = vpop.f32.mrf.mxu0
  %4110 = vmatprep.mubr.f32.mxu0 0.0
  %4111 = vmatmul.mubr.f32.gmra.mxu0 %v3989
  %v4112 = vpop.f32.mrf.mxu0
  %v4113 = vadd.f32 0.0, %v4112
  %v4114 = vpop.f32.mrf.mxu0
  %4115 = vmatprep.mubr.f32.mxu0 0.0
  %4116 = vmatmul.mubr.f32.gmra.mxu0 %v3992
  %v4117 = vpop.f32.mrf.mxu0
  %v4118 = vadd.f32 0.0, %v4117
  %v4119 = vpop.f32.mrf.mxu0
  %4120 = vmatprep.mubr.f32.mxu0 0.0
  %4121 = vmatmul.mubr.f32.gmra.mxu0 %v3995
  %v4122 = vpop.f32.mrf.mxu0
  %v4123 = vadd.f32 0.0, %v4122
  %v4124 = vpop.f32.mrf.mxu0
  %4125 = vmatprep.mubr.f32.mxu0 0.0
  %4126 = vmatmul.mubr.f32.gmra.mxu0 %v3998
  %v4127 = vpop.f32.mrf.mxu0
  %v4128 = vadd.f32 0.0, %v4127
  %v4129 = vpop.f32.mrf.mxu0
  %4130 = vmatprep.mubr.f32.mxu0 0.0
  %4131 = vmatmul.mubr.f32.gmra.mxu0 %v4001
  %v4132 = vpop.f32.mrf.mxu0
  %v4133 = vadd.f32 0.0, %v4132
  %v4134 = vpop.f32.mrf.mxu0
  %4135 = vmatprep.mubr.f32.mxu0 0.0
  %4136 = vmatmul.mubr.f32.gmra.mxu0 %v4004
  %v4137 = vpop.f32.mrf.mxu0
  %v4138 = vadd.f32 0.0, %v4137
  %v4139 = vpop.f32.mrf.mxu0
  %4140 = vmatprep.mubr.f32.mxu0 0.0
  %4141 = vmatmul.mubr.f32.gmra.mxu0 %v4007
  %v4142 = vpop.f32.mrf.mxu0
  %v4143 = vadd.f32 0.0, %v4142
  %v4144 = vpop.f32.mrf.mxu0
  %4145 = vmatprep.mubr.f32.mxu0 0.0
  %4146 = vmatmul.mubr.f32.gmra.mxu0 %v4010
  %v4147 = vpop.f32.mrf.mxu0
  %v4148 = vadd.f32 0.0, %v4147
  %v4149 = vpop.f32.mrf.mxu0
  %4150 = vmatprep.mubr.f32.mxu0 0.0
  %4151 = vmatmul.mubr.f32.gmra.mxu0 %v4013
  %v4152 = vpop.f32.mrf.mxu0
  %v4153 = vadd.f32 0.0, %v4152
  %v4154 = vpop.f32.mrf.mxu0
  %4155 = vmatprep.mubr.f32.mxu0 0.0
  %4156 = vmatmul.mubr.f32.gmra.mxu0 %v4016
  %v4157 = vpop.f32.mrf.mxu0
  %v4158 = vadd.f32 0.0, %v4157
  %v4159 = vpop.f32.mrf.mxu0
  %4160 = vmatprep.mubr.f32.mxu0 0.0
  %4161 = vmatmul.mubr.f32.gmra.mxu0 %v4019
  %v4162 = vpop.f32.mrf.mxu0
  %v4163 = vadd.f32 0.0, %v4162
  %v4164 = vpop.f32.mrf.mxu0
  %4165 = vdwg.mxu0
  %v4166 = vadd.f32 %v3938, %v4088
  %v4167 = vadd.f32 %v3939, %v4093
  %v4168 = vadd.f32 %v3940, %v4098
  %v4169 = vadd.f32 %v3941, %v4103
  %v4170 = vadd.f32 %v3942, %v4108
  %v4171 = vadd.f32 %v3943, %v4113
  %v4172 = vadd.f32 %v3944, %v4118
  %v4173 = vadd.f32 %v3945, %v4123
  %v4174 = vadd.f32 %v3946, %v4128
  %v4175 = vadd.f32 %v3947, %v4133
  %v4176 = vadd.f32 %v3948, %v4138
  %v4177 = vadd.f32 %v3949, %v4143
  %v4178 = vadd.f32 %v3950, %v4148
  %v4179 = vadd.f32 %v3951, %v4153
  %v4180 = vadd.f32 %v3952, %v4158
  %v4181 = vadd.f32 %v3953, %v4163
  %v4182 = vld [vmem:[%s4] sm:$0x1]
  %v4184 = vlaneseq
  %v4185 = vshrl.u32 %v4184, 7
  %v4186 = vsub.s32 0, %v4185
  %v4187 = vrot.slane %v4182, %v4186
  %v4189 = vadd.f32 %v4166, %v4187
  %v4190 = vadd.f32 %v4167, %v4187
  %v4191 = vadd.f32 %v4168, %v4187
  %v4192 = vadd.f32 %v4169, %v4187
  %v4193 = vadd.f32 %v4170, %v4187
  %v4194 = vadd.f32 %v4171, %v4187
  %v4195 = vadd.f32 %v4172, %v4187
  %v4196 = vadd.f32 %v4173, %v4187
  %v4197 = vadd.f32 %v4174, %v4187
  %v4198 = vadd.f32 %v4175, %v4187
  %v4199 = vadd.f32 %v4176, %v4187
  %v4200 = vadd.f32 %v4177, %v4187
  %v4201 = vadd.f32 %v4178, %v4187
  %v4202 = vadd.f32 %v4179, %v4187
  %v4203 = vadd.f32 %v4180, %v4187
  %v4204 = vadd.f32 %v4181, %v4187
  %4205 = vst [vmem:[%s5] sm:$0xff] %v4189
  %4206 = vst [vmem:[%s5 + $0x8] sm:$0xff] %v4190
  %4207 = vst [vmem:[%s5 + $0x10] sm:$0xff] %v4191
  %4208 = vst [vmem:[%s5 + $0x18] sm:$0xff] %v4192
  %4209 = vst [vmem:[%s5 + $0x20] sm:$0xff] %v4193
  %4210 = vst [vmem:[%s5 + $0x28] sm:$0xff] %v4194
  %4211 = vst [vmem:[%s5 + $0x30] sm:$0xff] %v4195
  %4212 = vst [vmem:[%s5 + $0x38] sm:$0xff] %v4196
  %4213 = vst [vmem:[%s5 + $0x40] sm:$0xff] %v4197
  %4214 = vst [vmem:[%s5 + $0x48] sm:$0xff] %v4198
  %4215 = vst [vmem:[%s5 + $0x50] sm:$0xff] %v4199
  %4216 = vst [vmem:[%s5 + $0x58] sm:$0xff] %v4200
  %4217 = vst [vmem:[%s5 + $0x60] sm:$0xff] %v4201
  %4218 = vst [vmem:[%s5 + $0x68] sm:$0xff] %v4202
  %4219 = vst [vmem:[%s5 + $0x70] sm:$0xff] %v4203
  %4220 = vst [vmem:[%s5 + $0x78] sm:$0xff] %v4204
  // Predicated region
  $region22: #{downsample_net_forward.1} parent=0 // pred_check
    _
  $region23: #{downsample_net_forward.1} parent=0 // pred_check_branch
    %4222 = sbr.rel (0) target = $region25
  $region24: #{downsample_net_forward.1} parent=0 // pred_region
    _
  $region25: #{downsample_net_forward.1} parent=0 // pred_fallthru
    _
  // Predicated region
  $region26: #{downsample_net_forward.1} parent=0 // pred_check
    _
  $region27: #{downsample_net_forward.1} parent=0 // pred_check_branch
    %4224 = sbr.rel (0) target = $region29
  $region28: #{downsample_net_forward.1} parent=0 // pred_region
    _
  $region29: #{downsample_net_forward.1} parent=0 // pred_fallthru
    _

</llo_original>
